<compile_context>
chip_gen: v6e
topology: v6e:2x2x1
jax: 0.10.0
libtpu: 0.0.40
codegen_flags: <defaults>
</compile_context>

<pallas_src>
import jax
import jax.numpy as jnp
import numpy as np
from jax.experimental import pallas as pl
from jax.experimental.pallas import tpu as pltpu

NEG_SLOPE = 0.01                 # nn.LeakyReLU(negative_slope=0.01)
LANE = 128                       # lane-dense padding target for matmul N dims
TM_MAX = 2048                    # max rows per grid step (fits v7x 64 MiB VMEM budget)
VMEM_LIMIT = 48 * 1024 * 1024    # scoped VMEM budget (< v7x physical, << v5e/v6e)


# ------------------------------- helpers ----------------------------------- #

def _cdiv(a, b):
    return -(-a // b)


def _round_up(x, m):
    return _cdiv(x, m) * m


def _pad_last(a, n):
    pad = n - a.shape[-1]
    if pad:
        a = jnp.pad(a, ((0, 0),) * (a.ndim - 1) + ((0, pad),))
    return a


def _pad_rows(a, m):
    pad = m - a.shape[0]
    if pad:
        a = jnp.pad(a, ((0, pad), (0, 0)))
    return a


def _leaky(v):
    return jnp.where(v > 0, v, NEG_SLOPE * v)


def _row_tiling(m, tm_max=TM_MAX):
    """Row-tile size: as big as the VMEM budget allows, but >=2 grid steps when
    possible so the 'parallel' axis keeps both v7x TensorCores busy."""
    mpad = _round_up(m, 8)
    tm = min(tm_max, max(8, _round_up(_cdiv(mpad, 2), 8)))
    mpad = _round_up(mpad, tm)
    return mpad, tm


# ----------------------------- Pallas kernels ------------------------------ #

def _conv_pool_kernel(p_ref, w_ref, b_ref, o_ref):
    """Fused conv (im2col matmul) + bias + LeakyReLU + 2x2 avg-pool.

    p_ref : (4, TM, Kp) bf16 — stacked im2col patches, one slab per pool corner;
            row r of every corner maps to the same pooled output position.
    w_ref : (Kp, 128) bf16   — conv weight, K rows and Cout lanes zero-padded.
    b_ref : (1, 128) f32     — bias, zero-padded.
    o_ref : (TM, 128) bf16   — pooled, activated output (lane-dense stores).
    """
    c, tm, kp = p_ref.shape
    p = p_ref[...].reshape(c * tm, kp)                 # one long MXU stream
    acc = jnp.dot(p, w_ref[...], preferred_element_type=jnp.float32)
    act = _leaky(acc + b_ref[...])                     # f32 epilogue
    pooled = jnp.mean(act.reshape(c, tm, LANE), axis=0)
    o_ref[...] = pooled.astype(o_ref.dtype)            # cast only at the store


def _tail_kernel(p_ref, w3_ref, b3_ref, w4_ref, b4_ref, w5_ref, b5_ref, o_ref):
    """Fused conv3-as-matmul + LeakyReLU + fc1 + LeakyReLU + fc2.

    p_ref  : (TM, 512) bf16           — flattened (5,5,16) NHWC features, K padded.
    w3_ref : (512, 128) bf16, b3 f32  — conv3 (400->120), padded.
    w4_ref : (128, 128) bf16, b4 f32  — fc1 (120->84), zero-padded both dims.
    w5_ref : (128, 128) bf16, b5 f32  — fc2 (84->10), zero-padded both dims.
    o_ref  : (TM, 128) f32            — logits in cols [0, 10).
    """
    h = jnp.dot(p_ref[...], w3_ref[...], preferred_element_type=jnp.float32)
    h = _leaky(h + b3_ref[...])
    h = jnp.dot(h.astype(jnp.bfloat16), w4_ref[...],
                preferred_element_type=jnp.float32)
    h = _leaky(h + b4_ref[...])
    h = jnp.dot(h.astype(jnp.bfloat16), w5_ref[...],
                preferred_element_type=jnp.float32)
    o_ref[...] = h + b5_ref[...]


# ------------------------------- JAX glue ---------------------------------- #

def _pooled_corner_patches(x, k, pad):
    """NHWC input -> four stride-2 im2col patch matrices, one per pool corner.

    Corner (a, b) row (n, i2, j2) holds the flattened (kh, kw, cin) patch feeding
    conv output position (2*i2 + a, 2*j2 + b). Flattening order (kh, kw, cin)
    matches w.transpose(2, 3, 1, 0).reshape(k*k*cin, cout).
    """
    if pad:
        x = jnp.pad(x, ((0, 0), (pad, pad), (pad, pad), (0, 0)))
    n, h, w, c = x.shape
    ho, wo = h - k + 1, w - k + 1
    assert ho % 2 == 0 and wo % 2 == 0, "conv output must be even for 2x2 pool"
    ho2, wo2 = ho // 2, wo // 2
    corners = []
    for a in range(2):
        for b in range(2):
            cols = [x[:, a + di: a + di + 2 * ho2 - 1: 2,
                      b + dj: b + dj + 2 * wo2 - 1: 2, :]
                    for di in range(k) for dj in range(k)]
            p = jnp.concatenate(cols, axis=-1)          # (N, ho2, wo2, k*k*C)
            corners.append(p.reshape(n * ho2 * wo2, k * k * c))
    return corners, (n, ho2, wo2)


def conv_act_pool(x, w, b, pad):
    """LeakyReLU(Conv2d(stride=1)) followed by AvgPool2d(2,2), one pallas_call.

    x: (N, H, W, Cin) NHWC (f32 or bf16). w: (Cout, Cin, k, k), b: (Cout,)
    (PyTorch layouts). Returns (N, Ho/2, Wo/2, Cout) bf16.
    """
    cout, cin, k, _ = w.shape
    corners, (n, ho2, wo2) = _pooled_corner_patches(x, k, pad)
    kdim = cin * k * k
    kdim_pad = _round_up(kdim, LANE)
    m = n * ho2 * wo2
    mpad, tm = _row_tiling(m)

    p = jnp.stack([_pad_rows(c, mpad) for c in corners])        # (4, mpad, kdim)
    p = _pad_last(p, kdim_pad).astype(jnp.bfloat16)             # (4, mpad, Kp)

    wmat = jnp.zeros((kdim_pad, LANE), jnp.bfloat16).at[:kdim, :cout].set(
        w.transpose(2, 3, 1, 0).reshape(kdim, cout).astype(jnp.bfloat16))
    bvec = _pad_last(b.reshape(1, cout).astype(jnp.float32), LANE)

    out = pl.pallas_call(
        _conv_pool_kernel,
        grid=(mpad // tm,),
        in_specs=[
            pl.BlockSpec((4, tm, kdim_pad), lambda i: (0, i, 0)),
            pl.BlockSpec((kdim_pad, LANE), lambda i: (0, 0)),
            pl.BlockSpec((1, LANE), lambda i: (0, 0)),
        ],
        out_specs=pl.BlockSpec((tm, LANE), lambda i: (i, 0)),
        out_shape=jax.ShapeDtypeStruct((mpad, LANE), jnp.bfloat16),
        compiler_params=pltpu.CompilerParams(
            dimension_semantics=("parallel",),
            vmem_limit_bytes=VMEM_LIMIT),
    )(p, wmat, bvec)
    return out[:m, :cout].reshape(n, ho2, wo2, cout)


def tail_fused(x, w3, b3, wf1, bf1, wf2, bf2):
    """conv3 + LeakyReLU + fc1 + LeakyReLU + fc2 in a single pallas_call.

    x: (N, 5, 5, 16) NHWC (bf16). Returns (N, 10) f32 logits.
    """
    n = x.shape[0]
    kdim = x.shape[1] * x.shape[2] * x.shape[3]          # 400, (kh, kw, cin) order
    kdim_pad = _round_up(kdim, LANE)                     # 512
    cout3 = w3.shape[0]                                  # 120
    mpad, tm = _row_tiling(n)

    p = _pad_last(_pad_rows(x.reshape(n, kdim), mpad),
                  kdim_pad).astype(jnp.bfloat16)

    w3m = jnp.zeros((kdim_pad, LANE), jnp.bfloat16).at[:kdim, :cout3].set(
        w3.transpose(2, 3, 1, 0).reshape(kdim, cout3).astype(jnp.bfloat16))
    b3v = _pad_last(b3.reshape(1, cout3).astype(jnp.float32), LANE)
    w4m = jnp.zeros((LANE, LANE), jnp.bfloat16).at[:120, :84].set(
        wf1.T.astype(jnp.bfloat16))
    b4v = _pad_last(bf1.reshape(1, 84).astype(jnp.float32), LANE)
    w5m = jnp.zeros((LANE, LANE), jnp.bfloat16).at[:84, :10].set(
        wf2.T.astype(jnp.bfloat16))
    b5v = _pad_last(bf2.reshape(1, 10).astype(jnp.float32), LANE)

    out = pl.pallas_call(
        _tail_kernel,
        grid=(mpad // tm,),
        in_specs=[
            pl.BlockSpec((tm, kdim_pad), lambda i: (i, 0)),
            pl.BlockSpec((kdim_pad, LANE), lambda i: (0, 0)),
            pl.BlockSpec((1, LANE), lambda i: (0, 0)),
            pl.BlockSpec((LANE, LANE), lambda i: (0, 0)),
            pl.BlockSpec((1, LANE), lambda i: (0, 0)),
            pl.BlockSpec((LANE, LANE), lambda i: (0, 0)),
            pl.BlockSpec((1, LANE), lambda i: (0, 0)),
        ],
        out_specs=pl.BlockSpec((tm, LANE), lambda i: (i, 0)),
        out_shape=jax.ShapeDtypeStruct((mpad, LANE), jnp.float32),
        compiler_params=pltpu.CompilerParams(
            dimension_semantics=("parallel",),
            vmem_limit_bytes=VMEM_LIMIT),
    )(p, w3m, b3v, w4m, b4v, w5m, b5v)
    return out[:n, :10]


# ----------------------------- model forward -------------------------------- #

def init_params(key):
    """Deterministic init (PyTorch-style uniform in +/- 1/sqrt(fan_in))."""
    def u(k, shape, fan_in):
        bound = 1.0 / jnp.sqrt(jnp.float32(fan_in))
        return jax.random.uniform(k, shape, jnp.float32, -bound, bound)

    ks = jax.random.split(key, 10)
    return {
        "w1": u(ks[0], (6, 1, 5, 5), 1 * 25),     "b1": u(ks[1], (6,), 1 * 25),
        "w2": u(ks[2], (16, 6, 5, 5), 6 * 25),    "b2": u(ks[3], (16,), 6 * 25),
        "w3": u(ks[4], (120, 16, 5, 5), 16 * 25), "b3": u(ks[5], (120,), 16 * 25),
        "wf1": u(ks[6], (84, 120), 120),          "bf1": u(ks[7], (84,), 120),
        "wf2": u(ks[8], (10, 84), 84),            "bf2": u(ks[9], (10,), 84),
    }


def deepnet_forward(params, x):
    x = x.reshape(-1, 1, 28, 28).astype(jnp.float32)        # torch.reshape
    x = jnp.transpose(x, (0, 2, 3, 1))                       # NCHW -> NHWC (C=1: free)
    x = conv_act_pool(x, params["w1"], params["b1"], pad=2)  # (N, 14, 14, 6)  bf16
    x = conv_act_pool(x, params["w2"], params["b2"], pad=0)  # (N, 5, 5, 16)   bf16
    return tail_fused(x, params["w3"], params["b3"],
                      params["wf1"], params["bf1"],
                      params["wf2"], params["bf2"])          # (N, 10) f32


# ----------------------- pure-JAX reference (f32) --------------------------- #

def deepnet_reference(params, x):
    hi = jax.lax.Precision.HIGHEST
    x = x.reshape(-1, 1, 28, 28).astype(jnp.float32)

    def conv(v, w, b, pad):
        y = jax.lax.conv_general_dilated(
            v, w, window_strides=(1, 1), padding=[(pad, pad), (pad, pad)],
            dimension_numbers=("NCHW", "OIHW", "NCHW"), precision=hi)
        return y + b.reshape(1, -1, 1, 1)

    def pool(v):
        n, c, h, w = v.shape
        return v.reshape(n, c, h // 2, 2, w // 2, 2).mean(axis=(3, 5))

    x = pool(_leaky(conv(x, params["w1"], params["b1"], 2)))
    x = pool(_leaky(conv(x, params["w2"], params["b2"], 0)))
    x = _leaky(conv(x, params["w3"], params["b3"], 0)).reshape(x.shape[0], 120)
    x = _leaky(jnp.dot(x, params["wf1"].T, precision=hi) + params["bf1"])
    return jnp.dot(x, params["wf2"].T, precision=hi) + params["bf2"]


if __name__ == "__main__":
    key = jax.random.PRNGKey(0)
    kx, kp = jax.random.split(key)
    x = jax.random.normal(kx, (2, 1, 28, 28), jnp.float32)   # batch=2 MNIST-like
    params = init_params(kp)

    out = jax.jit(deepnet_forward)(params, x)
    jax.block_until_ready(out)
    assert out.shape == (2, 10) and out.dtype == jnp.float32
    assert bool(jnp.all(jnp.isfinite(out)))

    ref = deepnet_reference(params, x)
    np.testing.assert_allclose(np.asarray(out), np.asarray(ref),
                               rtol=5e-2, atol=5e-2)
    print("KERNEL_OK")
</pallas_src>

<mosaic_0001>
module attributes {stable_mosaic.version = 11 : i64} {
  func.func @_conv_pool_kernel(%arg0: i32, %arg1: memref<4x200x128xbf16, #tpu.memory_space<vmem>>, %arg2: memref<128x128xbf16, #tpu.memory_space<vmem>>, %arg3: memref<1x128xf32, #tpu.memory_space<vmem>>, %arg4: memref<200x128xbf16, #tpu.memory_space<vmem>>) attributes {dimension_semantics = [#tpu.dimension_semantics<parallel>], iteration_bounds = array<i64: 2>, scalar_prefetch = 0 : i64, scratch_operands = 0 : i64, tpu.core_type = #tpu.core_type<tc>, window_params = [{transform_indices = @transform_0, window_bounds = array<i64: 4, 200, 128>}, {pipeline_mode = #tpu.pipeline_mode<synchronous>, transform_indices = @transform_1, window_bounds = array<i64: 128, 128>}, {pipeline_mode = #tpu.pipeline_mode<synchronous>, transform_indices = @transform_2, window_bounds = array<i64: 1, 128>}, {transform_indices = @transform_3, window_bounds = array<i64: 200, 128>}]} {
    %c0 = arith.constant 0 : index
    %c0_0 = arith.constant 0 : index
    %c0_1 = arith.constant 0 : index
    %0 = vector.load %arg1[%c0, %c0_0, %c0_1] : memref<4x200x128xbf16, #tpu.memory_space<vmem>>, vector<4x200x128xbf16>
    %1 = vector.shape_cast %0 : vector<4x200x128xbf16> to vector<800x128xbf16>
    %c0_2 = arith.constant 0 : index
    %c0_3 = arith.constant 0 : index
    %2 = vector.load %arg2[%c0_2, %c0_3] : memref<128x128xbf16, #tpu.memory_space<vmem>>, vector<128x128xbf16>
    %cst = arith.constant dense<0.000000e+00> : vector<800x128xf32>
    %3 = tpu.matmul %1, %2, %cst {dimension_numbers = #tpu.dot_dimension_numbers<[1], [0], [0], [1], [0, 0, 1, 1], [], []>} : vector<800x128xbf16>, vector<128x128xbf16>, vector<800x128xf32> -> vector<800x128xf32>
    %c0_4 = arith.constant 0 : index
    %c0_5 = arith.constant 0 : index
    %4 = vector.load %arg3[%c0_4, %c0_5] : memref<1x128xf32, #tpu.memory_space<vmem>>, vector<1x128xf32>
    %5 = vector.broadcast %4 : vector<1x128xf32> to vector<800x128xf32>
    %6 = arith.addf %3, %5 : vector<800x128xf32>
    %cst_6 = arith.constant 0.000000e+00 : f32
    %7 = vector.broadcast %cst_6 : f32 to vector<800x128xf32>
    %8 = arith.cmpf ogt, %6, %7 : vector<800x128xf32>
    %cst_7 = arith.constant 0.00999999977 : f32
    %9 = vector.broadcast %cst_7 : f32 to vector<800x128xf32>
    %10 = arith.mulf %9, %6 : vector<800x128xf32>
    %11 = arith.select %8, %6, %10 : vector<800x128xi1>, vector<800x128xf32>
    %12 = vector.shape_cast %11 : vector<800x128xf32> to vector<4x200x128xf32>
    %cst_8 = arith.constant dense<0.000000e+00> : vector<200x128xf32>
    %13 = vector.multi_reduction <add>, %12, %cst_8 [0] : vector<4x200x128xf32> to vector<200x128xf32>
    %cst_9 = arith.constant 4.000000e+00 : f32
    %14 = vector.broadcast %cst_9 : f32 to vector<200x128xf32>
    %15 = arith.divf %13, %14 : vector<200x128xf32>
    %16 = arith.truncf %15 : vector<200x128xf32> to vector<200x128xbf16>
    %c0_10 = arith.constant 0 : index
    %c0_11 = arith.constant 0 : index
    %17 = vector.load %arg4[%c0_10, %c0_11] : memref<200x128xbf16, #tpu.memory_space<vmem>>, vector<200x128xbf16>
    tpu.vector_store %arg4[%c0_10, %c0_11], %16 {strides = array<i32>} : memref<200x128xbf16, #tpu.memory_space<vmem>>, vector<200x128xbf16>,
    return
  }
  func.func @transform_0(%arg0: i32) -> (i32, i32, i32) {
    %c0_i32 = arith.constant 0 : i32
    %c0_i32_0 = arith.constant 0 : i32
    %c0_i32_1 = arith.constant 0 : i32
    return %c0_i32, %arg0, %c0_i32_0 : i32, i32, i32
  }
  func.func @transform_1(%arg0: i32) -> (i32, i32) {
    %c0_i32 = arith.constant 0 : i32
    %c0_i32_0 = arith.constant 0 : i32
    %c0_i32_1 = arith.constant 0 : i32
    return %c0_i32, %c0_i32_0 : i32, i32
  }
  func.func @transform_2(%arg0: i32) -> (i32, i32) {
    %c0_i32 = arith.constant 0 : i32
    %c0_i32_0 = arith.constant 0 : i32
    %c0_i32_1 = arith.constant 0 : i32
    return %c0_i32, %c0_i32_0 : i32, i32
  }
  func.func @transform_3(%arg0: i32) -> (i32, i32) {
    %c0_i32 = arith.constant 0 : i32
    %c0_i32_0 = arith.constant 0 : i32
    return %arg0, %c0_i32 : i32, i32
  }
}

module attributes {stable_mosaic.version = 11 : i64} {
  func.func @_conv_pool_kernel(%arg0: i32, %arg1: memref<4x32x256xbf16, #tpu.memory_space<vmem>>, %arg2: memref<256x128xbf16, #tpu.memory_space<vmem>>, %arg3: memref<1x128xf32, #tpu.memory_space<vmem>>, %arg4: memref<32x128xbf16, #tpu.memory_space<vmem>>) attributes {dimension_semantics = [#tpu.dimension_semantics<parallel>], iteration_bounds = array<i64: 2>, scalar_prefetch = 0 : i64, scratch_operands = 0 : i64, tpu.core_type = #tpu.core_type<tc>, window_params = [{transform_indices = @transform_0, window_bounds = array<i64: 4, 32, 256>}, {pipeline_mode = #tpu.pipeline_mode<synchronous>, transform_indices = @transform_1, window_bounds = array<i64: 256, 128>}, {pipeline_mode = #tpu.pipeline_mode<synchronous>, transform_indices = @transform_2, window_bounds = array<i64: 1, 128>}, {transform_indices = @transform_3, window_bounds = array<i64: 32, 128>}]} {
    %c0 = arith.constant 0 : index
    %c0_0 = arith.constant 0 : index
    %c0_1 = arith.constant 0 : index
    %0 = vector.load %arg1[%c0, %c0_0, %c0_1] : memref<4x32x256xbf16, #tpu.memory_space<vmem>>, vector<4x32x256xbf16>
    %1 = vector.shape_cast %0 : vector<4x32x256xbf16> to vector<128x256xbf16>
    %c0_2 = arith.constant 0 : index
    %c0_3 = arith.constant 0 : index
    %2 = vector.load %arg2[%c0_2, %c0_3] : memref<256x128xbf16, #tpu.memory_space<vmem>>, vector<256x128xbf16>
    %cst = arith.constant dense<0.000000e+00> : vector<128x128xf32>
    %3 = tpu.matmul %1, %2, %cst {dimension_numbers = #tpu.dot_dimension_numbers<[1], [0], [0], [1], [0, 0, 1, 1], [], []>} : vector<128x256xbf16>, vector<256x128xbf16>, vector<128x128xf32> -> vector<128x128xf32>
    %c0_4 = arith.constant 0 : index
    %c0_5 = arith.constant 0 : index
    %4 = vector.load %arg3[%c0_4, %c0_5] : memref<1x128xf32, #tpu.memory_space<vmem>>, vector<1x128xf32>
    %5 = vector.broadcast %4 : vector<1x128xf32> to vector<128x128xf32>
    %6 = arith.addf %3, %5 : vector<128x128xf32>
    %cst_6 = arith.constant 0.000000e+00 : f32
    %7 = vector.broadcast %cst_6 : f32 to vector<128x128xf32>
    %8 = arith.cmpf ogt, %6, %7 : vector<128x128xf32>
    %cst_7 = arith.constant 0.00999999977 : f32
    %9 = vector.broadcast %cst_7 : f32 to vector<128x128xf32>
    %10 = arith.mulf %9, %6 : vector<128x128xf32>
    %11 = arith.select %8, %6, %10 : vector<128x128xi1>, vector<128x128xf32>
    %12 = vector.shape_cast %11 : vector<128x128xf32> to vector<4x32x128xf32>
    %cst_8 = arith.constant dense<0.000000e+00> : vector<32x128xf32>
    %13 = vector.multi_reduction <add>, %12, %cst_8 [0] : vector<4x32x128xf32> to vector<32x128xf32>
    %cst_9 = arith.constant 4.000000e+00 : f32
    %14 = vector.broadcast %cst_9 : f32 to vector<32x128xf32>
    %15 = arith.divf %13, %14 : vector<32x128xf32>
    %16 = arith.truncf %15 : vector<32x128xf32> to vector<32x128xbf16>
    %c0_10 = arith.constant 0 : index
    %c0_11 = arith.constant 0 : index
    %17 = vector.load %arg4[%c0_10, %c0_11] : memref<32x128xbf16, #tpu.memory_space<vmem>>, vector<32x128xbf16>
    tpu.vector_store %arg4[%c0_10, %c0_11], %16 {strides = array<i32>} : memref<32x128xbf16, #tpu.memory_space<vmem>>, vector<32x128xbf16>,
    return
  }
  func.func @transform_0(%arg0: i32) -> (i32, i32, i32) {
    %c0_i32 = arith.constant 0 : i32
    %c0_i32_0 = arith.constant 0 : i32
    %c0_i32_1 = arith.constant 0 : i32
    return %c0_i32, %arg0, %c0_i32_0 : i32, i32, i32
  }
  func.func @transform_1(%arg0: i32) -> (i32, i32) {
    %c0_i32 = arith.constant 0 : i32
    %c0_i32_0 = arith.constant 0 : i32
    %c0_i32_1 = arith.constant 0 : i32
    return %c0_i32, %c0_i32_0 : i32, i32
  }
  func.func @transform_2(%arg0: i32) -> (i32, i32) {
    %c0_i32 = arith.constant 0 : i32
    %c0_i32_0 = arith.constant 0 : i32
    %c0_i32_1 = arith.constant 0 : i32
    return %c0_i32, %c0_i32_0 : i32, i32
  }
  func.func @transform_3(%arg0: i32) -> (i32, i32) {
    %c0_i32 = arith.constant 0 : i32
    %c0_i32_0 = arith.constant 0 : i32
    return %arg0, %c0_i32 : i32, i32
  }
}

module attributes {stable_mosaic.version = 11 : i64} {
  func.func @_tail_kernel(%arg0: i32, %arg1: memref<8x512xbf16, #tpu.memory_space<vmem>>, %arg2: memref<512x128xbf16, #tpu.memory_space<vmem>>, %arg3: memref<1x128xf32, #tpu.memory_space<vmem>>, %arg4: memref<128x128xbf16, #tpu.memory_space<vmem>>, %arg5: memref<1x128xf32, #tpu.memory_space<vmem>>, %arg6: memref<128x128xbf16, #tpu.memory_space<vmem>>, %arg7: memref<1x128xf32, #tpu.memory_space<vmem>>, %arg8: memref<8x128xf32, #tpu.memory_space<vmem>>) attributes {dimension_semantics = [#tpu.dimension_semantics<parallel>], iteration_bounds = array<i64: 1>, scalar_prefetch = 0 : i64, scratch_operands = 0 : i64, tpu.core_type = #tpu.core_type<tc>, window_params = [{transform_indices = @transform_0, window_bounds = array<i64: 8, 512>}, {pipeline_mode = #tpu.pipeline_mode<synchronous>, transform_indices = @transform_1, window_bounds = array<i64: 512, 128>}, {pipeline_mode = #tpu.pipeline_mode<synchronous>, transform_indices = @transform_2, window_bounds = array<i64: 1, 128>}, {pipeline_mode = #tpu.pipeline_mode<synchronous>, transform_indices = @transform_3, window_bounds = array<i64: 128, 128>}, {pipeline_mode = #tpu.pipeline_mode<synchronous>, transform_indices = @transform_4, window_bounds = array<i64: 1, 128>}, {pipeline_mode = #tpu.pipeline_mode<synchronous>, transform_indices = @transform_5, window_bounds = array<i64: 128, 128>}, {pipeline_mode = #tpu.pipeline_mode<synchronous>, transform_indices = @transform_6, window_bounds = array<i64: 1, 128>}, {transform_indices = @transform_7, window_bounds = array<i64: 8, 128>}]} {
    %c0 = arith.constant 0 : index
    %c0_0 = arith.constant 0 : index
    %0 = vector.load %arg1[%c0, %c0_0] : memref<8x512xbf16, #tpu.memory_space<vmem>>, vector<8x512xbf16>
    %c0_1 = arith.constant 0 : index
    %c0_2 = arith.constant 0 : index
    %1 = vector.load %arg2[%c0_1, %c0_2] : memref<512x128xbf16, #tpu.memory_space<vmem>>, vector<512x128xbf16>
    %cst = arith.constant dense<0.000000e+00> : vector<8x128xf32>
    %2 = tpu.matmul %0, %1, %cst {dimension_numbers = #tpu.dot_dimension_numbers<[1], [0], [0], [1], [0, 0, 1, 1], [], []>} : vector<8x512xbf16>, vector<512x128xbf16>, vector<8x128xf32> -> vector<8x128xf32>
    %c0_3 = arith.constant 0 : index
    %c0_4 = arith.constant 0 : index
    %3 = vector.load %arg3[%c0_3, %c0_4] : memref<1x128xf32, #tpu.memory_space<vmem>>, vector<1x128xf32>
    %4 = vector.broadcast %3 : vector<1x128xf32> to vector<8x128xf32>
    %5 = arith.addf %2, %4 : vector<8x128xf32>
    %cst_5 = arith.constant 0.000000e+00 : f32
    %6 = vector.broadcast %cst_5 : f32 to vector<8x128xf32>
    %7 = arith.cmpf ogt, %5, %6 : vector<8x128xf32>
    %cst_6 = arith.constant 0.00999999977 : f32
    %8 = vector.broadcast %cst_6 : f32 to vector<8x128xf32>
    %9 = arith.mulf %8, %5 : vector<8x128xf32>
    %10 = arith.select %7, %5, %9 : vector<8x128xi1>, vector<8x128xf32>
    %11 = arith.truncf %10 : vector<8x128xf32> to vector<8x128xbf16>
    %c0_7 = arith.constant 0 : index
    %c0_8 = arith.constant 0 : index
    %12 = vector.load %arg4[%c0_7, %c0_8] : memref<128x128xbf16, #tpu.memory_space<vmem>>, vector<128x128xbf16>
    %cst_9 = arith.constant dense<0.000000e+00> : vector<8x128xf32>
    %13 = tpu.matmul %11, %12, %cst_9 {dimension_numbers = #tpu.dot_dimension_numbers<[1], [0], [0], [1], [0, 0, 1, 1], [], []>} : vector<8x128xbf16>, vector<128x128xbf16>, vector<8x128xf32> -> vector<8x128xf32>
    %c0_10 = arith.constant 0 : index
    %c0_11 = arith.constant 0 : index
    %14 = vector.load %arg5[%c0_10, %c0_11] : memref<1x128xf32, #tpu.memory_space<vmem>>, vector<1x128xf32>
    %15 = vector.broadcast %14 : vector<1x128xf32> to vector<8x128xf32>
    %16 = arith.addf %13, %15 : vector<8x128xf32>
    %cst_12 = arith.constant 0.000000e+00 : f32
    %17 = vector.broadcast %cst_12 : f32 to vector<8x128xf32>
    %18 = arith.cmpf ogt, %16, %17 : vector<8x128xf32>
    %cst_13 = arith.constant 0.00999999977 : f32
    %19 = vector.broadcast %cst_13 : f32 to vector<8x128xf32>
    %20 = arith.mulf %19, %16 : vector<8x128xf32>
    %21 = arith.select %18, %16, %20 : vector<8x128xi1>, vector<8x128xf32>
    %22 = arith.truncf %21 : vector<8x128xf32> to vector<8x128xbf16>
    %c0_14 = arith.constant 0 : index
    %c0_15 = arith.constant 0 : index
    %23 = vector.load %arg6[%c0_14, %c0_15] : memref<128x128xbf16, #tpu.memory_space<vmem>>, vector<128x128xbf16>
    %cst_16 = arith.constant dense<0.000000e+00> : vector<8x128xf32>
    %24 = tpu.matmul %22, %23, %cst_16 {dimension_numbers = #tpu.dot_dimension_numbers<[1], [0], [0], [1], [0, 0, 1, 1], [], []>} : vector<8x128xbf16>, vector<128x128xbf16>, vector<8x128xf32> -> vector<8x128xf32>
    %c0_17 = arith.constant 0 : index
    %c0_18 = arith.constant 0 : index
    %25 = vector.load %arg7[%c0_17, %c0_18] : memref<1x128xf32, #tpu.memory_space<vmem>>, vector<1x128xf32>
    %26 = vector.broadcast %25 : vector<1x128xf32> to vector<8x128xf32>
    %27 = arith.addf %24, %26 : vector<8x128xf32>
    %c0_19 = arith.constant 0 : index
    %c0_20 = arith.constant 0 : index
    %28 = vector.load %arg8[%c0_19, %c0_20] : memref<8x128xf32, #tpu.memory_space<vmem>>, vector<8x128xf32>
    tpu.vector_store %arg8[%c0_19, %c0_20], %27 {strides = array<i32>} : memref<8x128xf32, #tpu.memory_space<vmem>>, vector<8x128xf32>,
    return
  }
  func.func @transform_0(%arg0: i32) -> (i32, i32) {
    %c0_i32 = arith.constant 0 : i32
    %c0_i32_0 = arith.constant 0 : i32
    return %arg0, %c0_i32 : i32, i32
  }
  func.func @transform_1(%arg0: i32) -> (i32, i32) {
    %c0_i32 = arith.constant 0 : i32
    %c0_i32_0 = arith.constant 0 : i32
    %c0_i32_1 = arith.constant 0 : i32
    return %c0_i32, %c0_i32_0 : i32, i32
  }
  func.func @transform_2(%arg0: i32) -> (i32, i32) {
    %c0_i32 = arith.constant 0 : i32
    %c0_i32_0 = arith.constant 0 : i32
    %c0_i32_1 = arith.constant 0 : i32
    return %c0_i32, %c0_i32_0 : i32, i32
  }
  func.func @transform_3(%arg0: i32) -> (i32, i32) {
    %c0_i32 = arith.constant 0 : i32
    %c0_i32_0 = arith.constant 0 : i32
    %c0_i32_1 = arith.constant 0 : i32
    return %c0_i32, %c0_i32_0 : i32, i32
  }
  func.func @transform_4(%arg0: i32) -> (i32, i32) {
    %c0_i32 = arith.constant 0 : i32
    %c0_i32_0 = arith.constant 0 : i32
    %c0_i32_1 = arith.constant 0 : i32
    return %c0_i32, %c0_i32_0 : i32, i32
  }
  func.func @transform_5(%arg0: i32) -> (i32, i32) {
    %c0_i32 = arith.constant 0 : i32
    %c0_i32_0 = arith.constant 0 : i32
    %c0_i32_1 = arith.constant 0 : i32
    return %c0_i32, %c0_i32_0 : i32, i32
  }
  func.func @transform_6(%arg0: i32) -> (i32, i32) {
    %c0_i32 = arith.constant 0 : i32
    %c0_i32_0 = arith.constant 0 : i32
    %c0_i32_1 = arith.constant 0 : i32
    return %c0_i32, %c0_i32_0 : i32, i32
  }
  func.func @transform_7(%arg0: i32) -> (i32, i32) {
    %c0_i32 = arith.constant 0 : i32
    %c0_i32_0 = arith.constant 0 : i32
    return %arg0, %c0_i32 : i32, i32
  }
}

</mosaic_0001>

<llo_original>
// kernel: deepnet_forward.3
$region0: #{deepnet_forward.3}
  #allocation0 [shape = 'u32[]', space=smem, size = 0x4, offset = 0x4, fixed_abs, tag = 'smem constant byte address 0x4 - core index']
  #allocation1 [shape = 'u32[144,128]{1,0:T(1,128)}', space=vmem, size = 0x12000, scoped, tag = 'internal scratch']
  %s0 = inlined_call_operand.vmem [shape: bf16[4,400,128], index: 0, kind: input, shape index: {}]
  %s1 = inlined_call_operand.vmem [shape: bf16[128,128], index: 1, kind: input, shape index: {}]
  %s2 = inlined_call_operand.vmem [shape: f32[1,128], index: 2, kind: input, shape index: {}]
  %s3 = inlined_call_operand.vmem [shape: bf16[400,128], index: 3, kind: output, shape index: {}]
  %s4 = sld [smem:[#allocation0]]
  $region86: #{deepnet_forward.3} parent=0
    _
  %s6 = ssub.s32 1, %s4
  %s7 = scalar_select 0, %s6, %s4
  $region1: #{deepnet_forward.3} parent=0
    #allocation2 [shape = 'u8[409600]{0}', space=vmem, size = 0x64000, scoped, tag = 'input window, operand 0']
    loop: start=0, step=1, limit=4
    $region2: #{deepnet_forward.3} parent=1 // loop_pre_header
      _
    $region3: #{deepnet_forward.3} parent=1 // loop_header
      %s9 = sphi 0, %s13
      %p10 = scmp.ge.s32.totalorder %s9, 4
      %s19 = sphi 0, %s21
      %s22 = sphi 0, %s19
      %s23 = sphi 0, %s22
      %s39 = sphi 0, %s23
      %s43 = sphi 0, %s43
      %s45 = sphi 0, %s43
      %s46 = sphi 0, %s45
      %s60 = sphi 0, %s46
      %s64 = sphi 0, %s64
      %s66 = sphi 0, %s64
      %s67 = sphi 0, %s66
      %s81 = sphi 0, %s67
      %s87 = sphi 0, %s89
      %s90 = sphi 0, %s87
      %s91 = sphi 0, %s90
      %s107 = sphi 0, %s91
    $region4: #{deepnet_forward.3} parent=1 // loop_header_branch
      %12 = sbr.rel (%p10) target = $region8
    $region5: #{deepnet_forward.3} parent=1 // loop_body
      %s14 = ssub.s32 %s9, 1
      %s15 = ssub.s32 %s9, 2
      %s16 = sadd.s32 %s9, 1
      %s17 = ssub.s32 %s9, %s16
      %p18 = scmp.eq.s32.totalorder %s17, 0
      %s20 = sadd.s32 %s19, 1
      %s21 = scalar_select %p18, %s19, %s20
      %p24 = pneg %p18
      %p25 = scmp.eq.s32.totalorder %s9, 1
      %p26 = por %p24, %p25
      %p27 = scmp.ne.s32.totalorder %s19, %s22
      %p28 = scmp.eq.s32.totalorder %s9, 0
      %p29 = por %p27, %p28
      %p30 = scmp.ne.s32.totalorder %s19, %s22
      %p31 = scmp.eq.s32.totalorder %s14, 1
      %p32 = por %p30, %p31
      %p33 = scmp.ne.s32.totalorder %s22, %s23
      %p34 = scmp.eq.s32.totalorder %s14, 0
      %p35 = por %p33, %p34
      %p36 = scmp.ne.s32.totalorder %s22, %s23
      %p37 = scmp.eq.s32.totalorder %s15, 1
      %p38 = por %p36, %p37
      %p40 = scmp.ne.s32.totalorder %s23, %s39
      %p41 = scmp.eq.s32.totalorder %s15, 0
      %p42 = por %p40, %p41
      %s44 = sadd.s32 %s43, 1
      %p47 = scmp.eq.s32.totalorder %s9, 1
      %p48 = scmp.ne.s32.totalorder %s43, %s45
      %p49 = scmp.eq.s32.totalorder %s9, 0
      %p50 = por %p48, %p49
      %p51 = scmp.ne.s32.totalorder %s43, %s45
      %p52 = scmp.eq.s32.totalorder %s14, 1
      %p53 = por %p51, %p52
      %p54 = scmp.ne.s32.totalorder %s45, %s46
      %p55 = scmp.eq.s32.totalorder %s14, 0
      %p56 = por %p54, %p55
      %p57 = scmp.ne.s32.totalorder %s45, %s46
      %p58 = scmp.eq.s32.totalorder %s15, 1
      %p59 = por %p57, %p58
      %p61 = scmp.ne.s32.totalorder %s46, %s60
      %p62 = scmp.eq.s32.totalorder %s15, 0
      %p63 = por %p61, %p62
      %s65 = sadd.s32 %s64, 1
      %p68 = scmp.eq.s32.totalorder %s9, 1
      %p69 = scmp.ne.s32.totalorder %s64, %s66
      %p70 = scmp.eq.s32.totalorder %s9, 0
      %p71 = por %p69, %p70
      %p72 = scmp.ne.s32.totalorder %s64, %s66
      %p73 = scmp.eq.s32.totalorder %s14, 1
      %p74 = por %p72, %p73
      %p75 = scmp.ne.s32.totalorder %s66, %s67
      %p76 = scmp.eq.s32.totalorder %s14, 0
      %p77 = por %p75, %p76
      %p78 = scmp.ne.s32.totalorder %s66, %s67
      %p79 = scmp.eq.s32.totalorder %s15, 1
      %p80 = por %p78, %p79
      %p82 = scmp.ne.s32.totalorder %s67, %s81
      %p83 = scmp.eq.s32.totalorder %s15, 0
      %p84 = por %p82, %p83
      %s85 = ssub.s32 %s9, %s16
      %p86 = scmp.eq.s32.totalorder %s85, 0
      %s88 = sadd.s32 %s87, 1
      %s89 = scalar_select %p86, %s87, %s88
      %p92 = pneg %p86
      %p93 = scmp.eq.s32.totalorder %s9, 1
      %p94 = por %p92, %p93
      %p95 = scmp.ne.s32.totalorder %s87, %s90
      %p96 = scmp.eq.s32.totalorder %s9, 0
      %p97 = por %p95, %p96
      %p98 = scmp.ne.s32.totalorder %s87, %s90
      %p99 = scmp.eq.s32.totalorder %s14, 1
      %p100 = por %p98, %p99
      %p101 = scmp.ne.s32.totalorder %s90, %s91
      %p102 = scmp.eq.s32.totalorder %s14, 0
      %p103 = por %p101, %p102
      %p104 = scmp.ne.s32.totalorder %s90, %s91
      %p105 = scmp.eq.s32.totalorder %s15, 1
      %p106 = por %p104, %p105
      %p108 = scmp.ne.s32.totalorder %s91, %s107
      %p109 = scmp.eq.s32.totalorder %s15, 0
      %p110 = por %p108, %p109
      %p111 = scmp.le.s32.totalorder 1, %s9
      %p112 = scmp.lt.s32.totalorder %s9, 3
      %p113 = pnand %p111, %p112
      %p114 = pneg %p113
      // Predicated region
      $region9: #{deepnet_forward.3} parent=5 // pred_check
        _
      $region10: #{deepnet_forward.3} parent=5 // pred_check_branch
        %116 = sbr.rel (%p113) target = $region12
      $region11: #{deepnet_forward.3} parent=5 // pred_region
        %s117 = ssub.s32 %s9, 1
        // Predicated region
        $region13: #{deepnet_forward.3} parent=11 // pred_check
          %p118 = pneg %p56
        $region14: #{deepnet_forward.3} parent=11 // pred_check_branch
          %120 = sbr.rel (%p118) target = $region16
        $region15: #{deepnet_forward.3} parent=11 // pred_region
          _
        $region16: #{deepnet_forward.3} parent=11 // pred_fallthru
          _
        // Predicated region
        $region17: #{deepnet_forward.3} parent=11 // pred_check
          %p121 = pneg %p77
        $region18: #{deepnet_forward.3} parent=11 // pred_check_branch
          %123 = sbr.rel (%p121) target = $region20
        $region19: #{deepnet_forward.3} parent=11 // pred_region
          _
        $region20: #{deepnet_forward.3} parent=11 // pred_fallthru
          _
      $region12: #{deepnet_forward.3} parent=5 // pred_fallthru
        _
      %p124 = scmp.lt.s32.totalorder %s9, 2
      // Predicated region
      $region21: #{deepnet_forward.3} parent=5 // pred_check
        %p125 = pneg %p124
      $region22: #{deepnet_forward.3} parent=5 // pred_check_branch
        %127 = sbr.rel (%p125) target = $region24
      $region23: #{deepnet_forward.3} parent=5 // pred_region
        // Predicated region
        $region25: #{deepnet_forward.3} parent=23 // pred_check
          %p128 = pneg %p29
        $region26: #{deepnet_forward.3} parent=23 // pred_check_branch
          %130 = sbr.rel (%p128) target = $region28
        $region27: #{deepnet_forward.3} parent=23 // pred_region
          %s131 = sand.u32 %s19, 1
          %s132 = sand.u32 %s19, 1
          %s133 = smul.addr %s132, 400
          %s134 = scalar_lea.vmem [#allocation2], %s133
          %s135 = smul.u32 25, %s9
          %s136 = smul.addr %s135, 4
          %s137 = scalar_lea.vmem %s0, %s136
          // Predicated region
          $region29: #{deepnet_forward.3} parent=27 // pred_check
            _
          $region30: #{deepnet_forward.3} parent=27 // pred_check_branch
            %139 = sbr.rel (0) target = $region32
          $region31: #{deepnet_forward.3} parent=27 // pred_region
            // Predicated region
            $region33: #{deepnet_forward.3} parent=31 // pred_check
              _
            $region34: #{deepnet_forward.3} parent=31 // pred_check_branch
              %141 = sbr.rel target = $region36
            $region35: #{deepnet_forward.3} parent=31 // pred_region
              // Predicated region
              $region48: #{deepnet_forward.3} parent=35 // pred_check
                _
              $region49: #{deepnet_forward.3} parent=35 // pred_check_branch
                %355 = sbr.rel (0) target = $region51
              $region50: #{deepnet_forward.3} parent=35 // pred_region
                loop: start=0, step=1, limit=1
                $region52: #{deepnet_forward.3} parent=50 // loop_pre_header
                  _
                $region53: #{deepnet_forward.3} parent=50 // loop_header
                  %s357 = sphi 0, %s361
                  %p358 = scmp.ge.s32.totalorder %s357, 1
                  %s362 = sphi %s137, %s137
                  %s363 = sphi %s134, %s134
                $region54: #{deepnet_forward.3} parent=50 // loop_header_branch
                  %360 = sbr.rel (%p358) target = $region58
                $region55: #{deepnet_forward.3} parent=50 // loop_body
                  _
                $region56: #{deepnet_forward.3} parent=50 // loop_footer
                  %s361 = sadd.s32 1, %s357
                $region57: #{deepnet_forward.3} parent=50 // loop_footer_branch
                  %356 = sbr.rel target = $region53
                $region58: #{deepnet_forward.3} parent=50 // loop_exit
                  _
                %s365 = ssub.s32 16, 1
                loop: start=0, step=1, limit=1
                $region59: #{deepnet_forward.3} parent=50 // loop_pre_header
                  _
                $region60: #{deepnet_forward.3} parent=50 // loop_header
                  %s367 = sphi 0, %s371
                  %p368 = scmp.ge.s32.totalorder %s367, 1
                  %s372 = sphi %s137, %s137
                  %s373 = sphi %s134, %s134
                $region61: #{deepnet_forward.3} parent=50 // loop_header_branch
                  %370 = sbr.rel (%p368) target = $region65
                $region62: #{deepnet_forward.3} parent=50 // loop_body
                  %v374 = vld [vmem:[%s372] sm:%s365]
                  %375 = vst [vmem:[%s373] sm:%s365] %v374
                  %v376 = vld [vmem:[%s372 + $0x4] sm:%s365]
                  %377 = vst [vmem:[%s373 + $0x4] sm:%s365] %v376
                  %v378 = vld [vmem:[%s372 + $0x8] sm:%s365]
                  %379 = vst [vmem:[%s373 + $0x8] sm:%s365] %v378
                  %v380 = vld [vmem:[%s372 + $0xc] sm:%s365]
                  %381 = vst [vmem:[%s373 + $0xc] sm:%s365] %v380
                  %v382 = vld [vmem:[%s372 + $0x10] sm:%s365]
                  %383 = vst [vmem:[%s373 + $0x10] sm:%s365] %v382
                  %v384 = vld [vmem:[%s372 + $0x14] sm:%s365]
                  %385 = vst [vmem:[%s373 + $0x14] sm:%s365] %v384
                  %v386 = vld [vmem:[%s372 + $0x18] sm:%s365]
                  %387 = vst [vmem:[%s373 + $0x18] sm:%s365] %v386
                  %v388 = vld [vmem:[%s372 + $0x1c] sm:%s365]
                  %389 = vst [vmem:[%s373 + $0x1c] sm:%s365] %v388
                  %v390 = vld [vmem:[%s372 + $0x20] sm:%s365]
                  %391 = vst [vmem:[%s373 + $0x20] sm:%s365] %v390
                  %v392 = vld [vmem:[%s372 + $0x24] sm:%s365]
                  %393 = vst [vmem:[%s373 + $0x24] sm:%s365] %v392
                  %v394 = vld [vmem:[%s372 + $0x28] sm:%s365]
                  %395 = vst [vmem:[%s373 + $0x28] sm:%s365] %v394
                  %v396 = vld [vmem:[%s372 + $0x2c] sm:%s365]
                  %397 = vst [vmem:[%s373 + $0x2c] sm:%s365] %v396
                  %v398 = vld [vmem:[%s372 + $0x30] sm:%s365]
                  %399 = vst [vmem:[%s373 + $0x30] sm:%s365] %v398
                  %v400 = vld [vmem:[%s372 + $0x34] sm:%s365]
                  %401 = vst [vmem:[%s373 + $0x34] sm:%s365] %v400
                  %v402 = vld [vmem:[%s372 + $0x38] sm:%s365]
                  %403 = vst [vmem:[%s373 + $0x38] sm:%s365] %v402
                  %v404 = vld [vmem:[%s372 + $0x3c] sm:%s365]
                  %405 = vst [vmem:[%s373 + $0x3c] sm:%s365] %v404
                  %v406 = vld [vmem:[%s372 + $0x40] sm:%s365]
                  %407 = vst [vmem:[%s373 + $0x40] sm:%s365] %v406
                  %v408 = vld [vmem:[%s372 + $0x44] sm:%s365]
                  %409 = vst [vmem:[%s373 + $0x44] sm:%s365] %v408
                  %v410 = vld [vmem:[%s372 + $0x48] sm:%s365]
                  %411 = vst [vmem:[%s373 + $0x48] sm:%s365] %v410
                  %v412 = vld [vmem:[%s372 + $0x4c] sm:%s365]
                  %413 = vst [vmem:[%s373 + $0x4c] sm:%s365] %v412
                  %v414 = vld [vmem:[%s372 + $0x50] sm:%s365]
                  %415 = vst [vmem:[%s373 + $0x50] sm:%s365] %v414
                  %v416 = vld [vmem:[%s372 + $0x54] sm:%s365]
                  %417 = vst [vmem:[%s373 + $0x54] sm:%s365] %v416
                  %v418 = vld [vmem:[%s372 + $0x58] sm:%s365]
                  %419 = vst [vmem:[%s373 + $0x58] sm:%s365] %v418
                  %v420 = vld [vmem:[%s372 + $0x5c] sm:%s365]
                  %421 = vst [vmem:[%s373 + $0x5c] sm:%s365] %v420
                  %v422 = vld [vmem:[%s372 + $0x60] sm:%s365]
                  %423 = vst [vmem:[%s373 + $0x60] sm:%s365] %v422
                  %v424 = vld [vmem:[%s372 + $0xc8] sm:%s365]
                  %425 = vst [vmem:[%s373 + $0x64] sm:%s365] %v424
                  %v426 = vld [vmem:[%s372 + $0xcc] sm:%s365]
                  %427 = vst [vmem:[%s373 + $0x68] sm:%s365] %v426
                  %v428 = vld [vmem:[%s372 + $0xd0] sm:%s365]
                  %429 = vst [vmem:[%s373 + $0x6c] sm:%s365] %v428
                  %v430 = vld [vmem:[%s372 + $0xd4] sm:%s365]
                  %431 = vst [vmem:[%s373 + $0x70] sm:%s365] %v430
                  %v432 = vld [vmem:[%s372 + $0xd8] sm:%s365]
                  %433 = vst [vmem:[%s373 + $0x74] sm:%s365] %v432
                  %v434 = vld [vmem:[%s372 + $0xdc] sm:%s365]
                  %435 = vst [vmem:[%s373 + $0x78] sm:%s365] %v434
                  %v436 = vld [vmem:[%s372 + $0xe0] sm:%s365]
                  %437 = vst [vmem:[%s373 + $0x7c] sm:%s365] %v436
                  %v438 = vld [vmem:[%s372 + $0xe4] sm:%s365]
                  %439 = vst [vmem:[%s373 + $0x80] sm:%s365] %v438
                  %v440 = vld [vmem:[%s372 + $0xe8] sm:%s365]
                  %441 = vst [vmem:[%s373 + $0x84] sm:%s365] %v440
                  %v442 = vld [vmem:[%s372 + $0xec] sm:%s365]
                  %443 = vst [vmem:[%s373 + $0x88] sm:%s365] %v442
                  %v444 = vld [vmem:[%s372 + $0xf0] sm:%s365]
                  %445 = vst [vmem:[%s373 + $0x8c] sm:%s365] %v444
                  %v446 = vld [vmem:[%s372 + $0xf4] sm:%s365]
                  %447 = vst [vmem:[%s373 + $0x90] sm:%s365] %v446
                  %v448 = vld [vmem:[%s372 + $0xf8] sm:%s365]
                  %449 = vst [vmem:[%s373 + $0x94] sm:%s365] %v448
                  %v450 = vld [vmem:[%s372 + $0xfc] sm:%s365]
                  %451 = vst [vmem:[%s373 + $0x98] sm:%s365] %v450
                  %v452 = vld [vmem:[%s372 + $0x100] sm:%s365]
                  %453 = vst [vmem:[%s373 + $0x9c] sm:%s365] %v452
                  %v454 = vld [vmem:[%s372 + $0x104] sm:%s365]
                  %455 = vst [vmem:[%s373 + $0xa0] sm:%s365] %v454
                  %v456 = vld [vmem:[%s372 + $0x108] sm:%s365]
                  %457 = vst [vmem:[%s373 + $0xa4] sm:%s365] %v456
                  %v458 = vld [vmem:[%s372 + $0x10c] sm:%s365]
                  %459 = vst [vmem:[%s373 + $0xa8] sm:%s365] %v458
                  %v460 = vld [vmem:[%s372 + $0x110] sm:%s365]
                  %461 = vst [vmem:[%s373 + $0xac] sm:%s365] %v460
                  %v462 = vld [vmem:[%s372 + $0x114] sm:%s365]
                  %463 = vst [vmem:[%s373 + $0xb0] sm:%s365] %v462
                  %v464 = vld [vmem:[%s372 + $0x118] sm:%s365]
                  %465 = vst [vmem:[%s373 + $0xb4] sm:%s365] %v464
                  %v466 = vld [vmem:[%s372 + $0x11c] sm:%s365]
                  %467 = vst [vmem:[%s373 + $0xb8] sm:%s365] %v466
                  %v468 = vld [vmem:[%s372 + $0x120] sm:%s365]
                  %469 = vst [vmem:[%s373 + $0xbc] sm:%s365] %v468
                  %v470 = vld [vmem:[%s372 + $0x124] sm:%s365]
                  %471 = vst [vmem:[%s373 + $0xc0] sm:%s365] %v470
                  %v472 = vld [vmem:[%s372 + $0x128] sm:%s365]
                  %473 = vst [vmem:[%s373 + $0xc4] sm:%s365] %v472
                  %v474 = vld [vmem:[%s372 + $0x190] sm:%s365]
                  %475 = vst [vmem:[%s373 + $0xc8] sm:%s365] %v474
                  %v476 = vld [vmem:[%s372 + $0x194] sm:%s365]
                  %477 = vst [vmem:[%s373 + $0xcc] sm:%s365] %v476
                  %v478 = vld [vmem:[%s372 + $0x198] sm:%s365]
                  %479 = vst [vmem:[%s373 + $0xd0] sm:%s365] %v478
                  %v480 = vld [vmem:[%s372 + $0x19c] sm:%s365]
                  %481 = vst [vmem:[%s373 + $0xd4] sm:%s365] %v480
                  %v482 = vld [vmem:[%s372 + $0x1a0] sm:%s365]
                  %483 = vst [vmem:[%s373 + $0xd8] sm:%s365] %v482
                  %v484 = vld [vmem:[%s372 + $0x1a4] sm:%s365]
                  %485 = vst [vmem:[%s373 + $0xdc] sm:%s365] %v484
                  %v486 = vld [vmem:[%s372 + $0x1a8] sm:%s365]
                  %487 = vst [vmem:[%s373 + $0xe0] sm:%s365] %v486
                  %v488 = vld [vmem:[%s372 + $0x1ac] sm:%s365]
                  %489 = vst [vmem:[%s373 + $0xe4] sm:%s365] %v488
                  %v490 = vld [vmem:[%s372 + $0x1b0] sm:%s365]
                  %491 = vst [vmem:[%s373 + $0xe8] sm:%s365] %v490
                  %v492 = vld [vmem:[%s372 + $0x1b4] sm:%s365]
                  %493 = vst [vmem:[%s373 + $0xec] sm:%s365] %v492
                  %v494 = vld [vmem:[%s372 + $0x1b8] sm:%s365]
                  %495 = vst [vmem:[%s373 + $0xf0] sm:%s365] %v494
                  %v496 = vld [vmem:[%s372 + $0x1bc] sm:%s365]
                  %497 = vst [vmem:[%s373 + $0xf4] sm:%s365] %v496
                  %v498 = vld [vmem:[%s372 + $0x1c0] sm:%s365]
                  %499 = vst [vmem:[%s373 + $0xf8] sm:%s365] %v498
                  %v500 = vld [vmem:[%s372 + $0x1c4] sm:%s365]
                  %501 = vst [vmem:[%s373 + $0xfc] sm:%s365] %v500
                  %v502 = vld [vmem:[%s372 + $0x1c8] sm:%s365]
                  %503 = vst [vmem:[%s373 + $0x100] sm:%s365] %v502
                  %v504 = vld [vmem:[%s372 + $0x1cc] sm:%s365]
                  %505 = vst [vmem:[%s373 + $0x104] sm:%s365] %v504
                  %v506 = vld [vmem:[%s372 + $0x1d0] sm:%s365]
                  %507 = vst [vmem:[%s373 + $0x108] sm:%s365] %v506
                  %v508 = vld [vmem:[%s372 + $0x1d4] sm:%s365]
                  %509 = vst [vmem:[%s373 + $0x10c] sm:%s365] %v508
                  %v510 = vld [vmem:[%s372 + $0x1d8] sm:%s365]
                  %511 = vst [vmem:[%s373 + $0x110] sm:%s365] %v510
                  %v512 = vld [vmem:[%s372 + $0x1dc] sm:%s365]
                  %513 = vst [vmem:[%s373 + $0x114] sm:%s365] %v512
                  %v514 = vld [vmem:[%s372 + $0x1e0] sm:%s365]
                  %515 = vst [vmem:[%s373 + $0x118] sm:%s365] %v514
                  %v516 = vld [vmem:[%s372 + $0x1e4] sm:%s365]
                  %517 = vst [vmem:[%s373 + $0x11c] sm:%s365] %v516
                  %v518 = vld [vmem:[%s372 + $0x1e8] sm:%s365]
                  %519 = vst [vmem:[%s373 + $0x120] sm:%s365] %v518
                  %v520 = vld [vmem:[%s372 + $0x1ec] sm:%s365]
                  %521 = vst [vmem:[%s373 + $0x124] sm:%s365] %v520
                  %v522 = vld [vmem:[%s372 + $0x1f0] sm:%s365]
                  %523 = vst [vmem:[%s373 + $0x128] sm:%s365] %v522
                  %v524 = vld [vmem:[%s372 + $0x258] sm:%s365]
                  %525 = vst [vmem:[%s373 + $0x12c] sm:%s365] %v524
                  %v526 = vld [vmem:[%s372 + $0x25c] sm:%s365]
                  %527 = vst [vmem:[%s373 + $0x130] sm:%s365] %v526
                  %v528 = vld [vmem:[%s372 + $0x260] sm:%s365]
                  %529 = vst [vmem:[%s373 + $0x134] sm:%s365] %v528
                  %v530 = vld [vmem:[%s372 + $0x264] sm:%s365]
                  %531 = vst [vmem:[%s373 + $0x138] sm:%s365] %v530
                  %v532 = vld [vmem:[%s372 + $0x268] sm:%s365]
                  %533 = vst [vmem:[%s373 + $0x13c] sm:%s365] %v532
                  %v534 = vld [vmem:[%s372 + $0x26c] sm:%s365]
                  %535 = vst [vmem:[%s373 + $0x140] sm:%s365] %v534
                  %v536 = vld [vmem:[%s372 + $0x270] sm:%s365]
                  %537 = vst [vmem:[%s373 + $0x144] sm:%s365] %v536
                  %v538 = vld [vmem:[%s372 + $0x274] sm:%s365]
                  %539 = vst [vmem:[%s373 + $0x148] sm:%s365] %v538
                  %v540 = vld [vmem:[%s372 + $0x278] sm:%s365]
                  %541 = vst [vmem:[%s373 + $0x14c] sm:%s365] %v540
                  %v542 = vld [vmem:[%s372 + $0x27c] sm:%s365]
                  %543 = vst [vmem:[%s373 + $0x150] sm:%s365] %v542
                  %v544 = vld [vmem:[%s372 + $0x280] sm:%s365]
                  %545 = vst [vmem:[%s373 + $0x154] sm:%s365] %v544
                  %v546 = vld [vmem:[%s372 + $0x284] sm:%s365]
                  %547 = vst [vmem:[%s373 + $0x158] sm:%s365] %v546
                  %v548 = vld [vmem:[%s372 + $0x288] sm:%s365]
                  %549 = vst [vmem:[%s373 + $0x15c] sm:%s365] %v548
                  %v550 = vld [vmem:[%s372 + $0x28c] sm:%s365]
                  %551 = vst [vmem:[%s373 + $0x160] sm:%s365] %v550
                  %v552 = vld [vmem:[%s372 + $0x290] sm:%s365]
                  %553 = vst [vmem:[%s373 + $0x164] sm:%s365] %v552
                  %v554 = vld [vmem:[%s372 + $0x294] sm:%s365]
                  %555 = vst [vmem:[%s373 + $0x168] sm:%s365] %v554
                  %v556 = vld [vmem:[%s372 + $0x298] sm:%s365]
                  %557 = vst [vmem:[%s373 + $0x16c] sm:%s365] %v556
                  %v558 = vld [vmem:[%s372 + $0x29c] sm:%s365]
                  %559 = vst [vmem:[%s373 + $0x170] sm:%s365] %v558
                  %v560 = vld [vmem:[%s372 + $0x2a0] sm:%s365]
                  %561 = vst [vmem:[%s373 + $0x174] sm:%s365] %v560
                  %v562 = vld [vmem:[%s372 + $0x2a4] sm:%s365]
                  %563 = vst [vmem:[%s373 + $0x178] sm:%s365] %v562
                  %v564 = vld [vmem:[%s372 + $0x2a8] sm:%s365]
                  %565 = vst [vmem:[%s373 + $0x17c] sm:%s365] %v564
                  %v566 = vld [vmem:[%s372 + $0x2ac] sm:%s365]
                  %567 = vst [vmem:[%s373 + $0x180] sm:%s365] %v566
                  %v568 = vld [vmem:[%s372 + $0x2b0] sm:%s365]
                  %569 = vst [vmem:[%s373 + $0x184] sm:%s365] %v568
                  %v570 = vld [vmem:[%s372 + $0x2b4] sm:%s365]
                  %571 = vst [vmem:[%s373 + $0x188] sm:%s365] %v570
                  %v572 = vld [vmem:[%s372 + $0x2b8] sm:%s365]
                  %573 = vst [vmem:[%s373 + $0x18c] sm:%s365] %v572
                $region63: #{deepnet_forward.3} parent=50 // loop_footer
                  %s371 = sadd.s32 1, %s367
                $region64: #{deepnet_forward.3} parent=50 // loop_footer_branch
                  %366 = sbr.rel target = $region60
                $region65: #{deepnet_forward.3} parent=50 // loop_exit
                  _
              $region51: #{deepnet_forward.3} parent=35 // pred_fallthru
                _
            $region36: #{deepnet_forward.3} parent=31 // pred_fallthru
              _
            // Predicated region
            $region37: #{deepnet_forward.3} parent=31 // pred_check
              _
            $region38: #{deepnet_forward.3} parent=31 // pred_check_branch
              %143 = sbr.rel (0) target = $region40
            $region39: #{deepnet_forward.3} parent=31 // pred_region
              %s145 = ssub.s32 16, 1
              loop: start=0, step=1, limit=1
              $region41: #{deepnet_forward.3} parent=39 // loop_pre_header
                _
              $region42: #{deepnet_forward.3} parent=39 // loop_header
                %s147 = sphi 0, %s151
                %p148 = scmp.ge.s32.totalorder %s147, 1
                %s152 = sphi %s137, %s137
                %s153 = sphi %s134, %s134
              $region43: #{deepnet_forward.3} parent=39 // loop_header_branch
                %150 = sbr.rel (%p148) target = $region47
              $region44: #{deepnet_forward.3} parent=39 // loop_body
                %v154 = vld [vmem:[%s152] sm:%s145]
                %155 = vst [vmem:[%s153] sm:%s145] %v154
                %v156 = vld [vmem:[%s152 + $0x4] sm:%s145]
                %157 = vst [vmem:[%s153 + $0x4] sm:%s145] %v156
                %v158 = vld [vmem:[%s152 + $0x8] sm:%s145]
                %159 = vst [vmem:[%s153 + $0x8] sm:%s145] %v158
                %v160 = vld [vmem:[%s152 + $0xc] sm:%s145]
                %161 = vst [vmem:[%s153 + $0xc] sm:%s145] %v160
                %v162 = vld [vmem:[%s152 + $0x10] sm:%s145]
                %163 = vst [vmem:[%s153 + $0x10] sm:%s145] %v162
                %v164 = vld [vmem:[%s152 + $0x14] sm:%s145]
                %165 = vst [vmem:[%s153 + $0x14] sm:%s145] %v164
                %v166 = vld [vmem:[%s152 + $0x18] sm:%s145]
                %167 = vst [vmem:[%s153 + $0x18] sm:%s145] %v166
                %v168 = vld [vmem:[%s152 + $0x1c] sm:%s145]
                %169 = vst [vmem:[%s153 + $0x1c] sm:%s145] %v168
                %v170 = vld [vmem:[%s152 + $0x20] sm:%s145]
                %171 = vst [vmem:[%s153 + $0x20] sm:%s145] %v170
                %v172 = vld [vmem:[%s152 + $0x24] sm:%s145]
                %173 = vst [vmem:[%s153 + $0x24] sm:%s145] %v172
                %v174 = vld [vmem:[%s152 + $0x28] sm:%s145]
                %175 = vst [vmem:[%s153 + $0x28] sm:%s145] %v174
                %v176 = vld [vmem:[%s152 + $0x2c] sm:%s145]
                %177 = vst [vmem:[%s153 + $0x2c] sm:%s145] %v176
                %v178 = vld [vmem:[%s152 + $0x30] sm:%s145]
                %179 = vst [vmem:[%s153 + $0x30] sm:%s145] %v178
                %v180 = vld [vmem:[%s152 + $0x34] sm:%s145]
                %181 = vst [vmem:[%s153 + $0x34] sm:%s145] %v180
                %v182 = vld [vmem:[%s152 + $0x38] sm:%s145]
                %183 = vst [vmem:[%s153 + $0x38] sm:%s145] %v182
                %v184 = vld [vmem:[%s152 + $0x3c] sm:%s145]
                %185 = vst [vmem:[%s153 + $0x3c] sm:%s145] %v184
                %v186 = vld [vmem:[%s152 + $0x40] sm:%s145]
                %187 = vst [vmem:[%s153 + $0x40] sm:%s145] %v186
                %v188 = vld [vmem:[%s152 + $0x44] sm:%s145]
                %189 = vst [vmem:[%s153 + $0x44] sm:%s145] %v188
                %v190 = vld [vmem:[%s152 + $0x48] sm:%s145]
                %191 = vst [vmem:[%s153 + $0x48] sm:%s145] %v190
                %v192 = vld [vmem:[%s152 + $0x4c] sm:%s145]
                %193 = vst [vmem:[%s153 + $0x4c] sm:%s145] %v192
                %v194 = vld [vmem:[%s152 + $0x50] sm:%s145]
                %195 = vst [vmem:[%s153 + $0x50] sm:%s145] %v194
                %v196 = vld [vmem:[%s152 + $0x54] sm:%s145]
                %197 = vst [vmem:[%s153 + $0x54] sm:%s145] %v196
                %v198 = vld [vmem:[%s152 + $0x58] sm:%s145]
                %199 = vst [vmem:[%s153 + $0x58] sm:%s145] %v198
                %v200 = vld [vmem:[%s152 + $0x5c] sm:%s145]
                %201 = vst [vmem:[%s153 + $0x5c] sm:%s145] %v200
                %v202 = vld [vmem:[%s152 + $0x60] sm:%s145]
                %203 = vst [vmem:[%s153 + $0x60] sm:%s145] %v202
                %v204 = vld [vmem:[%s152 + $0xc8] sm:%s145]
                %205 = vst [vmem:[%s153 + $0x64] sm:%s145] %v204
                %v206 = vld [vmem:[%s152 + $0xcc] sm:%s145]
                %207 = vst [vmem:[%s153 + $0x68] sm:%s145] %v206
                %v208 = vld [vmem:[%s152 + $0xd0] sm:%s145]
                %209 = vst [vmem:[%s153 + $0x6c] sm:%s145] %v208
                %v210 = vld [vmem:[%s152 + $0xd4] sm:%s145]
                %211 = vst [vmem:[%s153 + $0x70] sm:%s145] %v210
                %v212 = vld [vmem:[%s152 + $0xd8] sm:%s145]
                %213 = vst [vmem:[%s153 + $0x74] sm:%s145] %v212
                %v214 = vld [vmem:[%s152 + $0xdc] sm:%s145]
                %215 = vst [vmem:[%s153 + $0x78] sm:%s145] %v214
                %v216 = vld [vmem:[%s152 + $0xe0] sm:%s145]
                %217 = vst [vmem:[%s153 + $0x7c] sm:%s145] %v216
                %v218 = vld [vmem:[%s152 + $0xe4] sm:%s145]
                %219 = vst [vmem:[%s153 + $0x80] sm:%s145] %v218
                %v220 = vld [vmem:[%s152 + $0xe8] sm:%s145]
                %221 = vst [vmem:[%s153 + $0x84] sm:%s145] %v220
                %v222 = vld [vmem:[%s152 + $0xec] sm:%s145]
                %223 = vst [vmem:[%s153 + $0x88] sm:%s145] %v222
                %v224 = vld [vmem:[%s152 + $0xf0] sm:%s145]
                %225 = vst [vmem:[%s153 + $0x8c] sm:%s145] %v224
                %v226 = vld [vmem:[%s152 + $0xf4] sm:%s145]
                %227 = vst [vmem:[%s153 + $0x90] sm:%s145] %v226
                %v228 = vld [vmem:[%s152 + $0xf8] sm:%s145]
                %229 = vst [vmem:[%s153 + $0x94] sm:%s145] %v228
                %v230 = vld [vmem:[%s152 + $0xfc] sm:%s145]
                %231 = vst [vmem:[%s153 + $0x98] sm:%s145] %v230
                %v232 = vld [vmem:[%s152 + $0x100] sm:%s145]
                %233 = vst [vmem:[%s153 + $0x9c] sm:%s145] %v232
                %v234 = vld [vmem:[%s152 + $0x104] sm:%s145]
                %235 = vst [vmem:[%s153 + $0xa0] sm:%s145] %v234
                %v236 = vld [vmem:[%s152 + $0x108] sm:%s145]
                %237 = vst [vmem:[%s153 + $0xa4] sm:%s145] %v236
                %v238 = vld [vmem:[%s152 + $0x10c] sm:%s145]
                %239 = vst [vmem:[%s153 + $0xa8] sm:%s145] %v238
                %v240 = vld [vmem:[%s152 + $0x110] sm:%s145]
                %241 = vst [vmem:[%s153 + $0xac] sm:%s145] %v240
                %v242 = vld [vmem:[%s152 + $0x114] sm:%s145]
                %243 = vst [vmem:[%s153 + $0xb0] sm:%s145] %v242
                %v244 = vld [vmem:[%s152 + $0x118] sm:%s145]
                %245 = vst [vmem:[%s153 + $0xb4] sm:%s145] %v244
                %v246 = vld [vmem:[%s152 + $0x11c] sm:%s145]
                %247 = vst [vmem:[%s153 + $0xb8] sm:%s145] %v246
                %v248 = vld [vmem:[%s152 + $0x120] sm:%s145]
                %249 = vst [vmem:[%s153 + $0xbc] sm:%s145] %v248
                %v250 = vld [vmem:[%s152 + $0x124] sm:%s145]
                %251 = vst [vmem:[%s153 + $0xc0] sm:%s145] %v250
                %v252 = vld [vmem:[%s152 + $0x128] sm:%s145]
                %253 = vst [vmem:[%s153 + $0xc4] sm:%s145] %v252
                %v254 = vld [vmem:[%s152 + $0x190] sm:%s145]
                %255 = vst [vmem:[%s153 + $0xc8] sm:%s145] %v254
                %v256 = vld [vmem:[%s152 + $0x194] sm:%s145]
                %257 = vst [vmem:[%s153 + $0xcc] sm:%s145] %v256
                %v258 = vld [vmem:[%s152 + $0x198] sm:%s145]
                %259 = vst [vmem:[%s153 + $0xd0] sm:%s145] %v258
                %v260 = vld [vmem:[%s152 + $0x19c] sm:%s145]
                %261 = vst [vmem:[%s153 + $0xd4] sm:%s145] %v260
                %v262 = vld [vmem:[%s152 + $0x1a0] sm:%s145]
                %263 = vst [vmem:[%s153 + $0xd8] sm:%s145] %v262
                %v264 = vld [vmem:[%s152 + $0x1a4] sm:%s145]
                %265 = vst [vmem:[%s153 + $0xdc] sm:%s145] %v264
                %v266 = vld [vmem:[%s152 + $0x1a8] sm:%s145]
                %267 = vst [vmem:[%s153 + $0xe0] sm:%s145] %v266
                %v268 = vld [vmem:[%s152 + $0x1ac] sm:%s145]
                %269 = vst [vmem:[%s153 + $0xe4] sm:%s145] %v268
                %v270 = vld [vmem:[%s152 + $0x1b0] sm:%s145]
                %271 = vst [vmem:[%s153 + $0xe8] sm:%s145] %v270
                %v272 = vld [vmem:[%s152 + $0x1b4] sm:%s145]
                %273 = vst [vmem:[%s153 + $0xec] sm:%s145] %v272
                %v274 = vld [vmem:[%s152 + $0x1b8] sm:%s145]
                %275 = vst [vmem:[%s153 + $0xf0] sm:%s145] %v274
                %v276 = vld [vmem:[%s152 + $0x1bc] sm:%s145]
                %277 = vst [vmem:[%s153 + $0xf4] sm:%s145] %v276
                %v278 = vld [vmem:[%s152 + $0x1c0] sm:%s145]
                %279 = vst [vmem:[%s153 + $0xf8] sm:%s145] %v278
                %v280 = vld [vmem:[%s152 + $0x1c4] sm:%s145]
                %281 = vst [vmem:[%s153 + $0xfc] sm:%s145] %v280
                %v282 = vld [vmem:[%s152 + $0x1c8] sm:%s145]
                %283 = vst [vmem:[%s153 + $0x100] sm:%s145] %v282
                %v284 = vld [vmem:[%s152 + $0x1cc] sm:%s145]
                %285 = vst [vmem:[%s153 + $0x104] sm:%s145] %v284
                %v286 = vld [vmem:[%s152 + $0x1d0] sm:%s145]
                %287 = vst [vmem:[%s153 + $0x108] sm:%s145] %v286
                %v288 = vld [vmem:[%s152 + $0x1d4] sm:%s145]
                %289 = vst [vmem:[%s153 + $0x10c] sm:%s145] %v288
                %v290 = vld [vmem:[%s152 + $0x1d8] sm:%s145]
                %291 = vst [vmem:[%s153 + $0x110] sm:%s145] %v290
                %v292 = vld [vmem:[%s152 + $0x1dc] sm:%s145]
                %293 = vst [vmem:[%s153 + $0x114] sm:%s145] %v292
                %v294 = vld [vmem:[%s152 + $0x1e0] sm:%s145]
                %295 = vst [vmem:[%s153 + $0x118] sm:%s145] %v294
                %v296 = vld [vmem:[%s152 + $0x1e4] sm:%s145]
                %297 = vst [vmem:[%s153 + $0x11c] sm:%s145] %v296
                %v298 = vld [vmem:[%s152 + $0x1e8] sm:%s145]
                %299 = vst [vmem:[%s153 + $0x120] sm:%s145] %v298
                %v300 = vld [vmem:[%s152 + $0x1ec] sm:%s145]
                %301 = vst [vmem:[%s153 + $0x124] sm:%s145] %v300
                %v302 = vld [vmem:[%s152 + $0x1f0] sm:%s145]
                %303 = vst [vmem:[%s153 + $0x128] sm:%s145] %v302
                %v304 = vld [vmem:[%s152 + $0x258] sm:%s145]
                %305 = vst [vmem:[%s153 + $0x12c] sm:%s145] %v304
                %v306 = vld [vmem:[%s152 + $0x25c] sm:%s145]
                %307 = vst [vmem:[%s153 + $0x130] sm:%s145] %v306
                %v308 = vld [vmem:[%s152 + $0x260] sm:%s145]
                %309 = vst [vmem:[%s153 + $0x134] sm:%s145] %v308
                %v310 = vld [vmem:[%s152 + $0x264] sm:%s145]
                %311 = vst [vmem:[%s153 + $0x138] sm:%s145] %v310
                %v312 = vld [vmem:[%s152 + $0x268] sm:%s145]
                %313 = vst [vmem:[%s153 + $0x13c] sm:%s145] %v312
                %v314 = vld [vmem:[%s152 + $0x26c] sm:%s145]
                %315 = vst [vmem:[%s153 + $0x140] sm:%s145] %v314
                %v316 = vld [vmem:[%s152 + $0x270] sm:%s145]
                %317 = vst [vmem:[%s153 + $0x144] sm:%s145] %v316
                %v318 = vld [vmem:[%s152 + $0x274] sm:%s145]
                %319 = vst [vmem:[%s153 + $0x148] sm:%s145] %v318
                %v320 = vld [vmem:[%s152 + $0x278] sm:%s145]
                %321 = vst [vmem:[%s153 + $0x14c] sm:%s145] %v320
                %v322 = vld [vmem:[%s152 + $0x27c] sm:%s145]
                %323 = vst [vmem:[%s153 + $0x150] sm:%s145] %v322
                %v324 = vld [vmem:[%s152 + $0x280] sm:%s145]
                %325 = vst [vmem:[%s153 + $0x154] sm:%s145] %v324
                %v326 = vld [vmem:[%s152 + $0x284] sm:%s145]
                %327 = vst [vmem:[%s153 + $0x158] sm:%s145] %v326
                %v328 = vld [vmem:[%s152 + $0x288] sm:%s145]
                %329 = vst [vmem:[%s153 + $0x15c] sm:%s145] %v328
                %v330 = vld [vmem:[%s152 + $0x28c] sm:%s145]
                %331 = vst [vmem:[%s153 + $0x160] sm:%s145] %v330
                %v332 = vld [vmem:[%s152 + $0x290] sm:%s145]
                %333 = vst [vmem:[%s153 + $0x164] sm:%s145] %v332
                %v334 = vld [vmem:[%s152 + $0x294] sm:%s145]
                %335 = vst [vmem:[%s153 + $0x168] sm:%s145] %v334
                %v336 = vld [vmem:[%s152 + $0x298] sm:%s145]
                %337 = vst [vmem:[%s153 + $0x16c] sm:%s145] %v336
                %v338 = vld [vmem:[%s152 + $0x29c] sm:%s145]
                %339 = vst [vmem:[%s153 + $0x170] sm:%s145] %v338
                %v340 = vld [vmem:[%s152 + $0x2a0] sm:%s145]
                %341 = vst [vmem:[%s153 + $0x174] sm:%s145] %v340
                %v342 = vld [vmem:[%s152 + $0x2a4] sm:%s145]
                %343 = vst [vmem:[%s153 + $0x178] sm:%s145] %v342
                %v344 = vld [vmem:[%s152 + $0x2a8] sm:%s145]
                %345 = vst [vmem:[%s153 + $0x17c] sm:%s145] %v344
                %v346 = vld [vmem:[%s152 + $0x2ac] sm:%s145]
                %347 = vst [vmem:[%s153 + $0x180] sm:%s145] %v346
                %v348 = vld [vmem:[%s152 + $0x2b0] sm:%s145]
                %349 = vst [vmem:[%s153 + $0x184] sm:%s145] %v348
                %v350 = vld [vmem:[%s152 + $0x2b4] sm:%s145]
                %351 = vst [vmem:[%s153 + $0x188] sm:%s145] %v350
                %v352 = vld [vmem:[%s152 + $0x2b8] sm:%s145]
                %353 = vst [vmem:[%s153 + $0x18c] sm:%s145] %v352
              $region45: #{deepnet_forward.3} parent=39 // loop_footer
                %s151 = sadd.s32 1, %s147
              $region46: #{deepnet_forward.3} parent=39 // loop_footer_branch
                %146 = sbr.rel target = $region42
              $region47: #{deepnet_forward.3} parent=39 // loop_exit
                _
            $region40: #{deepnet_forward.3} parent=31 // pred_fallthru
              _
          $region32: #{deepnet_forward.3} parent=27 // pred_fallthru
            _
          %574 = vnop
        $region28: #{deepnet_forward.3} parent=23 // pred_fallthru
          _
      $region24: #{deepnet_forward.3} parent=5 // pred_fallthru
        _
      %p575 = scmp.le.s32.totalorder 1, %s9
      %p576 = scmp.lt.s32.totalorder %s9, 3
      %p577 = pnand %p575, %p576
      %p578 = pneg %p577
      // Predicated region
      $region66: #{deepnet_forward.3} parent=5 // pred_check
        _
      $region67: #{deepnet_forward.3} parent=5 // pred_check_branch
        %580 = sbr.rel (%p577) target = $region69
      $region68: #{deepnet_forward.3} parent=5 // pred_region
        %s581 = ssub.s32 %s9, 1
        %s582 = sand.u32 %s22, 1
        %s583 = sand.u32 %s22, 1
        %s584 = smul.addr %s583, 400
        %s585 = scalar_lea.vmem [#allocation2], %s584
        // Predicated region
        $region70: #{deepnet_forward.3} parent=68 // pred_check
          %p586 = pneg %p35
        $region71: #{deepnet_forward.3} parent=68 // pred_check_branch
          %588 = sbr.rel (%p586) target = $region73
        $region72: #{deepnet_forward.3} parent=68 // pred_region
          _
        $region73: #{deepnet_forward.3} parent=68 // pred_fallthru
          _
        %s589 = sand.u32 %s22, 1
        %s590 = sand.u32 %s22, 1
        %s591 = smul.addr %s590, 400
        %s592 = scalar_lea.vmem [#allocation2], %s591
        %p593 = pneg %p35
        %p594 = pneg %p32
        %p595 = pneg %p56
        %p596 = pneg %p53
        %p597 = pneg %p77
        %p598 = pneg %p74
        %p599 = pneg %p103
        %p600 = pneg %p100
        %s601 = smul.u32 25, %s14
        %p602 = scmp.lt.s32.totalorder %s601, 49
        %s603 = scalar_select %p602, %s601, 49
        %s604 = smul.addr %s603, 4
        %s605 = scalar_lea.vmem %s3, %s604
        %s606 = smul.u32 25, %s14
        %s607 = smul.u32 25, %s14
        %p608 = scmp.lt.s32.totalorder %s607, 49
        %s609 = scalar_select %p608, %s607, 49
        %s610 = smul.addr %s609, 4
        %s611 = scalar_lea.vmem %s3, %s610
        %s612 = smul.u32 25, %s14
        %v614 = vld [vmem:[%s585] sm:$0xf]
        %v615 = vld [vmem:[%s585 + $0x4] sm:$0xf]
        %v616 = vld [vmem:[%s585 + $0x8] sm:$0xf]
        %v617 = vld [vmem:[%s585 + $0xc] sm:$0xf]
        %v618 = vld [vmem:[%s585 + $0x10] sm:$0xf]
        %v619 = vld [vmem:[%s585 + $0x14] sm:$0xf]
        %v620 = vld [vmem:[%s585 + $0x18] sm:$0xf]
        %v621 = vld [vmem:[%s585 + $0x1c] sm:$0xf]
        %v622 = vld [vmem:[%s585 + $0x20] sm:$0xf]
        %v623 = vld [vmem:[%s585 + $0x24] sm:$0xf]
        %v624 = vld [vmem:[%s585 + $0x28] sm:$0xf]
        %v625 = vld [vmem:[%s585 + $0x2c] sm:$0xf]
        %v626 = vld [vmem:[%s585 + $0x30] sm:$0xf]
        %v627 = vld [vmem:[%s585 + $0x34] sm:$0xf]
        %v628 = vld [vmem:[%s585 + $0x38] sm:$0xf]
        %v629 = vld [vmem:[%s585 + $0x3c] sm:$0xf]
        %v630 = vld [vmem:[%s585 + $0x40] sm:$0xf]
        %v631 = vld [vmem:[%s585 + $0x44] sm:$0xf]
        %v632 = vld [vmem:[%s585 + $0x48] sm:$0xf]
        %v633 = vld [vmem:[%s585 + $0x4c] sm:$0xf]
        %v634 = vld [vmem:[%s585 + $0x50] sm:$0xf]
        %v635 = vld [vmem:[%s585 + $0x54] sm:$0xf]
        %v636 = vld [vmem:[%s585 + $0x58] sm:$0xf]
        %v637 = vld [vmem:[%s585 + $0x5c] sm:$0xf]
        %v638 = vld [vmem:[%s585 + $0x60] sm:$0xf]
        %v639 = vld [vmem:[%s585 + $0x64] sm:$0xf]
        %v640 = vld [vmem:[%s585 + $0x68] sm:$0xf]
        %v641 = vld [vmem:[%s585 + $0x6c] sm:$0xf]
        %v642 = vld [vmem:[%s585 + $0x70] sm:$0xf]
        %v643 = vld [vmem:[%s585 + $0x74] sm:$0xf]
        %v644 = vld [vmem:[%s585 + $0x78] sm:$0xf]
        %v645 = vld [vmem:[%s585 + $0x7c] sm:$0xf]
        %v646 = vld [vmem:[%s585 + $0x80] sm:$0xf]
        %v647 = vld [vmem:[%s585 + $0x84] sm:$0xf]
        %v648 = vld [vmem:[%s585 + $0x88] sm:$0xf]
        %v649 = vld [vmem:[%s585 + $0x8c] sm:$0xf]
        %v650 = vld [vmem:[%s585 + $0x90] sm:$0xf]
        %v651 = vld [vmem:[%s585 + $0x94] sm:$0xf]
        %v652 = vld [vmem:[%s585 + $0x98] sm:$0xf]
        %v653 = vld [vmem:[%s585 + $0x9c] sm:$0xf]
        %v654 = vld [vmem:[%s585 + $0xa0] sm:$0xf]
        %v655 = vld [vmem:[%s585 + $0xa4] sm:$0xf]
        %v656 = vld [vmem:[%s585 + $0xa8] sm:$0xf]
        %v657 = vld [vmem:[%s585 + $0xac] sm:$0xf]
        %v658 = vld [vmem:[%s585 + $0xb0] sm:$0xf]
        %v659 = vld [vmem:[%s585 + $0xb4] sm:$0xf]
        %v660 = vld [vmem:[%s585 + $0xb8] sm:$0xf]
        %v661 = vld [vmem:[%s585 + $0xbc] sm:$0xf]
        %v662 = vld [vmem:[%s585 + $0xc0] sm:$0xf]
        %v663 = vld [vmem:[%s585 + $0xc4] sm:$0xf]
        %v664 = vld [vmem:[%s585 + $0xc8] sm:$0xf]
        %v665 = vld [vmem:[%s585 + $0xcc] sm:$0xf]
        %v666 = vld [vmem:[%s585 + $0xd0] sm:$0xf]
        %v667 = vld [vmem:[%s585 + $0xd4] sm:$0xf]
        %v668 = vld [vmem:[%s585 + $0xd8] sm:$0xf]
        %v669 = vld [vmem:[%s585 + $0xdc] sm:$0xf]
        %v670 = vld [vmem:[%s585 + $0xe0] sm:$0xf]
        %v671 = vld [vmem:[%s585 + $0xe4] sm:$0xf]
        %v672 = vld [vmem:[%s585 + $0xe8] sm:$0xf]
        %v673 = vld [vmem:[%s585 + $0xec] sm:$0xf]
        %v674 = vld [vmem:[%s585 + $0xf0] sm:$0xf]
        %v675 = vld [vmem:[%s585 + $0xf4] sm:$0xf]
        %v676 = vld [vmem:[%s585 + $0xf8] sm:$0xf]
        %v677 = vld [vmem:[%s585 + $0xfc] sm:$0xf]
        %v678 = vld [vmem:[%s585 + $0x100] sm:$0xf]
        %v679 = vld [vmem:[%s585 + $0x104] sm:$0xf]
        %v680 = vld [vmem:[%s585 + $0x108] sm:$0xf]
        %v681 = vld [vmem:[%s585 + $0x10c] sm:$0xf]
        %v682 = vld [vmem:[%s585 + $0x110] sm:$0xf]
        %v683 = vld [vmem:[%s585 + $0x114] sm:$0xf]
        %v684 = vld [vmem:[%s585 + $0x118] sm:$0xf]
        %v685 = vld [vmem:[%s585 + $0x11c] sm:$0xf]
        %v686 = vld [vmem:[%s585 + $0x120] sm:$0xf]
        %v687 = vld [vmem:[%s585 + $0x124] sm:$0xf]
        %v688 = vld [vmem:[%s585 + $0x128] sm:$0xf]
        %v689 = vld [vmem:[%s585 + $0x12c] sm:$0xf]
        %v690 = vld [vmem:[%s585 + $0x130] sm:$0xf]
        %v691 = vld [vmem:[%s585 + $0x134] sm:$0xf]
        %v692 = vld [vmem:[%s585 + $0x138] sm:$0xf]
        %v693 = vld [vmem:[%s585 + $0x13c] sm:$0xf]
        %v694 = vld [vmem:[%s585 + $0x140] sm:$0xf]
        %v695 = vld [vmem:[%s585 + $0x144] sm:$0xf]
        %v696 = vld [vmem:[%s585 + $0x148] sm:$0xf]
        %v697 = vld [vmem:[%s585 + $0x14c] sm:$0xf]
        %v698 = vld [vmem:[%s585 + $0x150] sm:$0xf]
        %v699 = vld [vmem:[%s585 + $0x154] sm:$0xf]
        %v700 = vld [vmem:[%s585 + $0x158] sm:$0xf]
        %v701 = vld [vmem:[%s585 + $0x15c] sm:$0xf]
        %v702 = vld [vmem:[%s585 + $0x160] sm:$0xf]
        %v703 = vld [vmem:[%s585 + $0x164] sm:$0xf]
        %v704 = vld [vmem:[%s585 + $0x168] sm:$0xf]
        %v705 = vld [vmem:[%s585 + $0x16c] sm:$0xf]
        %v706 = vld [vmem:[%s585 + $0x170] sm:$0xf]
        %v707 = vld [vmem:[%s585 + $0x174] sm:$0xf]
        %v708 = vld [vmem:[%s585 + $0x178] sm:$0xf]
        %v709 = vld [vmem:[%s585 + $0x17c] sm:$0xf]
        %v710 = vld [vmem:[%s585 + $0x180] sm:$0xf]
        %v711 = vld [vmem:[%s585 + $0x184] sm:$0xf]
        %v712 = vld [vmem:[%s585 + $0x188] sm:$0xf]
        %v713 = vld [vmem:[%s585 + $0x18c] sm:$0xf]
        %v714 = vld [vmem:[%s1] sm:$0xf]
        %v715 = vld [vmem:[%s1 + $0x4] sm:$0xf]
        %v716 = vld [vmem:[%s1 + $0x8] sm:$0xf]
        %v717 = vld [vmem:[%s1 + $0xc] sm:$0xf]
        %v718 = vld [vmem:[%s1 + $0x10] sm:$0xf]
        %v719 = vld [vmem:[%s1 + $0x14] sm:$0xf]
        %v720 = vld [vmem:[%s1 + $0x18] sm:$0xf]
        %v721 = vld [vmem:[%s1 + $0x1c] sm:$0xf]
        %v722 = vld [vmem:[%s1 + $0x20] sm:$0xf]
        %v723 = vld [vmem:[%s1 + $0x24] sm:$0xf]
        %v724 = vld [vmem:[%s1 + $0x28] sm:$0xf]
        %v725 = vld [vmem:[%s1 + $0x2c] sm:$0xf]
        %v726 = vld [vmem:[%s1 + $0x30] sm:$0xf]
        %v727 = vld [vmem:[%s1 + $0x34] sm:$0xf]
        %v728 = vld [vmem:[%s1 + $0x38] sm:$0xf]
        %v729 = vld [vmem:[%s1 + $0x3c] sm:$0xf]
        %v730 = vld [vmem:[%s2] sm:$0x1]
        %v732 = vlaneseq
        %v733 = vshrl.u32 %v732, 7
        %v734 = vsub.s32 0, %v733
        %v735 = vrot.slane %v730, %v734
        %v837 = vunpack.c.l.b16 %v614
        %v838 = vunpack.c.l.b16 %v615
        %v839 = vunpack.c.l.b16 %v616
        %v840 = vunpack.c.l.b16 %v617
        %v841 = vunpack.c.l.b16 %v618
        %v842 = vunpack.c.l.b16 %v619
        %v843 = vunpack.c.l.b16 %v620
        %v844 = vunpack.c.l.b16 %v621
        %v845 = vunpack.c.l.b16 %v622
        %v846 = vunpack.c.l.b16 %v623
        %v847 = vunpack.c.l.b16 %v624
        %v848 = vunpack.c.l.b16 %v625
        %v849 = vunpack.c.l.b16 %v626
        %v850 = vunpack.c.l.b16 %v627
        %v851 = vunpack.c.l.b16 %v628
        %v852 = vunpack.c.l.b16 %v629
        %v853 = vunpack.c.l.b16 %v630
        %v854 = vunpack.c.l.b16 %v631
        %v855 = vunpack.c.l.b16 %v632
        %v856 = vunpack.c.l.b16 %v633
        %v857 = vunpack.c.l.b16 %v634
        %v858 = vunpack.c.l.b16 %v635
        %v859 = vunpack.c.l.b16 %v636
        %v860 = vunpack.c.l.b16 %v637
        %v861 = vunpack.c.l.b16 %v638
        %v862 = vunpack.c.l.b16 %v639
        %v863 = vunpack.c.l.b16 %v640
        %v864 = vunpack.c.l.b16 %v641
        %v865 = vunpack.c.l.b16 %v642
        %v866 = vunpack.c.l.b16 %v643
        %v867 = vunpack.c.l.b16 %v644
        %v868 = vunpack.c.l.b16 %v645
        %v869 = vunpack.c.l.b16 %v646
        %v870 = vunpack.c.l.b16 %v647
        %v871 = vunpack.c.l.b16 %v648
        %v872 = vunpack.c.l.b16 %v649
        %v873 = vunpack.c.l.b16 %v650
        %v874 = vunpack.c.l.b16 %v651
        %v875 = vunpack.c.l.b16 %v652
        %v876 = vunpack.c.l.b16 %v653
        %v877 = vunpack.c.l.b16 %v654
        %v878 = vunpack.c.l.b16 %v655
        %v879 = vunpack.c.l.b16 %v656
        %v880 = vunpack.c.l.b16 %v657
        %v881 = vunpack.c.l.b16 %v658
        %v882 = vunpack.c.l.b16 %v659
        %v883 = vunpack.c.l.b16 %v660
        %v884 = vunpack.c.l.b16 %v661
        %v885 = vunpack.c.l.b16 %v662
        %v886 = vunpack.c.l.b16 %v663
        %v887 = vunpack.c.l.b16 %v664
        %v888 = vunpack.c.l.b16 %v665
        %v889 = vunpack.c.l.b16 %v666
        %v890 = vunpack.c.l.b16 %v667
        %v891 = vunpack.c.l.b16 %v668
        %v892 = vunpack.c.l.b16 %v669
        %v893 = vunpack.c.l.b16 %v670
        %v894 = vunpack.c.l.b16 %v671
        %v895 = vunpack.c.l.b16 %v672
        %v896 = vunpack.c.l.b16 %v673
        %v897 = vunpack.c.l.b16 %v674
        %v898 = vunpack.c.l.b16 %v675
        %v899 = vunpack.c.l.b16 %v676
        %v900 = vunpack.c.l.b16 %v677
        %v901 = vunpack.c.l.b16 %v678
        %v902 = vunpack.c.l.b16 %v679
        %v903 = vunpack.c.l.b16 %v680
        %v904 = vunpack.c.l.b16 %v681
        %v905 = vunpack.c.l.b16 %v682
        %v906 = vunpack.c.l.b16 %v683
        %v907 = vunpack.c.l.b16 %v684
        %v908 = vunpack.c.l.b16 %v685
        %v909 = vunpack.c.l.b16 %v686
        %v910 = vunpack.c.l.b16 %v687
        %v911 = vunpack.c.l.b16 %v688
        %v912 = vunpack.c.l.b16 %v689
        %v913 = vunpack.c.l.b16 %v690
        %v914 = vunpack.c.l.b16 %v691
        %v915 = vunpack.c.l.b16 %v692
        %v916 = vunpack.c.l.b16 %v693
        %v917 = vunpack.c.l.b16 %v694
        %v918 = vunpack.c.l.b16 %v695
        %v919 = vunpack.c.l.b16 %v696
        %v920 = vunpack.c.l.b16 %v697
        %v921 = vunpack.c.l.b16 %v698
        %v922 = vunpack.c.l.b16 %v699
        %v923 = vunpack.c.l.b16 %v700
        %v924 = vunpack.c.l.b16 %v701
        %v925 = vunpack.c.l.b16 %v702
        %v926 = vunpack.c.l.b16 %v703
        %v927 = vunpack.c.l.b16 %v704
        %v928 = vunpack.c.l.b16 %v705
        %v929 = vunpack.c.l.b16 %v706
        %v930 = vunpack.c.l.b16 %v707
        %v931 = vunpack.c.l.b16 %v708
        %v932 = vunpack.c.l.b16 %v709
        %v933 = vunpack.c.l.b16 %v710
        %v934 = vunpack.c.l.b16 %v711
        %v935 = vunpack.c.l.b16 %v712
        %v936 = vunpack.c.l.b16 %v713
        %v937 = vpack.c.b16 %v838, %v837
        %v938 = vpack.c.b16 %v840, %v839
        %v939 = vpack.c.b16 %v842, %v841
        %v940 = vpack.c.b16 %v844, %v843
        %v941 = vpack.c.b16 %v846, %v845
        %v942 = vpack.c.b16 %v848, %v847
        %v943 = vpack.c.b16 %v850, %v849
        %v944 = vpack.c.b16 %v852, %v851
        %v945 = vpack.c.b16 %v854, %v853
        %v946 = vpack.c.b16 %v856, %v855
        %v947 = vpack.c.b16 %v858, %v857
        %v948 = vpack.c.b16 %v860, %v859
        %v949 = vpack.c.b16 %v862, %v861
        %v950 = vpack.c.b16 %v864, %v863
        %v951 = vpack.c.b16 %v866, %v865
        %v952 = vpack.c.b16 %v868, %v867
        %v953 = vpack.c.b16 %v870, %v869
        %v954 = vpack.c.b16 %v872, %v871
        %v955 = vpack.c.b16 %v874, %v873
        %v956 = vpack.c.b16 %v876, %v875
        %v957 = vpack.c.b16 %v878, %v877
        %v958 = vpack.c.b16 %v880, %v879
        %v959 = vpack.c.b16 %v882, %v881
        %v960 = vpack.c.b16 %v884, %v883
        %v961 = vpack.c.b16 %v886, %v885
        %v962 = vpack.c.b16 %v888, %v887
        %v963 = vpack.c.b16 %v890, %v889
        %v964 = vpack.c.b16 %v892, %v891
        %v965 = vpack.c.b16 %v894, %v893
        %v966 = vpack.c.b16 %v896, %v895
        %v967 = vpack.c.b16 %v898, %v897
        %v968 = vpack.c.b16 %v900, %v899
        %v969 = vpack.c.b16 %v902, %v901
        %v970 = vpack.c.b16 %v904, %v903
        %v971 = vpack.c.b16 %v906, %v905
        %v972 = vpack.c.b16 %v908, %v907
        %v973 = vpack.c.b16 %v910, %v909
        %v974 = vpack.c.b16 %v912, %v911
        %v975 = vpack.c.b16 %v914, %v913
        %v976 = vpack.c.b16 %v916, %v915
        %v977 = vpack.c.b16 %v918, %v917
        %v978 = vpack.c.b16 %v920, %v919
        %v979 = vpack.c.b16 %v922, %v921
        %v980 = vpack.c.b16 %v924, %v923
        %v981 = vpack.c.b16 %v926, %v925
        %v982 = vpack.c.b16 %v928, %v927
        %v983 = vpack.c.b16 %v930, %v929
        %v984 = vpack.c.b16 %v932, %v931
        %v985 = vpack.c.b16 %v934, %v933
        %v986 = vpack.c.b16 %v936, %v935
        %v1053 = vunpack.c.l.b16 %v714
        %v1054 = vunpack.c.l.b16 %v715
        %v1055 = vunpack.c.l.b16 %v716
        %v1056 = vunpack.c.l.b16 %v717
        %v1057 = vunpack.c.l.b16 %v718
        %v1058 = vunpack.c.l.b16 %v719
        %v1059 = vunpack.c.l.b16 %v720
        %v1060 = vunpack.c.l.b16 %v721
        %v1061 = vunpack.c.l.b16 %v722
        %v1062 = vunpack.c.l.b16 %v723
        %v1063 = vunpack.c.l.b16 %v724
        %v1064 = vunpack.c.l.b16 %v725
        %v1065 = vunpack.c.l.b16 %v726
        %v1066 = vunpack.c.l.b16 %v727
        %v1067 = vunpack.c.l.b16 %v728
        %v1068 = vunpack.c.l.b16 %v729
        %v1069 = vpack.c.b16 %v1054, %v1053
        %v1070 = vpack.c.b16 %v1056, %v1055
        %v1071 = vpack.c.b16 %v1058, %v1057
        %v1072 = vpack.c.b16 %v1060, %v1059
        %v1073 = vpack.c.b16 %v1062, %v1061
        %v1074 = vpack.c.b16 %v1064, %v1063
        %v1075 = vpack.c.b16 %v1066, %v1065
        %v1076 = vpack.c.b16 %v1068, %v1067
        %1085 = vmatprep.subr.bf16.mxu0 0
        %1086 = vmatpush1.bf16.msra.mxu0 %v1076
        %1087 = vmatprep.subr.bf16.mxu0 0
        %1088 = vmatpush1.bf16.msra.mxu0 %v1075
        %1089 = vmatprep.subr.bf16.mxu0 0
        %1090 = vmatpush1.bf16.msra.mxu0 %v1074
        %1091 = vmatprep.subr.bf16.mxu0 0
        %1092 = vmatpush1.bf16.msra.mxu0 %v1073
        %1093 = vmatprep.subr.bf16.mxu0 0
        %1094 = vmatpush1.bf16.msra.mxu0 %v1072
        %1095 = vmatprep.subr.bf16.mxu0 0
        %1096 = vmatpush1.bf16.msra.mxu0 %v1071
        %1097 = vmatprep.subr.bf16.mxu0 0
        %1098 = vmatpush1.bf16.msra.mxu0 %v1070
        %1099 = vmatprep.subr.bf16.mxu0 0
        %1100 = vmatpush1.bf16.msra.mxu0 %v1069
        %1101 = vmatprep.subr.bf16.mxu0 0
        %1102 = vmatpush2.bf16.msra.mxu0 0
        %1103 = vmatprep.subr.bf16.mxu0 0
        %1104 = vmatpush2.bf16.msra.mxu0 0
        %1105 = vmatprep.subr.bf16.mxu0 0
        %1106 = vmatpush2.bf16.msra.mxu0 0
        %1107 = vmatprep.subr.bf16.mxu0 0
        %1108 = vmatpush2.bf16.msra.mxu0 0
        %1109 = vmatprep.subr.bf16.mxu0 0
        %1110 = vmatpush2.bf16.msra.mxu0 0
        %1111 = vmatprep.subr.bf16.mxu0 0
        %1112 = vmatpush2.bf16.msra.mxu0 0
        %1113 = vmatprep.subr.bf16.mxu0 0
        %1114 = vmatpush2.bf16.msra.mxu0 0
        %1115 = vmatprep.subr.bf16.mxu0 0
        %1116 = vmatpush2.bf16.msra.mxu0 0
        %1117 = vmatprep.mubr.bf16.mxu0 0
        %1118 = vmatmul.mubr.bf16.gmra.mxu0 %v937
        %v1119 = vpop.f32.mrf.mxu0
        %v1120 = vadd.f32 %v735, %v1119
        %v1121 = vpop.f32.mrf.mxu0
        %v1122 = vpop.f32.mrf.mxu0
        %v1123 = vadd.f32 %v735, %v1122
        %v1124 = vpop.f32.mrf.mxu0
        %1125 = vmatprep.mubr.bf16.mxu0 0
        %1126 = vmatmul.mubr.bf16.gmra.mxu0 %v938
        %v1127 = vpop.f32.mrf.mxu0
        %v1128 = vadd.f32 %v735, %v1127
        %v1129 = vpop.f32.mrf.mxu0
        %v1130 = vpop.f32.mrf.mxu0
        %v1131 = vadd.f32 %v735, %v1130
        %v1132 = vpop.f32.mrf.mxu0
        %1133 = vmatprep.mubr.bf16.mxu0 0
        %1134 = vmatmul.mubr.bf16.gmra.mxu0 %v939
        %v1135 = vpop.f32.mrf.mxu0
        %v1136 = vadd.f32 %v735, %v1135
        %v1137 = vpop.f32.mrf.mxu0
        %v1138 = vpop.f32.mrf.mxu0
        %v1139 = vadd.f32 %v735, %v1138
        %v1140 = vpop.f32.mrf.mxu0
        %1141 = vmatprep.mubr.bf16.mxu0 0
        %1142 = vmatmul.mubr.bf16.gmra.mxu0 %v940
        %v1143 = vpop.f32.mrf.mxu0
        %v1144 = vadd.f32 %v735, %v1143
        %v1145 = vpop.f32.mrf.mxu0
        %v1146 = vpop.f32.mrf.mxu0
        %v1147 = vadd.f32 %v735, %v1146
        %v1148 = vpop.f32.mrf.mxu0
        %1149 = vmatprep.mubr.bf16.mxu0 0
        %1150 = vmatmul.mubr.bf16.gmra.mxu0 %v941
        %v1151 = vpop.f32.mrf.mxu0
        %v1152 = vadd.f32 %v735, %v1151
        %v1153 = vpop.f32.mrf.mxu0
        %v1154 = vpop.f32.mrf.mxu0
        %v1155 = vadd.f32 %v735, %v1154
        %v1156 = vpop.f32.mrf.mxu0
        %1157 = vmatprep.mubr.bf16.mxu0 0
        %1158 = vmatmul.mubr.bf16.gmra.mxu0 %v942
        %v1159 = vpop.f32.mrf.mxu0
        %v1160 = vadd.f32 %v735, %v1159
        %v1161 = vpop.f32.mrf.mxu0
        %v1162 = vpop.f32.mrf.mxu0
        %v1163 = vadd.f32 %v735, %v1162
        %v1164 = vpop.f32.mrf.mxu0
        %1165 = vmatprep.mubr.bf16.mxu0 0
        %1166 = vmatmul.mubr.bf16.gmra.mxu0 %v943
        %v1167 = vpop.f32.mrf.mxu0
        %v1168 = vadd.f32 %v735, %v1167
        %v1169 = vpop.f32.mrf.mxu0
        %v1170 = vpop.f32.mrf.mxu0
        %v1171 = vadd.f32 %v735, %v1170
        %v1172 = vpop.f32.mrf.mxu0
        %1173 = vmatprep.mubr.bf16.mxu0 0
        %1174 = vmatmul.mubr.bf16.gmra.mxu0 %v944
        %v1175 = vpop.f32.mrf.mxu0
        %v1176 = vadd.f32 %v735, %v1175
        %v1177 = vpop.f32.mrf.mxu0
        %v1178 = vpop.f32.mrf.mxu0
        %v1179 = vadd.f32 %v735, %v1178
        %v1180 = vpop.f32.mrf.mxu0
        %1181 = vmatprep.mubr.bf16.mxu0 0
        %1182 = vmatmul.mubr.bf16.gmra.mxu0 %v945
        %v1183 = vpop.f32.mrf.mxu0
        %v1184 = vadd.f32 %v735, %v1183
        %v1185 = vpop.f32.mrf.mxu0
        %v1186 = vpop.f32.mrf.mxu0
        %v1187 = vadd.f32 %v735, %v1186
        %v1188 = vpop.f32.mrf.mxu0
        %1189 = vmatprep.mubr.bf16.mxu0 0
        %1190 = vmatmul.mubr.bf16.gmra.mxu0 %v946
        %v1191 = vpop.f32.mrf.mxu0
        %v1192 = vadd.f32 %v735, %v1191
        %v1193 = vpop.f32.mrf.mxu0
        %v1194 = vpop.f32.mrf.mxu0
        %v1195 = vadd.f32 %v735, %v1194
        %v1196 = vpop.f32.mrf.mxu0
        %1197 = vmatprep.mubr.bf16.mxu0 0
        %1198 = vmatmul.mubr.bf16.gmra.mxu0 %v947
        %v1199 = vpop.f32.mrf.mxu0
        %v1200 = vadd.f32 %v735, %v1199
        %v1201 = vpop.f32.mrf.mxu0
        %v1202 = vpop.f32.mrf.mxu0
        %v1203 = vadd.f32 %v735, %v1202
        %v1204 = vpop.f32.mrf.mxu0
        %1205 = vmatprep.mubr.bf16.mxu0 0
        %1206 = vmatmul.mubr.bf16.gmra.mxu0 %v948
        %v1207 = vpop.f32.mrf.mxu0
        %v1208 = vadd.f32 %v735, %v1207
        %v1209 = vpop.f32.mrf.mxu0
        %v1210 = vpop.f32.mrf.mxu0
        %v1211 = vadd.f32 %v735, %v1210
        %v1212 = vpop.f32.mrf.mxu0
        %1213 = vmatprep.mubr.bf16.mxu0 0
        %1214 = vmatmul.mubr.bf16.gmra.mxu0 %v949
        %v1215 = vpop.f32.mrf.mxu0
        %v1216 = vadd.f32 %v735, %v1215
        %v1217 = vpop.f32.mrf.mxu0
        %v1218 = vpop.f32.mrf.mxu0
        %v1219 = vadd.f32 %v735, %v1218
        %v1220 = vpop.f32.mrf.mxu0
        %1221 = vmatprep.mubr.bf16.mxu0 0
        %1222 = vmatmul.mubr.bf16.gmra.mxu0 %v950
        %v1223 = vpop.f32.mrf.mxu0
        %v1224 = vadd.f32 %v735, %v1223
        %v1225 = vpop.f32.mrf.mxu0
        %v1226 = vpop.f32.mrf.mxu0
        %v1227 = vadd.f32 %v735, %v1226
        %v1228 = vpop.f32.mrf.mxu0
        %1229 = vmatprep.mubr.bf16.mxu0 0
        %1230 = vmatmul.mubr.bf16.gmra.mxu0 %v951
        %v1231 = vpop.f32.mrf.mxu0
        %v1232 = vadd.f32 %v735, %v1231
        %v1233 = vpop.f32.mrf.mxu0
        %v1234 = vpop.f32.mrf.mxu0
        %v1235 = vadd.f32 %v735, %v1234
        %v1236 = vpop.f32.mrf.mxu0
        %1237 = vmatprep.mubr.bf16.mxu0 0
        %1238 = vmatmul.mubr.bf16.gmra.mxu0 %v952
        %v1239 = vpop.f32.mrf.mxu0
        %v1240 = vadd.f32 %v735, %v1239
        %v1241 = vpop.f32.mrf.mxu0
        %v1242 = vpop.f32.mrf.mxu0
        %v1243 = vadd.f32 %v735, %v1242
        %v1244 = vpop.f32.mrf.mxu0
        %1245 = vmatprep.mubr.bf16.mxu0 0
        %1246 = vmatmul.mubr.bf16.gmra.mxu0 %v953
        %v1247 = vpop.f32.mrf.mxu0
        %v1248 = vadd.f32 %v735, %v1247
        %v1249 = vpop.f32.mrf.mxu0
        %v1250 = vpop.f32.mrf.mxu0
        %v1251 = vadd.f32 %v735, %v1250
        %v1252 = vpop.f32.mrf.mxu0
        %1253 = vmatprep.mubr.bf16.mxu0 0
        %1254 = vmatmul.mubr.bf16.gmra.mxu0 %v954
        %v1255 = vpop.f32.mrf.mxu0
        %v1256 = vadd.f32 %v735, %v1255
        %v1257 = vpop.f32.mrf.mxu0
        %v1258 = vpop.f32.mrf.mxu0
        %v1259 = vadd.f32 %v735, %v1258
        %v1260 = vpop.f32.mrf.mxu0
        %1261 = vmatprep.mubr.bf16.mxu0 0
        %1262 = vmatmul.mubr.bf16.gmra.mxu0 %v955
        %v1263 = vpop.f32.mrf.mxu0
        %v1264 = vadd.f32 %v735, %v1263
        %v1265 = vpop.f32.mrf.mxu0
        %v1266 = vpop.f32.mrf.mxu0
        %v1267 = vadd.f32 %v735, %v1266
        %v1268 = vpop.f32.mrf.mxu0
        %1269 = vmatprep.mubr.bf16.mxu0 0
        %1270 = vmatmul.mubr.bf16.gmra.mxu0 %v956
        %v1271 = vpop.f32.mrf.mxu0
        %v1272 = vadd.f32 %v735, %v1271
        %v1273 = vpop.f32.mrf.mxu0
        %v1274 = vpop.f32.mrf.mxu0
        %v1275 = vadd.f32 %v735, %v1274
        %v1276 = vpop.f32.mrf.mxu0
        %1277 = vmatprep.mubr.bf16.mxu0 0
        %1278 = vmatmul.mubr.bf16.gmra.mxu0 %v957
        %v1279 = vpop.f32.mrf.mxu0
        %v1280 = vadd.f32 %v735, %v1279
        %v1281 = vpop.f32.mrf.mxu0
        %v1282 = vpop.f32.mrf.mxu0
        %v1283 = vadd.f32 %v735, %v1282
        %v1284 = vpop.f32.mrf.mxu0
        %1285 = vmatprep.mubr.bf16.mxu0 0
        %1286 = vmatmul.mubr.bf16.gmra.mxu0 %v958
        %v1287 = vpop.f32.mrf.mxu0
        %v1288 = vadd.f32 %v735, %v1287
        %v1289 = vpop.f32.mrf.mxu0
        %v1290 = vpop.f32.mrf.mxu0
        %v1291 = vadd.f32 %v735, %v1290
        %v1292 = vpop.f32.mrf.mxu0
        %1293 = vmatprep.mubr.bf16.mxu0 0
        %1294 = vmatmul.mubr.bf16.gmra.mxu0 %v959
        %v1295 = vpop.f32.mrf.mxu0
        %v1296 = vadd.f32 %v735, %v1295
        %v1297 = vpop.f32.mrf.mxu0
        %v1298 = vpop.f32.mrf.mxu0
        %v1299 = vadd.f32 %v735, %v1298
        %v1300 = vpop.f32.mrf.mxu0
        %1301 = vmatprep.mubr.bf16.mxu0 0
        %1302 = vmatmul.mubr.bf16.gmra.mxu0 %v960
        %v1303 = vpop.f32.mrf.mxu0
        %v1304 = vadd.f32 %v735, %v1303
        %v1305 = vpop.f32.mrf.mxu0
        %v1306 = vpop.f32.mrf.mxu0
        %v1307 = vadd.f32 %v735, %v1306
        %v1308 = vpop.f32.mrf.mxu0
        %1309 = vmatprep.mubr.bf16.mxu0 0
        %1310 = vmatmul.mubr.bf16.gmra.mxu0 %v961
        %v1311 = vpop.f32.mrf.mxu0
        %v1312 = vadd.f32 %v735, %v1311
        %v1313 = vpop.f32.mrf.mxu0
        %v1314 = vpop.f32.mrf.mxu0
        %v1315 = vadd.f32 %v735, %v1314
        %v1316 = vpop.f32.mrf.mxu0
        %1317 = vmatprep.mubr.bf16.mxu0 0
        %1318 = vmatmul.mubr.bf16.gmra.mxu0 %v962
        %v1319 = vpop.f32.mrf.mxu0
        %v1320 = vadd.f32 %v735, %v1319
        %v1321 = vpop.f32.mrf.mxu0
        %v1322 = vpop.f32.mrf.mxu0
        %v1323 = vadd.f32 %v735, %v1322
        %v1324 = vpop.f32.mrf.mxu0
        %1325 = vmatprep.mubr.bf16.mxu0 0
        %1326 = vmatmul.mubr.bf16.gmra.mxu0 %v963
        %v1327 = vpop.f32.mrf.mxu0
        %v1328 = vadd.f32 %v735, %v1327
        %v1329 = vpop.f32.mrf.mxu0
        %v1330 = vpop.f32.mrf.mxu0
        %v1331 = vadd.f32 %v735, %v1330
        %v1332 = vpop.f32.mrf.mxu0
        %1333 = vmatprep.mubr.bf16.mxu0 0
        %1334 = vmatmul.mubr.bf16.gmra.mxu0 %v964
        %v1335 = vpop.f32.mrf.mxu0
        %v1336 = vadd.f32 %v735, %v1335
        %v1337 = vpop.f32.mrf.mxu0
        %v1338 = vpop.f32.mrf.mxu0
        %v1339 = vadd.f32 %v735, %v1338
        %v1340 = vpop.f32.mrf.mxu0
        %1341 = vmatprep.mubr.bf16.mxu0 0
        %1342 = vmatmul.mubr.bf16.gmra.mxu0 %v965
        %v1343 = vpop.f32.mrf.mxu0
        %v1344 = vadd.f32 %v735, %v1343
        %v1345 = vpop.f32.mrf.mxu0
        %v1346 = vpop.f32.mrf.mxu0
        %v1347 = vadd.f32 %v735, %v1346
        %v1348 = vpop.f32.mrf.mxu0
        %1349 = vmatprep.mubr.bf16.mxu0 0
        %1350 = vmatmul.mubr.bf16.gmra.mxu0 %v966
        %v1351 = vpop.f32.mrf.mxu0
        %v1352 = vadd.f32 %v735, %v1351
        %v1353 = vpop.f32.mrf.mxu0
        %v1354 = vpop.f32.mrf.mxu0
        %v1355 = vadd.f32 %v735, %v1354
        %v1356 = vpop.f32.mrf.mxu0
        %1357 = vmatprep.mubr.bf16.mxu0 0
        %1358 = vmatmul.mubr.bf16.gmra.mxu0 %v967
        %v1359 = vpop.f32.mrf.mxu0
        %v1360 = vadd.f32 %v735, %v1359
        %v1361 = vpop.f32.mrf.mxu0
        %v1362 = vpop.f32.mrf.mxu0
        %v1363 = vadd.f32 %v735, %v1362
        %v1364 = vpop.f32.mrf.mxu0
        %1365 = vmatprep.mubr.bf16.mxu0 0
        %1366 = vmatmul.mubr.bf16.gmra.mxu0 %v968
        %v1367 = vpop.f32.mrf.mxu0
        %v1368 = vadd.f32 %v735, %v1367
        %v1369 = vpop.f32.mrf.mxu0
        %v1370 = vpop.f32.mrf.mxu0
        %v1371 = vadd.f32 %v735, %v1370
        %v1372 = vpop.f32.mrf.mxu0
        %1373 = vmatprep.mubr.bf16.mxu0 0
        %1374 = vmatmul.mubr.bf16.gmra.mxu0 %v969
        %v1375 = vpop.f32.mrf.mxu0
        %v1376 = vadd.f32 %v735, %v1375
        %v1377 = vpop.f32.mrf.mxu0
        %v1378 = vpop.f32.mrf.mxu0
        %v1379 = vadd.f32 %v735, %v1378
        %v1380 = vpop.f32.mrf.mxu0
        %1381 = vmatprep.mubr.bf16.mxu0 0
        %1382 = vmatmul.mubr.bf16.gmra.mxu0 %v970
        %v1383 = vpop.f32.mrf.mxu0
        %v1384 = vadd.f32 %v735, %v1383
        %v1385 = vpop.f32.mrf.mxu0
        %v1386 = vpop.f32.mrf.mxu0
        %v1387 = vadd.f32 %v735, %v1386
        %v1388 = vpop.f32.mrf.mxu0
        %1389 = vmatprep.mubr.bf16.mxu0 0
        %1390 = vmatmul.mubr.bf16.gmra.mxu0 %v971
        %v1391 = vpop.f32.mrf.mxu0
        %v1392 = vadd.f32 %v735, %v1391
        %v1393 = vpop.f32.mrf.mxu0
        %v1394 = vpop.f32.mrf.mxu0
        %v1395 = vadd.f32 %v735, %v1394
        %v1396 = vpop.f32.mrf.mxu0
        %1397 = vmatprep.mubr.bf16.mxu0 0
        %1398 = vmatmul.mubr.bf16.gmra.mxu0 %v972
        %v1399 = vpop.f32.mrf.mxu0
        %v1400 = vadd.f32 %v735, %v1399
        %v1401 = vpop.f32.mrf.mxu0
        %v1402 = vpop.f32.mrf.mxu0
        %v1403 = vadd.f32 %v735, %v1402
        %v1404 = vpop.f32.mrf.mxu0
        %1405 = vmatprep.mubr.bf16.mxu0 0
        %1406 = vmatmul.mubr.bf16.gmra.mxu0 %v973
        %v1407 = vpop.f32.mrf.mxu0
        %v1408 = vadd.f32 %v735, %v1407
        %v1409 = vpop.f32.mrf.mxu0
        %v1410 = vpop.f32.mrf.mxu0
        %v1411 = vadd.f32 %v735, %v1410
        %v1412 = vpop.f32.mrf.mxu0
        %1413 = vmatprep.mubr.bf16.mxu0 0
        %1414 = vmatmul.mubr.bf16.gmra.mxu0 %v974
        %v1415 = vpop.f32.mrf.mxu0
        %v1416 = vadd.f32 %v735, %v1415
        %v1417 = vpop.f32.mrf.mxu0
        %v1418 = vpop.f32.mrf.mxu0
        %v1419 = vadd.f32 %v735, %v1418
        %v1420 = vpop.f32.mrf.mxu0
        %1421 = vmatprep.mubr.bf16.mxu0 0
        %1422 = vmatmul.mubr.bf16.gmra.mxu0 %v975
        %v1423 = vpop.f32.mrf.mxu0
        %v1424 = vadd.f32 %v735, %v1423
        %v1425 = vpop.f32.mrf.mxu0
        %v1426 = vpop.f32.mrf.mxu0
        %v1427 = vadd.f32 %v735, %v1426
        %v1428 = vpop.f32.mrf.mxu0
        %1429 = vmatprep.mubr.bf16.mxu0 0
        %1430 = vmatmul.mubr.bf16.gmra.mxu0 %v976
        %v1431 = vpop.f32.mrf.mxu0
        %v1432 = vadd.f32 %v735, %v1431
        %v1433 = vpop.f32.mrf.mxu0
        %v1434 = vpop.f32.mrf.mxu0
        %v1435 = vadd.f32 %v735, %v1434
        %v1436 = vpop.f32.mrf.mxu0
        %1437 = vmatprep.mubr.bf16.mxu0 0
        %1438 = vmatmul.mubr.bf16.gmra.mxu0 %v977
        %v1439 = vpop.f32.mrf.mxu0
        %v1440 = vadd.f32 %v735, %v1439
        %v1441 = vpop.f32.mrf.mxu0
        %v1442 = vpop.f32.mrf.mxu0
        %v1443 = vadd.f32 %v735, %v1442
        %v1444 = vpop.f32.mrf.mxu0
        %1445 = vmatprep.mubr.bf16.mxu0 0
        %1446 = vmatmul.mubr.bf16.gmra.mxu0 %v978
        %v1447 = vpop.f32.mrf.mxu0
        %v1448 = vadd.f32 %v735, %v1447
        %v1449 = vpop.f32.mrf.mxu0
        %v1450 = vpop.f32.mrf.mxu0
        %v1451 = vadd.f32 %v735, %v1450
        %v1452 = vpop.f32.mrf.mxu0
        %1453 = vmatprep.mubr.bf16.mxu0 0
        %1454 = vmatmul.mubr.bf16.gmra.mxu0 %v979
        %v1455 = vpop.f32.mrf.mxu0
        %v1456 = vadd.f32 %v735, %v1455
        %v1457 = vpop.f32.mrf.mxu0
        %v1458 = vpop.f32.mrf.mxu0
        %v1459 = vadd.f32 %v735, %v1458
        %v1460 = vpop.f32.mrf.mxu0
        %1461 = vmatprep.mubr.bf16.mxu0 0
        %1462 = vmatmul.mubr.bf16.gmra.mxu0 %v980
        %v1463 = vpop.f32.mrf.mxu0
        %v1464 = vadd.f32 %v735, %v1463
        %v1465 = vpop.f32.mrf.mxu0
        %v1466 = vpop.f32.mrf.mxu0
        %v1467 = vadd.f32 %v735, %v1466
        %v1468 = vpop.f32.mrf.mxu0
        %1469 = vmatprep.mubr.bf16.mxu0 0
        %1470 = vmatmul.mubr.bf16.gmra.mxu0 %v981
        %v1471 = vpop.f32.mrf.mxu0
        %v1472 = vadd.f32 %v735, %v1471
        %v1473 = vpop.f32.mrf.mxu0
        %v1474 = vpop.f32.mrf.mxu0
        %v1475 = vadd.f32 %v735, %v1474
        %v1476 = vpop.f32.mrf.mxu0
        %1477 = vmatprep.mubr.bf16.mxu0 0
        %1478 = vmatmul.mubr.bf16.gmra.mxu0 %v982
        %v1479 = vpop.f32.mrf.mxu0
        %v1480 = vadd.f32 %v735, %v1479
        %v1481 = vpop.f32.mrf.mxu0
        %v1482 = vpop.f32.mrf.mxu0
        %v1483 = vadd.f32 %v735, %v1482
        %v1484 = vpop.f32.mrf.mxu0
        %1485 = vmatprep.mubr.bf16.mxu0 0
        %1486 = vmatmul.mubr.bf16.gmra.mxu0 %v983
        %v1487 = vpop.f32.mrf.mxu0
        %v1488 = vadd.f32 %v735, %v1487
        %v1489 = vpop.f32.mrf.mxu0
        %v1490 = vpop.f32.mrf.mxu0
        %v1491 = vadd.f32 %v735, %v1490
        %v1492 = vpop.f32.mrf.mxu0
        %1493 = vmatprep.mubr.bf16.mxu0 0
        %1494 = vmatmul.mubr.bf16.gmra.mxu0 %v984
        %v1495 = vpop.f32.mrf.mxu0
        %v1496 = vadd.f32 %v735, %v1495
        %v1497 = vpop.f32.mrf.mxu0
        %v1498 = vpop.f32.mrf.mxu0
        %v1499 = vadd.f32 %v735, %v1498
        %v1500 = vpop.f32.mrf.mxu0
        %1501 = vmatprep.mubr.bf16.mxu0 0
        %1502 = vmatmul.mubr.bf16.gmra.mxu0 %v985
        %v1503 = vpop.f32.mrf.mxu0
        %v1504 = vadd.f32 %v735, %v1503
        %v1505 = vpop.f32.mrf.mxu0
        %v1506 = vpop.f32.mrf.mxu0
        %v1507 = vadd.f32 %v735, %v1506
        %v1508 = vpop.f32.mrf.mxu0
        %1509 = vmatprep.mubr.bf16.mxu0 0
        %1510 = vmatmul.mubr.bf16.gmra.mxu0 %v986
        %v1511 = vpop.f32.mrf.mxu0
        %v1512 = vadd.f32 %v735, %v1511
        %v1513 = vpop.f32.mrf.mxu0
        %v1514 = vpop.f32.mrf.mxu0
        %v1515 = vadd.f32 %v735, %v1514
        %v1516 = vpop.f32.mrf.mxu0
        %1517 = vdwg.mxu0
        %vm1518 = vcmp.gt.f32.partialorder %v1120, 0.0
        %vm1519 = vcmp.gt.f32.partialorder %v1123, 0.0
        %vm1520 = vcmp.gt.f32.partialorder %v1128, 0.0
        %vm1521 = vcmp.gt.f32.partialorder %v1131, 0.0
        %vm1522 = vcmp.gt.f32.partialorder %v1136, 0.0
        %vm1523 = vcmp.gt.f32.partialorder %v1139, 0.0
        %vm1524 = vcmp.gt.f32.partialorder %v1144, 0.0
        %vm1525 = vcmp.gt.f32.partialorder %v1147, 0.0
        %vm1526 = vcmp.gt.f32.partialorder %v1152, 0.0
        %vm1527 = vcmp.gt.f32.partialorder %v1155, 0.0
        %vm1528 = vcmp.gt.f32.partialorder %v1160, 0.0
        %vm1529 = vcmp.gt.f32.partialorder %v1163, 0.0
        %vm1530 = vcmp.gt.f32.partialorder %v1168, 0.0
        %vm1531 = vcmp.gt.f32.partialorder %v1171, 0.0
        %vm1532 = vcmp.gt.f32.partialorder %v1176, 0.0
        %vm1533 = vcmp.gt.f32.partialorder %v1179, 0.0
        %vm1534 = vcmp.gt.f32.partialorder %v1184, 0.0
        %vm1535 = vcmp.gt.f32.partialorder %v1187, 0.0
        %vm1536 = vcmp.gt.f32.partialorder %v1192, 0.0
        %vm1537 = vcmp.gt.f32.partialorder %v1195, 0.0
        %vm1538 = vcmp.gt.f32.partialorder %v1200, 0.0
        %vm1539 = vcmp.gt.f32.partialorder %v1203, 0.0
        %vm1540 = vcmp.gt.f32.partialorder %v1208, 0.0
        %vm1541 = vcmp.gt.f32.partialorder %v1211, 0.0
        %vm1542 = vcmp.gt.f32.partialorder %v1216, 0.0
        %vm1543 = vcmp.gt.f32.partialorder %v1219, 0.0
        %vm1544 = vcmp.gt.f32.partialorder %v1224, 0.0
        %vm1545 = vcmp.gt.f32.partialorder %v1227, 0.0
        %vm1546 = vcmp.gt.f32.partialorder %v1232, 0.0
        %vm1547 = vcmp.gt.f32.partialorder %v1235, 0.0
        %vm1548 = vcmp.gt.f32.partialorder %v1240, 0.0
        %vm1549 = vcmp.gt.f32.partialorder %v1243, 0.0
        %vm1550 = vcmp.gt.f32.partialorder %v1248, 0.0
        %vm1551 = vcmp.gt.f32.partialorder %v1251, 0.0
        %vm1552 = vcmp.gt.f32.partialorder %v1256, 0.0
        %vm1553 = vcmp.gt.f32.partialorder %v1259, 0.0
        %vm1554 = vcmp.gt.f32.partialorder %v1264, 0.0
        %vm1555 = vcmp.gt.f32.partialorder %v1267, 0.0
        %vm1556 = vcmp.gt.f32.partialorder %v1272, 0.0
        %vm1557 = vcmp.gt.f32.partialorder %v1275, 0.0
        %vm1558 = vcmp.gt.f32.partialorder %v1280, 0.0
        %vm1559 = vcmp.gt.f32.partialorder %v1283, 0.0
        %vm1560 = vcmp.gt.f32.partialorder %v1288, 0.0
        %vm1561 = vcmp.gt.f32.partialorder %v1291, 0.0
        %vm1562 = vcmp.gt.f32.partialorder %v1296, 0.0
        %vm1563 = vcmp.gt.f32.partialorder %v1299, 0.0
        %vm1564 = vcmp.gt.f32.partialorder %v1304, 0.0
        %vm1565 = vcmp.gt.f32.partialorder %v1307, 0.0
        %vm1566 = vcmp.gt.f32.partialorder %v1312, 0.0
        %vm1567 = vcmp.gt.f32.partialorder %v1315, 0.0
        %vm1568 = vcmp.gt.f32.partialorder %v1320, 0.0
        %vm1569 = vcmp.gt.f32.partialorder %v1323, 0.0
        %vm1570 = vcmp.gt.f32.partialorder %v1328, 0.0
        %vm1571 = vcmp.gt.f32.partialorder %v1331, 0.0
        %vm1572 = vcmp.gt.f32.partialorder %v1336, 0.0
        %vm1573 = vcmp.gt.f32.partialorder %v1339, 0.0
        %vm1574 = vcmp.gt.f32.partialorder %v1344, 0.0
        %vm1575 = vcmp.gt.f32.partialorder %v1347, 0.0
        %vm1576 = vcmp.gt.f32.partialorder %v1352, 0.0
        %vm1577 = vcmp.gt.f32.partialorder %v1355, 0.0
        %vm1578 = vcmp.gt.f32.partialorder %v1360, 0.0
        %vm1579 = vcmp.gt.f32.partialorder %v1363, 0.0
        %vm1580 = vcmp.gt.f32.partialorder %v1368, 0.0
        %vm1581 = vcmp.gt.f32.partialorder %v1371, 0.0
        %vm1582 = vcmp.gt.f32.partialorder %v1376, 0.0
        %vm1583 = vcmp.gt.f32.partialorder %v1379, 0.0
        %vm1584 = vcmp.gt.f32.partialorder %v1384, 0.0
        %vm1585 = vcmp.gt.f32.partialorder %v1387, 0.0
        %vm1586 = vcmp.gt.f32.partialorder %v1392, 0.0
        %vm1587 = vcmp.gt.f32.partialorder %v1395, 0.0
        %vm1588 = vcmp.gt.f32.partialorder %v1400, 0.0
        %vm1589 = vcmp.gt.f32.partialorder %v1403, 0.0
        %vm1590 = vcmp.gt.f32.partialorder %v1408, 0.0
        %vm1591 = vcmp.gt.f32.partialorder %v1411, 0.0
        %vm1592 = vcmp.gt.f32.partialorder %v1416, 0.0
        %vm1593 = vcmp.gt.f32.partialorder %v1419, 0.0
        %vm1594 = vcmp.gt.f32.partialorder %v1424, 0.0
        %vm1595 = vcmp.gt.f32.partialorder %v1427, 0.0
        %vm1596 = vcmp.gt.f32.partialorder %v1432, 0.0
        %vm1597 = vcmp.gt.f32.partialorder %v1435, 0.0
        %vm1598 = vcmp.gt.f32.partialorder %v1440, 0.0
        %vm1599 = vcmp.gt.f32.partialorder %v1443, 0.0
        %vm1600 = vcmp.gt.f32.partialorder %v1448, 0.0
        %vm1601 = vcmp.gt.f32.partialorder %v1451, 0.0
        %vm1602 = vcmp.gt.f32.partialorder %v1456, 0.0
        %vm1603 = vcmp.gt.f32.partialorder %v1459, 0.0
        %vm1604 = vcmp.gt.f32.partialorder %v1464, 0.0
        %vm1605 = vcmp.gt.f32.partialorder %v1467, 0.0
        %vm1606 = vcmp.gt.f32.partialorder %v1472, 0.0
        %vm1607 = vcmp.gt.f32.partialorder %v1475, 0.0
        %vm1608 = vcmp.gt.f32.partialorder %v1480, 0.0
        %vm1609 = vcmp.gt.f32.partialorder %v1483, 0.0
        %vm1610 = vcmp.gt.f32.partialorder %v1488, 0.0
        %vm1611 = vcmp.gt.f32.partialorder %v1491, 0.0
        %vm1612 = vcmp.gt.f32.partialorder %v1496, 0.0
        %vm1613 = vcmp.gt.f32.partialorder %v1499, 0.0
        %vm1614 = vcmp.gt.f32.partialorder %v1504, 0.0
        %vm1615 = vcmp.gt.f32.partialorder %v1507, 0.0
        %vm1616 = vcmp.gt.f32.partialorder %v1512, 0.0
        %vm1617 = vcmp.gt.f32.partialorder %v1515, 0.0
        %v1618 = vmul.f32 %v1120, 0.01
        %v1619 = vmul.f32 %v1123, 0.01
        %v1620 = vmul.f32 %v1128, 0.01
        %v1621 = vmul.f32 %v1131, 0.01
        %v1622 = vmul.f32 %v1136, 0.01
        %v1623 = vmul.f32 %v1139, 0.01
        %v1624 = vmul.f32 %v1144, 0.01
        %v1625 = vmul.f32 %v1147, 0.01
        %v1626 = vmul.f32 %v1152, 0.01
        %v1627 = vmul.f32 %v1155, 0.01
        %v1628 = vmul.f32 %v1160, 0.01
        %v1629 = vmul.f32 %v1163, 0.01
        %v1630 = vmul.f32 %v1168, 0.01
        %v1631 = vmul.f32 %v1171, 0.01
        %v1632 = vmul.f32 %v1176, 0.01
        %v1633 = vmul.f32 %v1179, 0.01
        %v1634 = vmul.f32 %v1184, 0.01
        %v1635 = vmul.f32 %v1187, 0.01
        %v1636 = vmul.f32 %v1192, 0.01
        %v1637 = vmul.f32 %v1195, 0.01
        %v1638 = vmul.f32 %v1200, 0.01
        %v1639 = vmul.f32 %v1203, 0.01
        %v1640 = vmul.f32 %v1208, 0.01
        %v1641 = vmul.f32 %v1211, 0.01
        %v1642 = vmul.f32 %v1216, 0.01
        %v1643 = vmul.f32 %v1219, 0.01
        %v1644 = vmul.f32 %v1224, 0.01
        %v1645 = vmul.f32 %v1227, 0.01
        %v1646 = vmul.f32 %v1232, 0.01
        %v1647 = vmul.f32 %v1235, 0.01
        %v1648 = vmul.f32 %v1240, 0.01
        %v1649 = vmul.f32 %v1243, 0.01
        %v1650 = vmul.f32 %v1248, 0.01
        %v1651 = vmul.f32 %v1251, 0.01
        %v1652 = vmul.f32 %v1256, 0.01
        %v1653 = vmul.f32 %v1259, 0.01
        %v1654 = vmul.f32 %v1264, 0.01
        %v1655 = vmul.f32 %v1267, 0.01
        %v1656 = vmul.f32 %v1272, 0.01
        %v1657 = vmul.f32 %v1275, 0.01
        %v1658 = vmul.f32 %v1280, 0.01
        %v1659 = vmul.f32 %v1283, 0.01
        %v1660 = vmul.f32 %v1288, 0.01
        %v1661 = vmul.f32 %v1291, 0.01
        %v1662 = vmul.f32 %v1296, 0.01
        %v1663 = vmul.f32 %v1299, 0.01
        %v1664 = vmul.f32 %v1304, 0.01
        %v1665 = vmul.f32 %v1307, 0.01
        %v1666 = vmul.f32 %v1312, 0.01
        %v1667 = vmul.f32 %v1315, 0.01
        %v1668 = vmul.f32 %v1320, 0.01
        %v1669 = vmul.f32 %v1323, 0.01
        %v1670 = vmul.f32 %v1328, 0.01
        %v1671 = vmul.f32 %v1331, 0.01
        %v1672 = vmul.f32 %v1336, 0.01
        %v1673 = vmul.f32 %v1339, 0.01
        %v1674 = vmul.f32 %v1344, 0.01
        %v1675 = vmul.f32 %v1347, 0.01
        %v1676 = vmul.f32 %v1352, 0.01
        %v1677 = vmul.f32 %v1355, 0.01
        %v1678 = vmul.f32 %v1360, 0.01
        %v1679 = vmul.f32 %v1363, 0.01
        %v1680 = vmul.f32 %v1368, 0.01
        %v1681 = vmul.f32 %v1371, 0.01
        %v1682 = vmul.f32 %v1376, 0.01
        %v1683 = vmul.f32 %v1379, 0.01
        %v1684 = vmul.f32 %v1384, 0.01
        %v1685 = vmul.f32 %v1387, 0.01
        %v1686 = vmul.f32 %v1392, 0.01
        %v1687 = vmul.f32 %v1395, 0.01
        %v1688 = vmul.f32 %v1400, 0.01
        %v1689 = vmul.f32 %v1403, 0.01
        %v1690 = vmul.f32 %v1408, 0.01
        %v1691 = vmul.f32 %v1411, 0.01
        %v1692 = vmul.f32 %v1416, 0.01
        %v1693 = vmul.f32 %v1419, 0.01
        %v1694 = vmul.f32 %v1424, 0.01
        %v1695 = vmul.f32 %v1427, 0.01
        %v1696 = vmul.f32 %v1432, 0.01
        %v1697 = vmul.f32 %v1435, 0.01
        %v1698 = vmul.f32 %v1440, 0.01
        %v1699 = vmul.f32 %v1443, 0.01
        %v1700 = vmul.f32 %v1448, 0.01
        %v1701 = vmul.f32 %v1451, 0.01
        %v1702 = vmul.f32 %v1456, 0.01
        %v1703 = vmul.f32 %v1459, 0.01
        %v1704 = vmul.f32 %v1464, 0.01
        %v1705 = vmul.f32 %v1467, 0.01
        %v1706 = vmul.f32 %v1472, 0.01
        %v1707 = vmul.f32 %v1475, 0.01
        %v1708 = vmul.f32 %v1480, 0.01
        %v1709 = vmul.f32 %v1483, 0.01
        %v1710 = vmul.f32 %v1488, 0.01
        %v1711 = vmul.f32 %v1491, 0.01
        %v1712 = vmul.f32 %v1496, 0.01
        %v1713 = vmul.f32 %v1499, 0.01
        %v1714 = vmul.f32 %v1504, 0.01
        %v1715 = vmul.f32 %v1507, 0.01
        %v1716 = vmul.f32 %v1512, 0.01
        %v1717 = vmul.f32 %v1515, 0.01
        %v1718 = vsel %vm1518, %v1120, %v1618
        %v1719 = vsel %vm1519, %v1123, %v1619
        %v1720 = vsel %vm1520, %v1128, %v1620
        %v1721 = vsel %vm1521, %v1131, %v1621
        %v1722 = vsel %vm1522, %v1136, %v1622
        %v1723 = vsel %vm1523, %v1139, %v1623
        %v1724 = vsel %vm1524, %v1144, %v1624
        %v1725 = vsel %vm1525, %v1147, %v1625
        %v1726 = vsel %vm1526, %v1152, %v1626
        %v1727 = vsel %vm1527, %v1155, %v1627
        %v1728 = vsel %vm1528, %v1160, %v1628
        %v1729 = vsel %vm1529, %v1163, %v1629
        %v1730 = vsel %vm1530, %v1168, %v1630
        %v1731 = vsel %vm1531, %v1171, %v1631
        %v1732 = vsel %vm1532, %v1176, %v1632
        %v1733 = vsel %vm1533, %v1179, %v1633
        %v1734 = vsel %vm1534, %v1184, %v1634
        %v1735 = vsel %vm1535, %v1187, %v1635
        %v1736 = vsel %vm1536, %v1192, %v1636
        %v1737 = vsel %vm1537, %v1195, %v1637
        %v1738 = vsel %vm1538, %v1200, %v1638
        %v1739 = vsel %vm1539, %v1203, %v1639
        %v1740 = vsel %vm1540, %v1208, %v1640
        %v1741 = vsel %vm1541, %v1211, %v1641
        %v1742 = vsel %vm1542, %v1216, %v1642
        %v1743 = vsel %vm1543, %v1219, %v1643
        %v1744 = vsel %vm1544, %v1224, %v1644
        %v1745 = vsel %vm1545, %v1227, %v1645
        %v1746 = vsel %vm1546, %v1232, %v1646
        %v1747 = vsel %vm1547, %v1235, %v1647
        %v1748 = vsel %vm1548, %v1240, %v1648
        %v1749 = vsel %vm1549, %v1243, %v1649
        %v1750 = vsel %vm1550, %v1248, %v1650
        %v1751 = vsel %vm1551, %v1251, %v1651
        %v1752 = vsel %vm1552, %v1256, %v1652
        %v1753 = vsel %vm1553, %v1259, %v1653
        %v1754 = vsel %vm1554, %v1264, %v1654
        %v1755 = vsel %vm1555, %v1267, %v1655
        %v1756 = vsel %vm1556, %v1272, %v1656
        %v1757 = vsel %vm1557, %v1275, %v1657
        %v1758 = vsel %vm1558, %v1280, %v1658
        %v1759 = vsel %vm1559, %v1283, %v1659
        %v1760 = vsel %vm1560, %v1288, %v1660
        %v1761 = vsel %vm1561, %v1291, %v1661
        %v1762 = vsel %vm1562, %v1296, %v1662
        %v1763 = vsel %vm1563, %v1299, %v1663
        %v1764 = vsel %vm1564, %v1304, %v1664
        %v1765 = vsel %vm1565, %v1307, %v1665
        %v1766 = vsel %vm1566, %v1312, %v1666
        %v1767 = vsel %vm1567, %v1315, %v1667
        %v1768 = vsel %vm1568, %v1320, %v1668
        %v1769 = vsel %vm1569, %v1323, %v1669
        %v1770 = vsel %vm1570, %v1328, %v1670
        %v1771 = vsel %vm1571, %v1331, %v1671
        %v1772 = vsel %vm1572, %v1336, %v1672
        %v1773 = vsel %vm1573, %v1339, %v1673
        %v1774 = vsel %vm1574, %v1344, %v1674
        %v1775 = vsel %vm1575, %v1347, %v1675
        %v1776 = vsel %vm1576, %v1352, %v1676
        %v1777 = vsel %vm1577, %v1355, %v1677
        %v1778 = vsel %vm1578, %v1360, %v1678
        %v1779 = vsel %vm1579, %v1363, %v1679
        %v1780 = vsel %vm1580, %v1368, %v1680
        %v1781 = vsel %vm1581, %v1371, %v1681
        %v1782 = vsel %vm1582, %v1376, %v1682
        %v1783 = vsel %vm1583, %v1379, %v1683
        %v1784 = vsel %vm1584, %v1384, %v1684
        %v1785 = vsel %vm1585, %v1387, %v1685
        %v1786 = vsel %vm1586, %v1392, %v1686
        %v1787 = vsel %vm1587, %v1395, %v1687
        %v1788 = vsel %vm1588, %v1400, %v1688
        %v1789 = vsel %vm1589, %v1403, %v1689
        %v1790 = vsel %vm1590, %v1408, %v1690
        %v1791 = vsel %vm1591, %v1411, %v1691
        %v1792 = vsel %vm1592, %v1416, %v1692
        %v1793 = vsel %vm1593, %v1419, %v1693
        %v1794 = vsel %vm1594, %v1424, %v1694
        %v1795 = vsel %vm1595, %v1427, %v1695
        %v1796 = vsel %vm1596, %v1432, %v1696
        %v1797 = vsel %vm1597, %v1435, %v1697
        %v1798 = vsel %vm1598, %v1440, %v1698
        %v1799 = vsel %vm1599, %v1443, %v1699
        %v1800 = vsel %vm1600, %v1448, %v1700
        %v1801 = vsel %vm1601, %v1451, %v1701
        %v1802 = vsel %vm1602, %v1456, %v1702
        %v1803 = vsel %vm1603, %v1459, %v1703
        %v1804 = vsel %vm1604, %v1464, %v1704
        %v1805 = vsel %vm1605, %v1467, %v1705
        %v1806 = vsel %vm1606, %v1472, %v1706
        %v1807 = vsel %vm1607, %v1475, %v1707
        %v1808 = vsel %vm1608, %v1480, %v1708
        %v1809 = vsel %vm1609, %v1483, %v1709
        %v1810 = vsel %vm1610, %v1488, %v1710
        %v1811 = vsel %vm1611, %v1491, %v1711
        %v1812 = vsel %vm1612, %v1496, %v1712
        %v1813 = vsel %vm1613, %v1499, %v1713
        %v1814 = vsel %vm1614, %v1504, %v1714
        %v1815 = vsel %vm1615, %v1507, %v1715
        %v1816 = vsel %vm1616, %v1512, %v1716
        %v1817 = vsel %vm1617, %v1515, %v1717
        %v1818 = vadd.f32 %v1718, %v1743
        %v1819 = vadd.f32 %v1818, %v1768
        %v1820 = vadd.f32 %v1819, %v1793
        %v1821 = vadd.f32 %v1719, %v1744
        %v1822 = vadd.f32 %v1821, %v1769
        %v1823 = vadd.f32 %v1822, %v1794
        %v1824 = vadd.f32 %v1720, %v1745
        %v1825 = vadd.f32 %v1824, %v1770
        %v1826 = vadd.f32 %v1825, %v1795
        %v1827 = vadd.f32 %v1721, %v1746
        %v1828 = vadd.f32 %v1827, %v1771
        %v1829 = vadd.f32 %v1828, %v1796
        %v1830 = vadd.f32 %v1722, %v1747
        %v1831 = vadd.f32 %v1830, %v1772
        %v1832 = vadd.f32 %v1831, %v1797
        %v1833 = vadd.f32 %v1723, %v1748
        %v1834 = vadd.f32 %v1833, %v1773
        %v1835 = vadd.f32 %v1834, %v1798
        %v1836 = vadd.f32 %v1724, %v1749
        %v1837 = vadd.f32 %v1836, %v1774
        %v1838 = vadd.f32 %v1837, %v1799
        %v1839 = vadd.f32 %v1725, %v1750
        %v1840 = vadd.f32 %v1839, %v1775
        %v1841 = vadd.f32 %v1840, %v1800
        %v1842 = vadd.f32 %v1726, %v1751
        %v1843 = vadd.f32 %v1842, %v1776
        %v1844 = vadd.f32 %v1843, %v1801
        %v1845 = vadd.f32 %v1727, %v1752
        %v1846 = vadd.f32 %v1845, %v1777
        %v1847 = vadd.f32 %v1846, %v1802
        %v1848 = vadd.f32 %v1728, %v1753
        %v1849 = vadd.f32 %v1848, %v1778
        %v1850 = vadd.f32 %v1849, %v1803
        %v1851 = vadd.f32 %v1729, %v1754
        %v1852 = vadd.f32 %v1851, %v1779
        %v1853 = vadd.f32 %v1852, %v1804
        %v1854 = vadd.f32 %v1730, %v1755
        %v1855 = vadd.f32 %v1854, %v1780
        %v1856 = vadd.f32 %v1855, %v1805
        %v1857 = vadd.f32 %v1731, %v1756
        %v1858 = vadd.f32 %v1857, %v1781
        %v1859 = vadd.f32 %v1858, %v1806
        %v1860 = vadd.f32 %v1732, %v1757
        %v1861 = vadd.f32 %v1860, %v1782
        %v1862 = vadd.f32 %v1861, %v1807
        %v1863 = vadd.f32 %v1733, %v1758
        %v1864 = vadd.f32 %v1863, %v1783
        %v1865 = vadd.f32 %v1864, %v1808
        %v1866 = vadd.f32 %v1734, %v1759
        %v1867 = vadd.f32 %v1866, %v1784
        %v1868 = vadd.f32 %v1867, %v1809
        %v1869 = vadd.f32 %v1735, %v1760
        %v1870 = vadd.f32 %v1869, %v1785
        %v1871 = vadd.f32 %v1870, %v1810
        %v1872 = vadd.f32 %v1736, %v1761
        %v1873 = vadd.f32 %v1872, %v1786
        %v1874 = vadd.f32 %v1873, %v1811
        %v1875 = vadd.f32 %v1737, %v1762
        %v1876 = vadd.f32 %v1875, %v1787
        %v1877 = vadd.f32 %v1876, %v1812
        %v1878 = vadd.f32 %v1738, %v1763
        %v1879 = vadd.f32 %v1878, %v1788
        %v1880 = vadd.f32 %v1879, %v1813
        %v1881 = vadd.f32 %v1739, %v1764
        %v1882 = vadd.f32 %v1881, %v1789
        %v1883 = vadd.f32 %v1882, %v1814
        %v1884 = vadd.f32 %v1740, %v1765
        %v1885 = vadd.f32 %v1884, %v1790
        %v1886 = vadd.f32 %v1885, %v1815
        %v1887 = vadd.f32 %v1741, %v1766
        %v1888 = vadd.f32 %v1887, %v1791
        %v1889 = vadd.f32 %v1888, %v1816
        %v1890 = vadd.f32 %v1742, %v1767
        %v1891 = vadd.f32 %v1890, %v1792
        %v1892 = vadd.f32 %v1891, %v1817
        %v1893 = vrcp.pop 4.0
        %v1894 = vmul.f32 %v1820, %v1893
        %v1895 = vmul.f32 %v1823, %v1893
        %v1896 = vmul.f32 %v1826, %v1893
        %v1897 = vmul.f32 %v1829, %v1893
        %v1898 = vmul.f32 %v1832, %v1893
        %v1899 = vmul.f32 %v1835, %v1893
        %v1900 = vmul.f32 %v1838, %v1893
        %v1901 = vmul.f32 %v1841, %v1893
        %v1902 = vmul.f32 %v1844, %v1893
        %v1903 = vmul.f32 %v1847, %v1893
        %v1904 = vmul.f32 %v1850, %v1893
        %v1905 = vmul.f32 %v1853, %v1893
        %v1906 = vmul.f32 %v1856, %v1893
        %v1907 = vmul.f32 %v1859, %v1893
        %v1908 = vmul.f32 %v1862, %v1893
        %v1909 = vmul.f32 %v1865, %v1893
        %v1910 = vmul.f32 %v1868, %v1893
        %v1911 = vmul.f32 %v1871, %v1893
        %v1912 = vmul.f32 %v1874, %v1893
        %v1913 = vmul.f32 %v1877, %v1893
        %v1914 = vmul.f32 %v1880, %v1893
        %v1915 = vmul.f32 %v1883, %v1893
        %v1916 = vmul.f32 %v1886, %v1893
        %v1917 = vmul.f32 %v1889, %v1893
        %v1918 = vmul.f32 %v1892, %v1893
        %v1919 = vpack.c.bf16 %v1895, %v1894
        %v1920 = vpack.c.bf16 %v1897, %v1896
        %v1921 = vpack.c.bf16 %v1899, %v1898
        %v1922 = vpack.c.bf16 %v1901, %v1900
        %v1923 = vpack.c.bf16 %v1903, %v1902
        %v1924 = vpack.c.bf16 %v1905, %v1904
        %v1925 = vpack.c.bf16 %v1907, %v1906
        %v1926 = vpack.c.bf16 %v1909, %v1908
        %v1927 = vpack.c.bf16 %v1911, %v1910
        %v1928 = vpack.c.bf16 %v1913, %v1912
        %v1929 = vpack.c.bf16 %v1915, %v1914
        %v1930 = vpack.c.bf16 %v1917, %v1916
        %v1931 = vpack.c.bf16 %v1918, %v1918
        %v1945 = vunpack.c.l.b16 %v1919
        %v1946 = vunpack.c.h.b16 %v1919
        %v1947 = vunpack.c.l.b16 %v1920
        %v1948 = vunpack.c.h.b16 %v1920
        %v1949 = vunpack.c.l.b16 %v1921
        %v1950 = vunpack.c.h.b16 %v1921
        %v1951 = vunpack.c.l.b16 %v1922
        %v1952 = vunpack.c.h.b16 %v1922
        %v1953 = vunpack.c.l.b16 %v1923
        %v1954 = vunpack.c.h.b16 %v1923
        %v1955 = vunpack.c.l.b16 %v1924
        %v1956 = vunpack.c.h.b16 %v1924
        %v1957 = vunpack.c.l.b16 %v1925
        %v1958 = vunpack.c.h.b16 %v1925
        %v1959 = vunpack.c.l.b16 %v1926
        %v1960 = vunpack.c.h.b16 %v1926
        %v1961 = vunpack.c.l.b16 %v1927
        %v1962 = vunpack.c.h.b16 %v1927
        %v1963 = vunpack.c.l.b16 %v1928
        %v1964 = vunpack.c.h.b16 %v1928
        %v1965 = vunpack.c.l.b16 %v1929
        %v1966 = vunpack.c.h.b16 %v1929
        %v1967 = vunpack.c.l.b16 %v1930
        %v1968 = vunpack.c.h.b16 %v1930
        %v1969 = vunpack.c.l.b16 %v1931
        %v1970 = vpack.c.b16 %v1945, %v1945
        %v1971 = vpack.c.b16 %v1946, %v1946
        %v1972 = vpack.c.b16 %v1947, %v1947
        %v1973 = vpack.c.b16 %v1948, %v1948
        %v1974 = vpack.c.b16 %v1949, %v1949
        %v1975 = vpack.c.b16 %v1950, %v1950
        %v1976 = vpack.c.b16 %v1951, %v1951
        %v1977 = vpack.c.b16 %v1952, %v1952
        %v1978 = vpack.c.b16 %v1953, %v1953
        %v1979 = vpack.c.b16 %v1954, %v1954
        %v1980 = vpack.c.b16 %v1955, %v1955
        %v1981 = vpack.c.b16 %v1956, %v1956
        %v1982 = vpack.c.b16 %v1957, %v1957
        %v1983 = vpack.c.b16 %v1958, %v1958
        %v1984 = vpack.c.b16 %v1959, %v1959
        %v1985 = vpack.c.b16 %v1960, %v1960
        %v1986 = vpack.c.b16 %v1961, %v1961
        %v1987 = vpack.c.b16 %v1962, %v1962
        %v1988 = vpack.c.b16 %v1963, %v1963
        %v1989 = vpack.c.b16 %v1964, %v1964
        %v1990 = vpack.c.b16 %v1965, %v1965
        %v1991 = vpack.c.b16 %v1966, %v1966
        %v1992 = vpack.c.b16 %v1967, %v1967
        %v1993 = vpack.c.b16 %v1968, %v1968
        %v1994 = vpack.c.b16 %v1969, %v1969
        %2020 = vst [vmem:[%s611] sm:$0xf] %v1970
        %2021 = vst [vmem:[%s611 + $0x4] sm:$0xf] %v1971
        %2022 = vst [vmem:[%s611 + $0x8] sm:$0xf] %v1972
        %2023 = vst [vmem:[%s611 + $0xc] sm:$0xf] %v1973
        %2024 = vst [vmem:[%s611 + $0x10] sm:$0xf] %v1974
        %2025 = vst [vmem:[%s611 + $0x14] sm:$0xf] %v1975
        %2026 = vst [vmem:[%s611 + $0x18] sm:$0xf] %v1976
        %2027 = vst [vmem:[%s611 + $0x1c] sm:$0xf] %v1977
        %2028 = vst [vmem:[%s611 + $0x20] sm:$0xf] %v1978
        %2029 = vst [vmem:[%s611 + $0x24] sm:$0xf] %v1979
        %2030 = vst [vmem:[%s611 + $0x28] sm:$0xf] %v1980
        %2031 = vst [vmem:[%s611 + $0x2c] sm:$0xf] %v1981
        %2032 = vst [vmem:[%s611 + $0x30] sm:$0xf] %v1982
        %2033 = vst [vmem:[%s611 + $0x34] sm:$0xf] %v1983
        %2034 = vst [vmem:[%s611 + $0x38] sm:$0xf] %v1984
        %2035 = vst [vmem:[%s611 + $0x3c] sm:$0xf] %v1985
        %2036 = vst [vmem:[%s611 + $0x40] sm:$0xf] %v1986
        %2037 = vst [vmem:[%s611 + $0x44] sm:$0xf] %v1987
        %2038 = vst [vmem:[%s611 + $0x48] sm:$0xf] %v1988
        %2039 = vst [vmem:[%s611 + $0x4c] sm:$0xf] %v1989
        %2040 = vst [vmem:[%s611 + $0x50] sm:$0xf] %v1990
        %2041 = vst [vmem:[%s611 + $0x54] sm:$0xf] %v1991
        %2042 = vst [vmem:[%s611 + $0x58] sm:$0xf] %v1992
        %2043 = vst [vmem:[%s611 + $0x5c] sm:$0xf] %v1993
        %2044 = vst [vmem:[%s611 + $0x60] sm:$0xf] %v1994
        %s2045 = smul.u32 25, %s14
        %p2046 = scmp.lt.s32.totalorder %s2045, 49
        %s2047 = scalar_select %p2046, %s2045, 49
        %s2048 = smul.addr %s2047, 4
        %s2049 = scalar_lea.vmem %s3, %s2048
        // Predicated region
        $region74: #{deepnet_forward.3} parent=68 // pred_check
          %p2050 = pneg %p100
        $region75: #{deepnet_forward.3} parent=68 // pred_check_branch
          %2052 = sbr.rel (%p2050) target = $region77
        $region76: #{deepnet_forward.3} parent=68 // pred_region
          %s2053 = smul.u32 25, %s14
        $region77: #{deepnet_forward.3} parent=68 // pred_fallthru
          _
      $region69: #{deepnet_forward.3} parent=5 // pred_fallthru
        _
      %p2054 = scmp.le.s32.totalorder 2, %s9
      // Predicated region
      $region78: #{deepnet_forward.3} parent=5 // pred_check
        %p2055 = pneg %p2054
      $region79: #{deepnet_forward.3} parent=5 // pred_check_branch
        %2057 = sbr.rel (%p2055) target = $region81
      $region80: #{deepnet_forward.3} parent=5 // pred_region
        %s2058 = ssub.s32 %s9, 2
        // Predicated region
        $region82: #{deepnet_forward.3} parent=80 // pred_check
          %p2059 = pneg %p106
        $region83: #{deepnet_forward.3} parent=80 // pred_check_branch
          %2061 = sbr.rel (%p2059) target = $region85
        $region84: #{deepnet_forward.3} parent=80 // pred_region
          %s2062 = smul.u32 25, %s15
          %p2063 = scmp.lt.s32.totalorder %s2062, 49
          %s2064 = scalar_select %p2063, %s2062, 49
          %s2065 = smul.addr %s2064, 4
          %s2066 = scalar_lea.vmem %s3, %s2065
        $region85: #{deepnet_forward.3} parent=80 // pred_fallthru
          _
      $region81: #{deepnet_forward.3} parent=5 // pred_fallthru
        _
    $region6: #{deepnet_forward.3} parent=1 // loop_footer
      %s13 = sadd.s32 1, %s9
    $region7: #{deepnet_forward.3} parent=1 // loop_footer_branch
      %8 = sbr.rel target = $region3
    $region8: #{deepnet_forward.3} parent=1 // loop_exit
      _

// kernel: deepnet_forward.4
$region0: #{deepnet_forward.4}
  #allocation0 [shape = 'u32[]', space=smem, size = 0x4, offset = 0x4, fixed_abs, tag = 'smem constant byte address 0x4 - core index']
  #allocation1 [shape = 'u32[144,128]{1,0:T(1,128)}', space=vmem, size = 0x12000, scoped, tag = 'internal scratch']
  %s0 = inlined_call_operand.vmem [shape: bf16[4,64,256], index: 0, kind: input, shape index: {}]
  %s1 = inlined_call_operand.vmem [shape: bf16[256,128], index: 1, kind: input, shape index: {}]
  %s2 = inlined_call_operand.vmem [shape: f32[1,128], index: 2, kind: input, shape index: {}]
  %s3 = inlined_call_operand.vmem [shape: bf16[64,128], index: 3, kind: output, shape index: {}]
  %s4 = sld [smem:[#allocation0]]
  $region83: #{deepnet_forward.4} parent=0
    _
  %s6 = ssub.s32 1, %s4
  %s7 = scalar_select 0, %s6, %s4
  $region1: #{deepnet_forward.4} parent=0
    #allocation2 [shape = 'u8[131072]{0}', space=vmem, size = 0x20000, scoped, tag = 'input window, operand 0']
    loop: start=0, step=1, limit=4
    $region2: #{deepnet_forward.4} parent=1 // loop_pre_header
      _
    $region3: #{deepnet_forward.4} parent=1 // loop_header
      %s9 = sphi 0, %s13
      %p10 = scmp.ge.s32.totalorder %s9, 4
      %s19 = sphi 0, %s21
      %s22 = sphi 0, %s19
      %s23 = sphi 0, %s22
      %s39 = sphi 0, %s23
      %s43 = sphi 0, %s43
      %s45 = sphi 0, %s43
      %s46 = sphi 0, %s45
      %s60 = sphi 0, %s46
      %s64 = sphi 0, %s64
      %s66 = sphi 0, %s64
      %s67 = sphi 0, %s66
      %s81 = sphi 0, %s67
      %s87 = sphi 0, %s89
      %s90 = sphi 0, %s87
      %s91 = sphi 0, %s90
      %s107 = sphi 0, %s91
    $region4: #{deepnet_forward.4} parent=1 // loop_header_branch
      %12 = sbr.rel (%p10) target = $region8
    $region5: #{deepnet_forward.4} parent=1 // loop_body
      %s14 = ssub.s32 %s9, 1
      %s15 = ssub.s32 %s9, 2
      %s16 = sadd.s32 %s9, 1
      %s17 = ssub.s32 %s9, %s16
      %p18 = scmp.eq.s32.totalorder %s17, 0
      %s20 = sadd.s32 %s19, 1
      %s21 = scalar_select %p18, %s19, %s20
      %p24 = pneg %p18
      %p25 = scmp.eq.s32.totalorder %s9, 1
      %p26 = por %p24, %p25
      %p27 = scmp.ne.s32.totalorder %s19, %s22
      %p28 = scmp.eq.s32.totalorder %s9, 0
      %p29 = por %p27, %p28
      %p30 = scmp.ne.s32.totalorder %s19, %s22
      %p31 = scmp.eq.s32.totalorder %s14, 1
      %p32 = por %p30, %p31
      %p33 = scmp.ne.s32.totalorder %s22, %s23
      %p34 = scmp.eq.s32.totalorder %s14, 0
      %p35 = por %p33, %p34
      %p36 = scmp.ne.s32.totalorder %s22, %s23
      %p37 = scmp.eq.s32.totalorder %s15, 1
      %p38 = por %p36, %p37
      %p40 = scmp.ne.s32.totalorder %s23, %s39
      %p41 = scmp.eq.s32.totalorder %s15, 0
      %p42 = por %p40, %p41
      %s44 = sadd.s32 %s43, 1
      %p47 = scmp.eq.s32.totalorder %s9, 1
      %p48 = scmp.ne.s32.totalorder %s43, %s45
      %p49 = scmp.eq.s32.totalorder %s9, 0
      %p50 = por %p48, %p49
      %p51 = scmp.ne.s32.totalorder %s43, %s45
      %p52 = scmp.eq.s32.totalorder %s14, 1
      %p53 = por %p51, %p52
      %p54 = scmp.ne.s32.totalorder %s45, %s46
      %p55 = scmp.eq.s32.totalorder %s14, 0
      %p56 = por %p54, %p55
      %p57 = scmp.ne.s32.totalorder %s45, %s46
      %p58 = scmp.eq.s32.totalorder %s15, 1
      %p59 = por %p57, %p58
      %p61 = scmp.ne.s32.totalorder %s46, %s60
      %p62 = scmp.eq.s32.totalorder %s15, 0
      %p63 = por %p61, %p62
      %s65 = sadd.s32 %s64, 1
      %p68 = scmp.eq.s32.totalorder %s9, 1
      %p69 = scmp.ne.s32.totalorder %s64, %s66
      %p70 = scmp.eq.s32.totalorder %s9, 0
      %p71 = por %p69, %p70
      %p72 = scmp.ne.s32.totalorder %s64, %s66
      %p73 = scmp.eq.s32.totalorder %s14, 1
      %p74 = por %p72, %p73
      %p75 = scmp.ne.s32.totalorder %s66, %s67
      %p76 = scmp.eq.s32.totalorder %s14, 0
      %p77 = por %p75, %p76
      %p78 = scmp.ne.s32.totalorder %s66, %s67
      %p79 = scmp.eq.s32.totalorder %s15, 1
      %p80 = por %p78, %p79
      %p82 = scmp.ne.s32.totalorder %s67, %s81
      %p83 = scmp.eq.s32.totalorder %s15, 0
      %p84 = por %p82, %p83
      %s85 = ssub.s32 %s9, %s16
      %p86 = scmp.eq.s32.totalorder %s85, 0
      %s88 = sadd.s32 %s87, 1
      %s89 = scalar_select %p86, %s87, %s88
      %p92 = pneg %p86
      %p93 = scmp.eq.s32.totalorder %s9, 1
      %p94 = por %p92, %p93
      %p95 = scmp.ne.s32.totalorder %s87, %s90
      %p96 = scmp.eq.s32.totalorder %s9, 0
      %p97 = por %p95, %p96
      %p98 = scmp.ne.s32.totalorder %s87, %s90
      %p99 = scmp.eq.s32.totalorder %s14, 1
      %p100 = por %p98, %p99
      %p101 = scmp.ne.s32.totalorder %s90, %s91
      %p102 = scmp.eq.s32.totalorder %s14, 0
      %p103 = por %p101, %p102
      %p104 = scmp.ne.s32.totalorder %s90, %s91
      %p105 = scmp.eq.s32.totalorder %s15, 1
      %p106 = por %p104, %p105
      %p108 = scmp.ne.s32.totalorder %s91, %s107
      %p109 = scmp.eq.s32.totalorder %s15, 0
      %p110 = por %p108, %p109
      %p111 = scmp.le.s32.totalorder 1, %s9
      %p112 = scmp.lt.s32.totalorder %s9, 3
      %p113 = pnand %p111, %p112
      %p114 = pneg %p113
      // Predicated region
      $region9: #{deepnet_forward.4} parent=5 // pred_check
        _
      $region10: #{deepnet_forward.4} parent=5 // pred_check_branch
        %116 = sbr.rel (%p113) target = $region12
      $region11: #{deepnet_forward.4} parent=5 // pred_region
        %s117 = ssub.s32 %s9, 1
        // Predicated region
        $region13: #{deepnet_forward.4} parent=11 // pred_check
          %p118 = pneg %p56
        $region14: #{deepnet_forward.4} parent=11 // pred_check_branch
          %120 = sbr.rel (%p118) target = $region16
        $region15: #{deepnet_forward.4} parent=11 // pred_region
          _
        $region16: #{deepnet_forward.4} parent=11 // pred_fallthru
          _
        // Predicated region
        $region17: #{deepnet_forward.4} parent=11 // pred_check
          %p121 = pneg %p77
        $region18: #{deepnet_forward.4} parent=11 // pred_check_branch
          %123 = sbr.rel (%p121) target = $region20
        $region19: #{deepnet_forward.4} parent=11 // pred_region
          _
        $region20: #{deepnet_forward.4} parent=11 // pred_fallthru
          _
      $region12: #{deepnet_forward.4} parent=5 // pred_fallthru
        _
      %p124 = scmp.lt.s32.totalorder %s9, 2
      // Predicated region
      $region21: #{deepnet_forward.4} parent=5 // pred_check
        %p125 = pneg %p124
      $region22: #{deepnet_forward.4} parent=5 // pred_check_branch
        %127 = sbr.rel (%p125) target = $region24
      $region23: #{deepnet_forward.4} parent=5 // pred_region
        // Predicated region
        $region25: #{deepnet_forward.4} parent=23 // pred_check
          %p128 = pneg %p29
        $region26: #{deepnet_forward.4} parent=23 // pred_check_branch
          %130 = sbr.rel (%p128) target = $region28
        $region27: #{deepnet_forward.4} parent=23 // pred_region
          %s131 = sand.u32 %s19, 1
          %s132 = sand.u32 %s19, 1
          %s133 = smul.addr %s132, 128
          %s134 = scalar_lea.vmem [#allocation2], %s133
          %s135 = smul.u32 4, %s9
          %s136 = smul.addr %s135, 2
          %s137 = smul.addr %s136, 4
          %s138 = scalar_lea.vmem %s0, %s137
          // Predicated region
          $region29: #{deepnet_forward.4} parent=27 // pred_check
            _
          $region30: #{deepnet_forward.4} parent=27 // pred_check_branch
            %140 = sbr.rel (0) target = $region32
          $region31: #{deepnet_forward.4} parent=27 // pred_region
            // Predicated region
            $region33: #{deepnet_forward.4} parent=31 // pred_check
              _
            $region34: #{deepnet_forward.4} parent=31 // pred_check_branch
              %142 = sbr.rel (0) target = $region36
            $region35: #{deepnet_forward.4} parent=31 // pred_region
              // Predicated region
              $region48: #{deepnet_forward.4} parent=35 // pred_check
                _
              $region49: #{deepnet_forward.4} parent=35 // pred_check_branch
                %188 = sbr.rel (0) target = $region51
              $region50: #{deepnet_forward.4} parent=35 // pred_region
                loop: start=0, step=1, limit=1
                $region52: #{deepnet_forward.4} parent=50 // loop_pre_header
                  _
                $region53: #{deepnet_forward.4} parent=50 // loop_header
                  %s190 = sphi 0, %s194
                  %p191 = scmp.ge.s32.totalorder %s190, 1
                  %s195 = sphi %s138, %s138
                  %s196 = sphi %s134, %s134
                $region54: #{deepnet_forward.4} parent=50 // loop_header_branch
                  %193 = sbr.rel (%p191) target = $region58
                $region55: #{deepnet_forward.4} parent=50 // loop_body
                  %v197 = vld [vmem:[%s195] sm:$0xff]
                  %198 = vst [vmem:[%s196] sm:$0xff] %v197
                  %v199 = vld [vmem:[%s195 + $0x8] sm:$0xff]
                  %200 = vst [vmem:[%s196 + $0x8] sm:$0xff] %v199
                  %v201 = vld [vmem:[%s195 + $0x10] sm:$0xff]
                  %202 = vst [vmem:[%s196 + $0x10] sm:$0xff] %v201
                  %v203 = vld [vmem:[%s195 + $0x18] sm:$0xff]
                  %204 = vst [vmem:[%s196 + $0x18] sm:$0xff] %v203
                  %v205 = vld [vmem:[%s195 + $0x40] sm:$0xff]
                  %206 = vst [vmem:[%s196 + $0x20] sm:$0xff] %v205
                  %v207 = vld [vmem:[%s195 + $0x48] sm:$0xff]
                  %208 = vst [vmem:[%s196 + $0x28] sm:$0xff] %v207
                  %v209 = vld [vmem:[%s195 + $0x50] sm:$0xff]
                  %210 = vst [vmem:[%s196 + $0x30] sm:$0xff] %v209
                  %v211 = vld [vmem:[%s195 + $0x58] sm:$0xff]
                  %212 = vst [vmem:[%s196 + $0x38] sm:$0xff] %v211
                  %v213 = vld [vmem:[%s195 + $0x80] sm:$0xff]
                  %214 = vst [vmem:[%s196 + $0x40] sm:$0xff] %v213
                  %v215 = vld [vmem:[%s195 + $0x88] sm:$0xff]
                  %216 = vst [vmem:[%s196 + $0x48] sm:$0xff] %v215
                  %v217 = vld [vmem:[%s195 + $0x90] sm:$0xff]
                  %218 = vst [vmem:[%s196 + $0x50] sm:$0xff] %v217
                  %v219 = vld [vmem:[%s195 + $0x98] sm:$0xff]
                  %220 = vst [vmem:[%s196 + $0x58] sm:$0xff] %v219
                  %v221 = vld [vmem:[%s195 + $0xc0] sm:$0xff]
                  %222 = vst [vmem:[%s196 + $0x60] sm:$0xff] %v221
                  %v223 = vld [vmem:[%s195 + $0xc8] sm:$0xff]
                  %224 = vst [vmem:[%s196 + $0x68] sm:$0xff] %v223
                  %v225 = vld [vmem:[%s195 + $0xd0] sm:$0xff]
                  %226 = vst [vmem:[%s196 + $0x70] sm:$0xff] %v225
                  %v227 = vld [vmem:[%s195 + $0xd8] sm:$0xff]
                  %228 = vst [vmem:[%s196 + $0x78] sm:$0xff] %v227
                $region56: #{deepnet_forward.4} parent=50 // loop_footer
                  %s194 = sadd.s32 1, %s190
                $region57: #{deepnet_forward.4} parent=50 // loop_footer_branch
                  %189 = sbr.rel target = $region53
                $region58: #{deepnet_forward.4} parent=50 // loop_exit
                  _
              $region51: #{deepnet_forward.4} parent=35 // pred_fallthru
                _
              // Predicated region
              $region59: #{deepnet_forward.4} parent=35 // pred_check
                _
              $region60: #{deepnet_forward.4} parent=35 // pred_check_branch
                %230 = sbr.rel target = $region62
              $region61: #{deepnet_forward.4} parent=35 // pred_region
                _
              $region62: #{deepnet_forward.4} parent=35 // pred_fallthru
                _
            $region36: #{deepnet_forward.4} parent=31 // pred_fallthru
              _
            // Predicated region
            $region37: #{deepnet_forward.4} parent=31 // pred_check
              _
            $region38: #{deepnet_forward.4} parent=31 // pred_check_branch
              %144 = sbr.rel target = $region40
            $region39: #{deepnet_forward.4} parent=31 // pred_region
              %s146 = ssub.s32 256, 1
              loop: start=0, step=1, limit=1
              $region41: #{deepnet_forward.4} parent=39 // loop_pre_header
                _
              $region42: #{deepnet_forward.4} parent=39 // loop_header
                %s148 = sphi 0, %s152
                %p149 = scmp.ge.s32.totalorder %s148, 1
                %s153 = sphi %s138, %s138
                %s154 = sphi %s134, %s134
              $region43: #{deepnet_forward.4} parent=39 // loop_header_branch
                %151 = sbr.rel (%p149) target = $region47
              $region44: #{deepnet_forward.4} parent=39 // loop_body
                %v155 = vld [vmem:[%s153] sm:%s146]
                %156 = vst [vmem:[%s154] sm:%s146] %v155
                %v157 = vld [vmem:[%s153 + $0x8] sm:%s146]
                %158 = vst [vmem:[%s154 + $0x8] sm:%s146] %v157
                %v159 = vld [vmem:[%s153 + $0x10] sm:%s146]
                %160 = vst [vmem:[%s154 + $0x10] sm:%s146] %v159
                %v161 = vld [vmem:[%s153 + $0x18] sm:%s146]
                %162 = vst [vmem:[%s154 + $0x18] sm:%s146] %v161
                %v163 = vld [vmem:[%s153 + $0x40] sm:%s146]
                %164 = vst [vmem:[%s154 + $0x20] sm:%s146] %v163
                %v165 = vld [vmem:[%s153 + $0x48] sm:%s146]
                %166 = vst [vmem:[%s154 + $0x28] sm:%s146] %v165
                %v167 = vld [vmem:[%s153 + $0x50] sm:%s146]
                %168 = vst [vmem:[%s154 + $0x30] sm:%s146] %v167
                %v169 = vld [vmem:[%s153 + $0x58] sm:%s146]
                %170 = vst [vmem:[%s154 + $0x38] sm:%s146] %v169
                %v171 = vld [vmem:[%s153 + $0x80] sm:%s146]
                %172 = vst [vmem:[%s154 + $0x40] sm:%s146] %v171
                %v173 = vld [vmem:[%s153 + $0x88] sm:%s146]
                %174 = vst [vmem:[%s154 + $0x48] sm:%s146] %v173
                %v175 = vld [vmem:[%s153 + $0x90] sm:%s146]
                %176 = vst [vmem:[%s154 + $0x50] sm:%s146] %v175
                %v177 = vld [vmem:[%s153 + $0x98] sm:%s146]
                %178 = vst [vmem:[%s154 + $0x58] sm:%s146] %v177
                %v179 = vld [vmem:[%s153 + $0xc0] sm:%s146]
                %180 = vst [vmem:[%s154 + $0x60] sm:%s146] %v179
                %v181 = vld [vmem:[%s153 + $0xc8] sm:%s146]
                %182 = vst [vmem:[%s154 + $0x68] sm:%s146] %v181
                %v183 = vld [vmem:[%s153 + $0xd0] sm:%s146]
                %184 = vst [vmem:[%s154 + $0x70] sm:%s146] %v183
                %v185 = vld [vmem:[%s153 + $0xd8] sm:%s146]
                %186 = vst [vmem:[%s154 + $0x78] sm:%s146] %v185
              $region45: #{deepnet_forward.4} parent=39 // loop_footer
                %s152 = sadd.s32 1, %s148
              $region46: #{deepnet_forward.4} parent=39 // loop_footer_branch
                %147 = sbr.rel target = $region42
              $region47: #{deepnet_forward.4} parent=39 // loop_exit
                _
            $region40: #{deepnet_forward.4} parent=31 // pred_fallthru
              _
          $region32: #{deepnet_forward.4} parent=27 // pred_fallthru
            _
          %231 = vnop
        $region28: #{deepnet_forward.4} parent=23 // pred_fallthru
          _
      $region24: #{deepnet_forward.4} parent=5 // pred_fallthru
        _
      %p232 = scmp.le.s32.totalorder 1, %s9
      %p233 = scmp.lt.s32.totalorder %s9, 3
      %p234 = pnand %p232, %p233
      %p235 = pneg %p234
      // Predicated region
      $region63: #{deepnet_forward.4} parent=5 // pred_check
        _
      $region64: #{deepnet_forward.4} parent=5 // pred_check_branch
        %237 = sbr.rel (%p234) target = $region66
      $region65: #{deepnet_forward.4} parent=5 // pred_region
        %s238 = ssub.s32 %s9, 1
        %s239 = sand.u32 %s22, 1
        %s240 = sand.u32 %s22, 1
        %s241 = smul.addr %s240, 128
        %s242 = scalar_lea.vmem [#allocation2], %s241
        // Predicated region
        $region67: #{deepnet_forward.4} parent=65 // pred_check
          %p243 = pneg %p35
        $region68: #{deepnet_forward.4} parent=65 // pred_check_branch
          %245 = sbr.rel (%p243) target = $region70
        $region69: #{deepnet_forward.4} parent=65 // pred_region
          _
        $region70: #{deepnet_forward.4} parent=65 // pred_fallthru
          _
        %s246 = sand.u32 %s22, 1
        %s247 = sand.u32 %s22, 1
        %s248 = smul.addr %s247, 128
        %s249 = scalar_lea.vmem [#allocation2], %s248
        %p250 = pneg %p35
        %p251 = pneg %p32
        %p252 = pneg %p56
        %p253 = pneg %p53
        %p254 = pneg %p77
        %p255 = pneg %p74
        %p256 = pneg %p103
        %p257 = pneg %p100
        %s258 = smul.u32 4, %s14
        %p259 = scmp.lt.s32.totalorder %s258, 7
        %s260 = scalar_select %p259, %s258, 7
        %s261 = smul.addr %s260, 4
        %s262 = scalar_lea.vmem %s3, %s261
        %s263 = smul.u32 4, %s14
        %s264 = smul.u32 4, %s14
        %p265 = scmp.lt.s32.totalorder %s264, 7
        %s266 = scalar_select %p265, %s264, 7
        %s267 = smul.addr %s266, 4
        %s268 = scalar_lea.vmem %s3, %s267
        %s269 = smul.u32 4, %s14
        %v271 = vld [vmem:[%s242] sm:$0xff]
        %v272 = vld [vmem:[%s242 + $0x8] sm:$0xff]
        %v273 = vld [vmem:[%s242 + $0x10] sm:$0xff]
        %v274 = vld [vmem:[%s242 + $0x18] sm:$0xff]
        %v275 = vld [vmem:[%s242 + $0x20] sm:$0xff]
        %v276 = vld [vmem:[%s242 + $0x28] sm:$0xff]
        %v277 = vld [vmem:[%s242 + $0x30] sm:$0xff]
        %v278 = vld [vmem:[%s242 + $0x38] sm:$0xff]
        %v279 = vld [vmem:[%s242 + $0x40] sm:$0xff]
        %v280 = vld [vmem:[%s242 + $0x48] sm:$0xff]
        %v281 = vld [vmem:[%s242 + $0x50] sm:$0xff]
        %v282 = vld [vmem:[%s242 + $0x58] sm:$0xff]
        %v283 = vld [vmem:[%s242 + $0x60] sm:$0xff]
        %v284 = vld [vmem:[%s242 + $0x68] sm:$0xff]
        %v285 = vld [vmem:[%s242 + $0x70] sm:$0xff]
        %v286 = vld [vmem:[%s242 + $0x78] sm:$0xff]
        %v287 = vld [vmem:[%s1] sm:$0xf]
        %v288 = vld [vmem:[%s1 + $0x4] sm:$0xf]
        %v289 = vld [vmem:[%s1 + $0x8] sm:$0xf]
        %v290 = vld [vmem:[%s1 + $0xc] sm:$0xf]
        %v291 = vld [vmem:[%s1 + $0x10] sm:$0xf]
        %v292 = vld [vmem:[%s1 + $0x14] sm:$0xf]
        %v293 = vld [vmem:[%s1 + $0x18] sm:$0xf]
        %v294 = vld [vmem:[%s1 + $0x1c] sm:$0xf]
        %v295 = vld [vmem:[%s1 + $0x20] sm:$0xf]
        %v296 = vld [vmem:[%s1 + $0x24] sm:$0xf]
        %v297 = vld [vmem:[%s1 + $0x28] sm:$0xf]
        %v298 = vld [vmem:[%s1 + $0x2c] sm:$0xf]
        %v299 = vld [vmem:[%s1 + $0x30] sm:$0xf]
        %v300 = vld [vmem:[%s1 + $0x34] sm:$0xf]
        %v301 = vld [vmem:[%s1 + $0x38] sm:$0xf]
        %v302 = vld [vmem:[%s1 + $0x3c] sm:$0xf]
        %v303 = vld [vmem:[%s1 + $0x40] sm:$0xf]
        %v304 = vld [vmem:[%s1 + $0x44] sm:$0xf]
        %v305 = vld [vmem:[%s1 + $0x48] sm:$0xf]
        %v306 = vld [vmem:[%s1 + $0x4c] sm:$0xf]
        %v307 = vld [vmem:[%s1 + $0x50] sm:$0xf]
        %v308 = vld [vmem:[%s1 + $0x54] sm:$0xf]
        %v309 = vld [vmem:[%s1 + $0x58] sm:$0xf]
        %v310 = vld [vmem:[%s1 + $0x5c] sm:$0xf]
        %v311 = vld [vmem:[%s1 + $0x60] sm:$0xf]
        %v312 = vld [vmem:[%s1 + $0x64] sm:$0xf]
        %v313 = vld [vmem:[%s1 + $0x68] sm:$0xf]
        %v314 = vld [vmem:[%s1 + $0x6c] sm:$0xf]
        %v315 = vld [vmem:[%s1 + $0x70] sm:$0xf]
        %v316 = vld [vmem:[%s1 + $0x74] sm:$0xf]
        %v317 = vld [vmem:[%s1 + $0x78] sm:$0xf]
        %v318 = vld [vmem:[%s1 + $0x7c] sm:$0xf]
        %v319 = vld [vmem:[%s2] sm:$0x1]
        %v321 = vlaneseq
        %v322 = vshrl.u32 %v321, 7
        %v323 = vsub.s32 0, %v322
        %v324 = vrot.slane %v319, %v323
        %v342 = vunpack.c.l.b16 %v271
        %v343 = vunpack.c.h.b16 %v271
        %v344 = vunpack.c.l.b16 %v272
        %v345 = vunpack.c.h.b16 %v272
        %v346 = vunpack.c.l.b16 %v273
        %v347 = vunpack.c.h.b16 %v273
        %v348 = vunpack.c.l.b16 %v274
        %v349 = vunpack.c.h.b16 %v274
        %v350 = vunpack.c.l.b16 %v275
        %v351 = vunpack.c.h.b16 %v275
        %v352 = vunpack.c.l.b16 %v276
        %v353 = vunpack.c.h.b16 %v276
        %v354 = vunpack.c.l.b16 %v277
        %v355 = vunpack.c.h.b16 %v277
        %v356 = vunpack.c.l.b16 %v278
        %v357 = vunpack.c.h.b16 %v278
        %v358 = vunpack.c.l.b16 %v279
        %v359 = vunpack.c.h.b16 %v279
        %v360 = vunpack.c.l.b16 %v280
        %v361 = vunpack.c.h.b16 %v280
        %v362 = vunpack.c.l.b16 %v281
        %v363 = vunpack.c.h.b16 %v281
        %v364 = vunpack.c.l.b16 %v282
        %v365 = vunpack.c.h.b16 %v282
        %v366 = vunpack.c.l.b16 %v283
        %v367 = vunpack.c.h.b16 %v283
        %v368 = vunpack.c.l.b16 %v284
        %v369 = vunpack.c.h.b16 %v284
        %v370 = vunpack.c.l.b16 %v285
        %v371 = vunpack.c.h.b16 %v285
        %v372 = vunpack.c.l.b16 %v286
        %v373 = vunpack.c.h.b16 %v286
        %v374 = vpack.c.b16 %v344, %v342
        %v375 = vpack.c.b16 %v345, %v343
        %v376 = vpack.c.b16 %v348, %v346
        %v377 = vpack.c.b16 %v349, %v347
        %v378 = vpack.c.b16 %v352, %v350
        %v379 = vpack.c.b16 %v353, %v351
        %v380 = vpack.c.b16 %v356, %v354
        %v381 = vpack.c.b16 %v357, %v355
        %v382 = vpack.c.b16 %v360, %v358
        %v383 = vpack.c.b16 %v361, %v359
        %v384 = vpack.c.b16 %v364, %v362
        %v385 = vpack.c.b16 %v365, %v363
        %v386 = vpack.c.b16 %v368, %v366
        %v387 = vpack.c.b16 %v369, %v367
        %v388 = vpack.c.b16 %v372, %v370
        %v389 = vpack.c.b16 %v373, %v371
        %v438 = vunpack.c.l.b16 %v287
        %v439 = vunpack.c.l.b16 %v288
        %v440 = vunpack.c.l.b16 %v289
        %v441 = vunpack.c.l.b16 %v290
        %v442 = vunpack.c.l.b16 %v291
        %v443 = vunpack.c.l.b16 %v292
        %v444 = vunpack.c.l.b16 %v293
        %v445 = vunpack.c.l.b16 %v294
        %v446 = vunpack.c.l.b16 %v295
        %v447 = vunpack.c.l.b16 %v296
        %v448 = vunpack.c.l.b16 %v297
        %v449 = vunpack.c.l.b16 %v298
        %v450 = vunpack.c.l.b16 %v299
        %v451 = vunpack.c.l.b16 %v300
        %v452 = vunpack.c.l.b16 %v301
        %v453 = vunpack.c.l.b16 %v302
        %v454 = vunpack.c.l.b16 %v303
        %v455 = vunpack.c.l.b16 %v304
        %v456 = vunpack.c.l.b16 %v305
        %v457 = vunpack.c.l.b16 %v306
        %v458 = vunpack.c.l.b16 %v307
        %v459 = vunpack.c.l.b16 %v308
        %v460 = vunpack.c.l.b16 %v309
        %v461 = vunpack.c.l.b16 %v310
        %v462 = vunpack.c.l.b16 %v311
        %v463 = vunpack.c.l.b16 %v312
        %v464 = vunpack.c.l.b16 %v313
        %v465 = vunpack.c.l.b16 %v314
        %v466 = vunpack.c.l.b16 %v315
        %v467 = vunpack.c.l.b16 %v316
        %v468 = vunpack.c.l.b16 %v317
        %v469 = vunpack.c.l.b16 %v318
        %v470 = vpack.c.b16 %v439, %v438
        %v471 = vpack.c.b16 %v441, %v440
        %v472 = vpack.c.b16 %v443, %v442
        %v473 = vpack.c.b16 %v445, %v444
        %v474 = vpack.c.b16 %v447, %v446
        %v475 = vpack.c.b16 %v449, %v448
        %v476 = vpack.c.b16 %v451, %v450
        %v477 = vpack.c.b16 %v453, %v452
        %v478 = vpack.c.b16 %v455, %v454
        %v479 = vpack.c.b16 %v457, %v456
        %v480 = vpack.c.b16 %v459, %v458
        %v481 = vpack.c.b16 %v461, %v460
        %v482 = vpack.c.b16 %v463, %v462
        %v483 = vpack.c.b16 %v465, %v464
        %v484 = vpack.c.b16 %v467, %v466
        %v485 = vpack.c.b16 %v469, %v468
        %502 = vmatprep.subr.bf16.mxu0 0
        %503 = vmatpush1.bf16.msra.mxu0 %v477
        %504 = vmatprep.subr.bf16.mxu0 0
        %505 = vmatpush1.bf16.msra.mxu0 %v476
        %506 = vmatprep.subr.bf16.mxu0 0
        %507 = vmatpush1.bf16.msra.mxu0 %v475
        %508 = vmatprep.subr.bf16.mxu0 0
        %509 = vmatpush1.bf16.msra.mxu0 %v474
        %510 = vmatprep.subr.bf16.mxu0 0
        %511 = vmatpush1.bf16.msra.mxu0 %v473
        %512 = vmatprep.subr.bf16.mxu0 0
        %513 = vmatpush1.bf16.msra.mxu0 %v472
        %514 = vmatprep.subr.bf16.mxu0 0
        %515 = vmatpush1.bf16.msra.mxu0 %v471
        %516 = vmatprep.subr.bf16.mxu0 0
        %517 = vmatpush1.bf16.msra.mxu0 %v470
        %518 = vmatprep.subr.bf16.mxu0 0
        %519 = vmatpush2.bf16.msra.mxu0 %v485
        %520 = vmatprep.subr.bf16.mxu0 0
        %521 = vmatpush2.bf16.msra.mxu0 %v484
        %522 = vmatprep.subr.bf16.mxu0 0
        %523 = vmatpush2.bf16.msra.mxu0 %v483
        %524 = vmatprep.subr.bf16.mxu0 0
        %525 = vmatpush2.bf16.msra.mxu0 %v482
        %526 = vmatprep.subr.bf16.mxu0 0
        %527 = vmatpush2.bf16.msra.mxu0 %v481
        %528 = vmatprep.subr.bf16.mxu0 0
        %529 = vmatpush2.bf16.msra.mxu0 %v480
        %530 = vmatprep.subr.bf16.mxu0 0
        %531 = vmatpush2.bf16.msra.mxu0 %v479
        %532 = vmatprep.subr.bf16.mxu0 0
        %533 = vmatpush2.bf16.msra.mxu0 %v478
        %534 = vmatprep.mubr.bf16.mxu0 %v375
        %535 = vmatmul.mubr.bf16.gmra.mxu0 %v374
        %v536 = vpop.f32.mrf.mxu0
        %v537 = vadd.f32 %v324, %v536
        %v538 = vpop.f32.mrf.mxu0
        %v539 = vpop.f32.mrf.mxu0
        %v540 = vadd.f32 %v324, %v539
        %v541 = vpop.f32.mrf.mxu0
        %542 = vmatprep.mubr.bf16.mxu0 %v377
        %543 = vmatmul.mubr.bf16.gmra.mxu0 %v376
        %v544 = vpop.f32.mrf.mxu0
        %v545 = vadd.f32 %v324, %v544
        %v546 = vpop.f32.mrf.mxu0
        %v547 = vpop.f32.mrf.mxu0
        %v548 = vadd.f32 %v324, %v547
        %v549 = vpop.f32.mrf.mxu0
        %550 = vmatprep.mubr.bf16.mxu0 %v379
        %551 = vmatmul.mubr.bf16.gmra.mxu0 %v378
        %v552 = vpop.f32.mrf.mxu0
        %v553 = vadd.f32 %v324, %v552
        %v554 = vpop.f32.mrf.mxu0
        %v555 = vpop.f32.mrf.mxu0
        %v556 = vadd.f32 %v324, %v555
        %v557 = vpop.f32.mrf.mxu0
        %558 = vmatprep.mubr.bf16.mxu0 %v381
        %559 = vmatmul.mubr.bf16.gmra.mxu0 %v380
        %v560 = vpop.f32.mrf.mxu0
        %v561 = vadd.f32 %v324, %v560
        %v562 = vpop.f32.mrf.mxu0
        %v563 = vpop.f32.mrf.mxu0
        %v564 = vadd.f32 %v324, %v563
        %v565 = vpop.f32.mrf.mxu0
        %566 = vmatprep.mubr.bf16.mxu0 %v383
        %567 = vmatmul.mubr.bf16.gmra.mxu0 %v382
        %v568 = vpop.f32.mrf.mxu0
        %v569 = vadd.f32 %v324, %v568
        %v570 = vpop.f32.mrf.mxu0
        %v571 = vpop.f32.mrf.mxu0
        %v572 = vadd.f32 %v324, %v571
        %v573 = vpop.f32.mrf.mxu0
        %574 = vmatprep.mubr.bf16.mxu0 %v385
        %575 = vmatmul.mubr.bf16.gmra.mxu0 %v384
        %v576 = vpop.f32.mrf.mxu0
        %v577 = vadd.f32 %v324, %v576
        %v578 = vpop.f32.mrf.mxu0
        %v579 = vpop.f32.mrf.mxu0
        %v580 = vadd.f32 %v324, %v579
        %v581 = vpop.f32.mrf.mxu0
        %582 = vmatprep.mubr.bf16.mxu0 %v387
        %583 = vmatmul.mubr.bf16.gmra.mxu0 %v386
        %v584 = vpop.f32.mrf.mxu0
        %v585 = vadd.f32 %v324, %v584
        %v586 = vpop.f32.mrf.mxu0
        %v587 = vpop.f32.mrf.mxu0
        %v588 = vadd.f32 %v324, %v587
        %v589 = vpop.f32.mrf.mxu0
        %590 = vmatprep.mubr.bf16.mxu0 %v389
        %591 = vmatmul.mubr.bf16.gmra.mxu0 %v388
        %v592 = vpop.f32.mrf.mxu0
        %v593 = vadd.f32 %v324, %v592
        %v594 = vpop.f32.mrf.mxu0
        %v595 = vpop.f32.mrf.mxu0
        %v596 = vadd.f32 %v324, %v595
        %v597 = vpop.f32.mrf.mxu0
        %598 = vdwg.mxu0
        %vm599 = vcmp.gt.f32.partialorder %v537, 0.0
        %vm600 = vcmp.gt.f32.partialorder %v540, 0.0
        %vm601 = vcmp.gt.f32.partialorder %v545, 0.0
        %vm602 = vcmp.gt.f32.partialorder %v548, 0.0
        %vm603 = vcmp.gt.f32.partialorder %v553, 0.0
        %vm604 = vcmp.gt.f32.partialorder %v556, 0.0
        %vm605 = vcmp.gt.f32.partialorder %v561, 0.0
        %vm606 = vcmp.gt.f32.partialorder %v564, 0.0
        %vm607 = vcmp.gt.f32.partialorder %v569, 0.0
        %vm608 = vcmp.gt.f32.partialorder %v572, 0.0
        %vm609 = vcmp.gt.f32.partialorder %v577, 0.0
        %vm610 = vcmp.gt.f32.partialorder %v580, 0.0
        %vm611 = vcmp.gt.f32.partialorder %v585, 0.0
        %vm612 = vcmp.gt.f32.partialorder %v588, 0.0
        %vm613 = vcmp.gt.f32.partialorder %v593, 0.0
        %vm614 = vcmp.gt.f32.partialorder %v596, 0.0
        %v615 = vmul.f32 %v537, 0.01
        %v616 = vmul.f32 %v540, 0.01
        %v617 = vmul.f32 %v545, 0.01
        %v618 = vmul.f32 %v548, 0.01
        %v619 = vmul.f32 %v553, 0.01
        %v620 = vmul.f32 %v556, 0.01
        %v621 = vmul.f32 %v561, 0.01
        %v622 = vmul.f32 %v564, 0.01
        %v623 = vmul.f32 %v569, 0.01
        %v624 = vmul.f32 %v572, 0.01
        %v625 = vmul.f32 %v577, 0.01
        %v626 = vmul.f32 %v580, 0.01
        %v627 = vmul.f32 %v585, 0.01
        %v628 = vmul.f32 %v588, 0.01
        %v629 = vmul.f32 %v593, 0.01
        %v630 = vmul.f32 %v596, 0.01
        %v631 = vsel %vm599, %v537, %v615
        %v632 = vsel %vm600, %v540, %v616
        %v633 = vsel %vm601, %v545, %v617
        %v634 = vsel %vm602, %v548, %v618
        %v635 = vsel %vm603, %v553, %v619
        %v636 = vsel %vm604, %v556, %v620
        %v637 = vsel %vm605, %v561, %v621
        %v638 = vsel %vm606, %v564, %v622
        %v639 = vsel %vm607, %v569, %v623
        %v640 = vsel %vm608, %v572, %v624
        %v641 = vsel %vm609, %v577, %v625
        %v642 = vsel %vm610, %v580, %v626
        %v643 = vsel %vm611, %v585, %v627
        %v644 = vsel %vm612, %v588, %v628
        %v645 = vsel %vm613, %v593, %v629
        %v646 = vsel %vm614, %v596, %v630
        %v647 = vadd.f32 %v631, %v635
        %v648 = vadd.f32 %v647, %v639
        %v649 = vadd.f32 %v648, %v643
        %v650 = vadd.f32 %v632, %v636
        %v651 = vadd.f32 %v650, %v640
        %v652 = vadd.f32 %v651, %v644
        %v653 = vadd.f32 %v633, %v637
        %v654 = vadd.f32 %v653, %v641
        %v655 = vadd.f32 %v654, %v645
        %v656 = vadd.f32 %v634, %v638
        %v657 = vadd.f32 %v656, %v642
        %v658 = vadd.f32 %v657, %v646
        %v659 = vrcp.pop 4.0
        %v660 = vmul.f32 %v649, %v659
        %v661 = vmul.f32 %v652, %v659
        %v662 = vmul.f32 %v655, %v659
        %v663 = vmul.f32 %v658, %v659
        %v664 = vpack.c.bf16 %v661, %v660
        %v665 = vpack.c.bf16 %v663, %v662
        %v668 = vunpack.c.l.b16 %v664
        %v669 = vunpack.c.h.b16 %v664
        %v670 = vunpack.c.l.b16 %v665
        %v671 = vunpack.c.h.b16 %v665
        %v672 = vpack.c.b16 %v668, %v668
        %v673 = vpack.c.b16 %v669, %v669
        %v674 = vpack.c.b16 %v670, %v670
        %v675 = vpack.c.b16 %v671, %v671
        %680 = vst [vmem:[%s268] sm:$0xf] %v672
        %681 = vst [vmem:[%s268 + $0x4] sm:$0xf] %v673
        %682 = vst [vmem:[%s268 + $0x8] sm:$0xf] %v674
        %683 = vst [vmem:[%s268 + $0xc] sm:$0xf] %v675
        %s684 = smul.u32 4, %s14
        %p685 = scmp.lt.s32.totalorder %s684, 7
        %s686 = scalar_select %p685, %s684, 7
        %s687 = smul.addr %s686, 4
        %s688 = scalar_lea.vmem %s3, %s687
        // Predicated region
        $region71: #{deepnet_forward.4} parent=65 // pred_check
          %p689 = pneg %p100
        $region72: #{deepnet_forward.4} parent=65 // pred_check_branch
          %691 = sbr.rel (%p689) target = $region74
        $region73: #{deepnet_forward.4} parent=65 // pred_region
          %s692 = smul.u32 4, %s14
        $region74: #{deepnet_forward.4} parent=65 // pred_fallthru
          _
      $region66: #{deepnet_forward.4} parent=5 // pred_fallthru
        _
      %p693 = scmp.le.s32.totalorder 2, %s9
      // Predicated region
      $region75: #{deepnet_forward.4} parent=5 // pred_check
        %p694 = pneg %p693
      $region76: #{deepnet_forward.4} parent=5 // pred_check_branch
        %696 = sbr.rel (%p694) target = $region78
      $region77: #{deepnet_forward.4} parent=5 // pred_region
        %s697 = ssub.s32 %s9, 2
        // Predicated region
        $region79: #{deepnet_forward.4} parent=77 // pred_check
          %p698 = pneg %p106
        $region80: #{deepnet_forward.4} parent=77 // pred_check_branch
          %700 = sbr.rel (%p698) target = $region82
        $region81: #{deepnet_forward.4} parent=77 // pred_region
          %s701 = smul.u32 4, %s15
          %p702 = scmp.lt.s32.totalorder %s701, 7
          %s703 = scalar_select %p702, %s701, 7
          %s704 = smul.addr %s703, 4
          %s705 = scalar_lea.vmem %s3, %s704
        $region82: #{deepnet_forward.4} parent=77 // pred_fallthru
          _
      $region78: #{deepnet_forward.4} parent=5 // pred_fallthru
        _
    $region6: #{deepnet_forward.4} parent=1 // loop_footer
      %s13 = sadd.s32 1, %s9
    $region7: #{deepnet_forward.4} parent=1 // loop_footer_branch
      %8 = sbr.rel target = $region3
    $region8: #{deepnet_forward.4} parent=1 // loop_exit
      _

// kernel: deepnet_forward.5
$region0: #{deepnet_forward.5}
  #allocation0 [shape = 'u32[]', space=smem, size = 0x4, offset = 0x4, fixed_abs, tag = 'smem constant byte address 0x4 - core index']
  #allocation1 [shape = 'u32[144,128]{1,0:T(1,128)}', space=vmem, size = 0x12000, scoped, tag = 'internal scratch']
  %s0 = inlined_call_operand.vmem [shape: bf16[8,512], index: 0, kind: input, shape index: {}]
  %s1 = inlined_call_operand.vmem [shape: bf16[512,128], index: 1, kind: input, shape index: {}]
  %s2 = inlined_call_operand.vmem [shape: f32[1,128], index: 2, kind: input, shape index: {}]
  %s3 = inlined_call_operand.vmem [shape: bf16[128,128], index: 3, kind: input, shape index: {}]
  %s4 = inlined_call_operand.vmem [shape: f32[1,128], index: 4, kind: input, shape index: {}]
  %s5 = inlined_call_operand.vmem [shape: bf16[128,128], index: 5, kind: input, shape index: {}]
  %s6 = inlined_call_operand.vmem [shape: f32[1,128], index: 6, kind: input, shape index: {}]
  %s7 = inlined_call_operand.vmem [shape: f32[8,128], index: 7, kind: output, shape index: {}]
  %s8 = sld [smem:[#allocation0]]
  $region38: #{deepnet_forward.5} parent=0
    _
  %s10 = ssub.s32 1, %s8
  %s11 = scalar_select 0, %s10, %s8
  // Predicated region
  $region2: #{deepnet_forward.5} parent=0 // pred_check
    _
  $region3: #{deepnet_forward.5} parent=0 // pred_check_branch
    %13 = sbr.rel (0) target = $region5
  $region4: #{deepnet_forward.5} parent=0 // pred_region
    _
  $region5: #{deepnet_forward.5} parent=0 // pred_fallthru
    _
  // Predicated region
  $region6: #{deepnet_forward.5} parent=0 // pred_check
    _
  $region7: #{deepnet_forward.5} parent=0 // pred_check_branch
    %15 = sbr.rel (0) target = $region9
  $region8: #{deepnet_forward.5} parent=0 // pred_region
    _
  $region9: #{deepnet_forward.5} parent=0 // pred_fallthru
    _
  // Predicated region
  $region10: #{deepnet_forward.5} parent=0 // pred_check
    _
  $region11: #{deepnet_forward.5} parent=0 // pred_check_branch
    %17 = sbr.rel (0) target = $region13
  $region12: #{deepnet_forward.5} parent=0 // pred_region
    _
  $region13: #{deepnet_forward.5} parent=0 // pred_fallthru
    _
  // Predicated region
  $region14: #{deepnet_forward.5} parent=0 // pred_check
    _
  $region15: #{deepnet_forward.5} parent=0 // pred_check_branch
    %19 = sbr.rel (0) target = $region17
  $region16: #{deepnet_forward.5} parent=0 // pred_region
    _
  $region17: #{deepnet_forward.5} parent=0 // pred_fallthru
    _
  // Predicated region
  $region18: #{deepnet_forward.5} parent=0 // pred_check
    _
  $region19: #{deepnet_forward.5} parent=0 // pred_check_branch
    %21 = sbr.rel (0) target = $region21
  $region20: #{deepnet_forward.5} parent=0 // pred_region
    _
  $region21: #{deepnet_forward.5} parent=0 // pred_fallthru
    _
  // Predicated region
  $region22: #{deepnet_forward.5} parent=0 // pred_check
    _
  $region23: #{deepnet_forward.5} parent=0 // pred_check_branch
    %23 = sbr.rel (0) target = $region25
  $region24: #{deepnet_forward.5} parent=0 // pred_region
    _
  $region25: #{deepnet_forward.5} parent=0 // pred_fallthru
    _
  // Predicated region
  $region26: #{deepnet_forward.5} parent=0 // pred_check
    _
  $region27: #{deepnet_forward.5} parent=0 // pred_check_branch
    %25 = sbr.rel (0) target = $region29
  $region28: #{deepnet_forward.5} parent=0 // pred_region
    _
  $region29: #{deepnet_forward.5} parent=0 // pred_fallthru
    _
  %v27 = vld [vmem:[%s0] sm:$0xff]
  %v28 = vld [vmem:[%s0 + $0x8] sm:$0xff]
  %v29 = vld [vmem:[%s1] sm:$0xf]
  %v30 = vld [vmem:[%s1 + $0x4] sm:$0xf]
  %v31 = vld [vmem:[%s1 + $0x8] sm:$0xf]
  %v32 = vld [vmem:[%s1 + $0xc] sm:$0xf]
  %v33 = vld [vmem:[%s1 + $0x10] sm:$0xf]
  %v34 = vld [vmem:[%s1 + $0x14] sm:$0xf]
  %v35 = vld [vmem:[%s1 + $0x18] sm:$0xf]
  %v36 = vld [vmem:[%s1 + $0x1c] sm:$0xf]
  %v37 = vld [vmem:[%s1 + $0x20] sm:$0xf]
  %v38 = vld [vmem:[%s1 + $0x24] sm:$0xf]
  %v39 = vld [vmem:[%s1 + $0x28] sm:$0xf]
  %v40 = vld [vmem:[%s1 + $0x2c] sm:$0xf]
  %v41 = vld [vmem:[%s1 + $0x30] sm:$0xf]
  %v42 = vld [vmem:[%s1 + $0x34] sm:$0xf]
  %v43 = vld [vmem:[%s1 + $0x38] sm:$0xf]
  %v44 = vld [vmem:[%s1 + $0x3c] sm:$0xf]
  %v45 = vld [vmem:[%s1 + $0x40] sm:$0xf]
  %v46 = vld [vmem:[%s1 + $0x44] sm:$0xf]
  %v47 = vld [vmem:[%s1 + $0x48] sm:$0xf]
  %v48 = vld [vmem:[%s1 + $0x4c] sm:$0xf]
  %v49 = vld [vmem:[%s1 + $0x50] sm:$0xf]
  %v50 = vld [vmem:[%s1 + $0x54] sm:$0xf]
  %v51 = vld [vmem:[%s1 + $0x58] sm:$0xf]
  %v52 = vld [vmem:[%s1 + $0x5c] sm:$0xf]
  %v53 = vld [vmem:[%s1 + $0x60] sm:$0xf]
  %v54 = vld [vmem:[%s1 + $0x64] sm:$0xf]
  %v55 = vld [vmem:[%s1 + $0x68] sm:$0xf]
  %v56 = vld [vmem:[%s1 + $0x6c] sm:$0xf]
  %v57 = vld [vmem:[%s1 + $0x70] sm:$0xf]
  %v58 = vld [vmem:[%s1 + $0x74] sm:$0xf]
  %v59 = vld [vmem:[%s1 + $0x78] sm:$0xf]
  %v60 = vld [vmem:[%s1 + $0x7c] sm:$0xf]
  %v61 = vld [vmem:[%s1 + $0x80] sm:$0xf]
  %v62 = vld [vmem:[%s1 + $0x84] sm:$0xf]
  %v63 = vld [vmem:[%s1 + $0x88] sm:$0xf]
  %v64 = vld [vmem:[%s1 + $0x8c] sm:$0xf]
  %v65 = vld [vmem:[%s1 + $0x90] sm:$0xf]
  %v66 = vld [vmem:[%s1 + $0x94] sm:$0xf]
  %v67 = vld [vmem:[%s1 + $0x98] sm:$0xf]
  %v68 = vld [vmem:[%s1 + $0x9c] sm:$0xf]
  %v69 = vld [vmem:[%s1 + $0xa0] sm:$0xf]
  %v70 = vld [vmem:[%s1 + $0xa4] sm:$0xf]
  %v71 = vld [vmem:[%s1 + $0xa8] sm:$0xf]
  %v72 = vld [vmem:[%s1 + $0xac] sm:$0xf]
  %v73 = vld [vmem:[%s1 + $0xb0] sm:$0xf]
  %v74 = vld [vmem:[%s1 + $0xb4] sm:$0xf]
  %v75 = vld [vmem:[%s1 + $0xb8] sm:$0xf]
  %v76 = vld [vmem:[%s1 + $0xbc] sm:$0xf]
  %v77 = vld [vmem:[%s1 + $0xc0] sm:$0xf]
  %v78 = vld [vmem:[%s1 + $0xc4] sm:$0xf]
  %v79 = vld [vmem:[%s1 + $0xc8] sm:$0xf]
  %v80 = vld [vmem:[%s1 + $0xcc] sm:$0xf]
  %v81 = vld [vmem:[%s1 + $0xd0] sm:$0xf]
  %v82 = vld [vmem:[%s1 + $0xd4] sm:$0xf]
  %v83 = vld [vmem:[%s1 + $0xd8] sm:$0xf]
  %v84 = vld [vmem:[%s1 + $0xdc] sm:$0xf]
  %v85 = vld [vmem:[%s1 + $0xe0] sm:$0xf]
  %v86 = vld [vmem:[%s1 + $0xe4] sm:$0xf]
  %v87 = vld [vmem:[%s1 + $0xe8] sm:$0xf]
  %v88 = vld [vmem:[%s1 + $0xec] sm:$0xf]
  %v89 = vld [vmem:[%s1 + $0xf0] sm:$0xf]
  %v90 = vld [vmem:[%s1 + $0xf4] sm:$0xf]
  %v91 = vld [vmem:[%s1 + $0xf8] sm:$0xf]
  %v92 = vld [vmem:[%s1 + $0xfc] sm:$0xf]
  %v93 = vld [vmem:[%s2] sm:$0x1]
  %v95 = vlaneseq
  %v96 = vshrl.u32 %v95, 7
  %v97 = vsub.s32 0, %v96
  %v98 = vrot.slane %v93, %v97
  %v102 = vunpack.c.l.b16 %v27
  %v103 = vunpack.c.h.b16 %v27
  %v104 = vunpack.c.l.b16 %v28
  %v105 = vunpack.c.h.b16 %v28
  %v106 = vpack.c.b16 %v102, %v102
  %v107 = vpack.c.b16 %v103, %v103
  %v108 = vpack.c.b16 %v104, %v104
  %v109 = vpack.c.b16 %v105, %v105
  %v178 = vunpack.c.l.b16 %v29
  %v179 = vunpack.c.l.b16 %v30
  %v180 = vunpack.c.l.b16 %v31
  %v181 = vunpack.c.l.b16 %v32
  %v182 = vunpack.c.l.b16 %v33
  %v183 = vunpack.c.l.b16 %v34
  %v184 = vunpack.c.l.b16 %v35
  %v185 = vunpack.c.l.b16 %v36
  %v186 = vunpack.c.l.b16 %v37
  %v187 = vunpack.c.l.b16 %v38
  %v188 = vunpack.c.l.b16 %v39
  %v189 = vunpack.c.l.b16 %v40
  %v190 = vunpack.c.l.b16 %v41
  %v191 = vunpack.c.l.b16 %v42
  %v192 = vunpack.c.l.b16 %v43
  %v193 = vunpack.c.l.b16 %v44
  %v194 = vunpack.c.l.b16 %v45
  %v195 = vunpack.c.l.b16 %v46
  %v196 = vunpack.c.l.b16 %v47
  %v197 = vunpack.c.l.b16 %v48
  %v198 = vunpack.c.l.b16 %v49
  %v199 = vunpack.c.l.b16 %v50
  %v200 = vunpack.c.l.b16 %v51
  %v201 = vunpack.c.l.b16 %v52
  %v202 = vunpack.c.l.b16 %v53
  %v203 = vunpack.c.l.b16 %v54
  %v204 = vunpack.c.l.b16 %v55
  %v205 = vunpack.c.l.b16 %v56
  %v206 = vunpack.c.l.b16 %v57
  %v207 = vunpack.c.l.b16 %v58
  %v208 = vunpack.c.l.b16 %v59
  %v209 = vunpack.c.l.b16 %v60
  %v210 = vunpack.c.l.b16 %v61
  %v211 = vunpack.c.l.b16 %v62
  %v212 = vunpack.c.l.b16 %v63
  %v213 = vunpack.c.l.b16 %v64
  %v214 = vunpack.c.l.b16 %v65
  %v215 = vunpack.c.l.b16 %v66
  %v216 = vunpack.c.l.b16 %v67
  %v217 = vunpack.c.l.b16 %v68
  %v218 = vunpack.c.l.b16 %v69
  %v219 = vunpack.c.l.b16 %v70
  %v220 = vunpack.c.l.b16 %v71
  %v221 = vunpack.c.l.b16 %v72
  %v222 = vunpack.c.l.b16 %v73
  %v223 = vunpack.c.l.b16 %v74
  %v224 = vunpack.c.l.b16 %v75
  %v225 = vunpack.c.l.b16 %v76
  %v226 = vunpack.c.l.b16 %v77
  %v227 = vunpack.c.l.b16 %v78
  %v228 = vunpack.c.l.b16 %v79
  %v229 = vunpack.c.l.b16 %v80
  %v230 = vunpack.c.l.b16 %v81
  %v231 = vunpack.c.l.b16 %v82
  %v232 = vunpack.c.l.b16 %v83
  %v233 = vunpack.c.l.b16 %v84
  %v234 = vunpack.c.l.b16 %v85
  %v235 = vunpack.c.l.b16 %v86
  %v236 = vunpack.c.l.b16 %v87
  %v237 = vunpack.c.l.b16 %v88
  %v238 = vunpack.c.l.b16 %v89
  %v239 = vunpack.c.l.b16 %v90
  %v240 = vunpack.c.l.b16 %v91
  %v241 = vunpack.c.l.b16 %v92
  %v242 = vpack.c.b16 %v179, %v178
  %v243 = vpack.c.b16 %v181, %v180
  %v244 = vpack.c.b16 %v183, %v182
  %v245 = vpack.c.b16 %v185, %v184
  %v246 = vpack.c.b16 %v187, %v186
  %v247 = vpack.c.b16 %v189, %v188
  %v248 = vpack.c.b16 %v191, %v190
  %v249 = vpack.c.b16 %v193, %v192
  %v250 = vpack.c.b16 %v195, %v194
  %v251 = vpack.c.b16 %v197, %v196
  %v252 = vpack.c.b16 %v199, %v198
  %v253 = vpack.c.b16 %v201, %v200
  %v254 = vpack.c.b16 %v203, %v202
  %v255 = vpack.c.b16 %v205, %v204
  %v256 = vpack.c.b16 %v207, %v206
  %v257 = vpack.c.b16 %v209, %v208
  %v258 = vpack.c.b16 %v211, %v210
  %v259 = vpack.c.b16 %v213, %v212
  %v260 = vpack.c.b16 %v215, %v214
  %v261 = vpack.c.b16 %v217, %v216
  %v262 = vpack.c.b16 %v219, %v218
  %v263 = vpack.c.b16 %v221, %v220
  %v264 = vpack.c.b16 %v223, %v222
  %v265 = vpack.c.b16 %v225, %v224
  %v266 = vpack.c.b16 %v227, %v226
  %v267 = vpack.c.b16 %v229, %v228
  %v268 = vpack.c.b16 %v231, %v230
  %v269 = vpack.c.b16 %v233, %v232
  %v270 = vpack.c.b16 %v235, %v234
  %v271 = vpack.c.b16 %v237, %v236
  %v272 = vpack.c.b16 %v239, %v238
  %v273 = vpack.c.b16 %v241, %v240
  %306 = vmatprep.subr.bf16.mxu0 0
  %307 = vmatpush1.bf16.msra.mxu0 %v249
  %308 = vmatprep.subr.bf16.mxu0 0
  %309 = vmatpush1.bf16.msra.mxu0 %v248
  %310 = vmatprep.subr.bf16.mxu0 0
  %311 = vmatpush1.bf16.msra.mxu0 %v247
  %312 = vmatprep.subr.bf16.mxu0 0
  %313 = vmatpush1.bf16.msra.mxu0 %v246
  %314 = vmatprep.subr.bf16.mxu0 0
  %315 = vmatpush1.bf16.msra.mxu0 %v245
  %316 = vmatprep.subr.bf16.mxu0 0
  %317 = vmatpush1.bf16.msra.mxu0 %v244
  %318 = vmatprep.subr.bf16.mxu0 0
  %319 = vmatpush1.bf16.msra.mxu0 %v243
  %320 = vmatprep.subr.bf16.mxu0 0
  %321 = vmatpush1.bf16.msra.mxu0 %v242
  %322 = vmatprep.subr.bf16.mxu0 0
  %323 = vmatpush2.bf16.msra.mxu0 %v257
  %324 = vmatprep.subr.bf16.mxu0 0
  %325 = vmatpush2.bf16.msra.mxu0 %v256
  %326 = vmatprep.subr.bf16.mxu0 0
  %327 = vmatpush2.bf16.msra.mxu0 %v255
  %328 = vmatprep.subr.bf16.mxu0 0
  %329 = vmatpush2.bf16.msra.mxu0 %v254
  %330 = vmatprep.subr.bf16.mxu0 0
  %331 = vmatpush2.bf16.msra.mxu0 %v253
  %332 = vmatprep.subr.bf16.mxu0 0
  %333 = vmatpush2.bf16.msra.mxu0 %v252
  %334 = vmatprep.subr.bf16.mxu0 0
  %335 = vmatpush2.bf16.msra.mxu0 %v251
  %336 = vmatprep.subr.bf16.mxu0 0
  %337 = vmatpush2.bf16.msra.mxu0 %v250
  %338 = vmatprep.mubr.bf16.mxu0 %v107
  %339 = vmatmul.mubr.bf16.gmra.mxu0 %v106
  %v340 = vpop.f32.mrf.mxu0
  %v341 = vadd.f32 %v98, %v340
  %v342 = vpop.f32.mrf.mxu0
  %v343 = vpop.f32.mrf.mxu0
  %v344 = vpop.f32.mrf.mxu0
  %345 = vdwg.mxu0
  %346 = vmatprep.subr.bf16.mxu0 0
  %347 = vmatpush1.bf16.msra.mxu0 %v265
  %348 = vmatprep.subr.bf16.mxu0 0
  %349 = vmatpush1.bf16.msra.mxu0 %v264
  %350 = vmatprep.subr.bf16.mxu0 0
  %351 = vmatpush1.bf16.msra.mxu0 %v263
  %352 = vmatprep.subr.bf16.mxu0 0
  %353 = vmatpush1.bf16.msra.mxu0 %v262
  %354 = vmatprep.subr.bf16.mxu0 0
  %355 = vmatpush1.bf16.msra.mxu0 %v261
  %356 = vmatprep.subr.bf16.mxu0 0
  %357 = vmatpush1.bf16.msra.mxu0 %v260
  %358 = vmatprep.subr.bf16.mxu0 0
  %359 = vmatpush1.bf16.msra.mxu0 %v259
  %360 = vmatprep.subr.bf16.mxu0 0
  %361 = vmatpush1.bf16.msra.mxu0 %v258
  %362 = vmatprep.subr.bf16.mxu0 0
  %363 = vmatpush2.bf16.msra.mxu0 %v273
  %364 = vmatprep.subr.bf16.mxu0 0
  %365 = vmatpush2.bf16.msra.mxu0 %v272
  %366 = vmatprep.subr.bf16.mxu0 0
  %367 = vmatpush2.bf16.msra.mxu0 %v271
  %368 = vmatprep.subr.bf16.mxu0 0
  %369 = vmatpush2.bf16.msra.mxu0 %v270
  %370 = vmatprep.subr.bf16.mxu0 0
  %371 = vmatpush2.bf16.msra.mxu0 %v269
  %372 = vmatprep.subr.bf16.mxu0 0
  %373 = vmatpush2.bf16.msra.mxu0 %v268
  %374 = vmatprep.subr.bf16.mxu0 0
  %375 = vmatpush2.bf16.msra.mxu0 %v267
  %376 = vmatprep.subr.bf16.mxu0 0
  %377 = vmatpush2.bf16.msra.mxu0 %v266
  %378 = vmatprep.mubr.bf16.mxu0 %v109
  %379 = vmatmul.mubr.bf16.gmra.mxu0 %v108
  %v380 = vpop.f32.mrf.mxu0
  %v381 = vadd.f32 %v341, %v380
  %v382 = vpop.f32.mrf.mxu0
  %v383 = vpop.f32.mrf.mxu0
  %v384 = vpop.f32.mrf.mxu0
  %385 = vdwg.mxu0
  %vm386 = vcmp.gt.f32.partialorder %v381, 0.0
  %v387 = vmul.f32 %v381, 0.01
  %v388 = vsel %vm386, %v381, %v387
  %v389 = vpack.c.bf16 %v388, %v388
  %v390 = vld [vmem:[%s3] sm:$0xf]
  %v391 = vld [vmem:[%s3 + $0x4] sm:$0xf]
  %v392 = vld [vmem:[%s3 + $0x8] sm:$0xf]
  %v393 = vld [vmem:[%s3 + $0xc] sm:$0xf]
  %v394 = vld [vmem:[%s3 + $0x10] sm:$0xf]
  %v395 = vld [vmem:[%s3 + $0x14] sm:$0xf]
  %v396 = vld [vmem:[%s3 + $0x18] sm:$0xf]
  %v397 = vld [vmem:[%s3 + $0x1c] sm:$0xf]
  %v398 = vld [vmem:[%s3 + $0x20] sm:$0xf]
  %v399 = vld [vmem:[%s3 + $0x24] sm:$0xf]
  %v400 = vld [vmem:[%s3 + $0x28] sm:$0xf]
  %v401 = vld [vmem:[%s3 + $0x2c] sm:$0xf]
  %v402 = vld [vmem:[%s3 + $0x30] sm:$0xf]
  %v403 = vld [vmem:[%s3 + $0x34] sm:$0xf]
  %v404 = vld [vmem:[%s3 + $0x38] sm:$0xf]
  %v405 = vld [vmem:[%s3 + $0x3c] sm:$0xf]
  %v406 = vld [vmem:[%s4] sm:$0x1]
  %v408 = vlaneseq
  %v409 = vshrl.u32 %v408, 7
  %v410 = vsub.s32 0, %v409
  %v411 = vrot.slane %v406, %v410
  %v429 = vunpack.c.l.b16 %v390
  %v430 = vunpack.c.l.b16 %v391
  %v431 = vunpack.c.l.b16 %v392
  %v432 = vunpack.c.l.b16 %v393
  %v433 = vunpack.c.l.b16 %v394
  %v434 = vunpack.c.l.b16 %v395
  %v435 = vunpack.c.l.b16 %v396
  %v436 = vunpack.c.l.b16 %v397
  %v437 = vunpack.c.l.b16 %v398
  %v438 = vunpack.c.l.b16 %v399
  %v439 = vunpack.c.l.b16 %v400
  %v440 = vunpack.c.l.b16 %v401
  %v441 = vunpack.c.l.b16 %v402
  %v442 = vunpack.c.l.b16 %v403
  %v443 = vunpack.c.l.b16 %v404
  %v444 = vunpack.c.l.b16 %v405
  %v445 = vpack.c.b16 %v430, %v429
  %v446 = vpack.c.b16 %v432, %v431
  %v447 = vpack.c.b16 %v434, %v433
  %v448 = vpack.c.b16 %v436, %v435
  %v449 = vpack.c.b16 %v438, %v437
  %v450 = vpack.c.b16 %v440, %v439
  %v451 = vpack.c.b16 %v442, %v441
  %v452 = vpack.c.b16 %v444, %v443
  %461 = vmatprep.subr.bf16.mxu0 0
  %462 = vmatpush1.bf16.msra.mxu0 %v452
  %463 = vmatprep.subr.bf16.mxu0 0
  %464 = vmatpush1.bf16.msra.mxu0 %v451
  %465 = vmatprep.subr.bf16.mxu0 0
  %466 = vmatpush1.bf16.msra.mxu0 %v450
  %467 = vmatprep.subr.bf16.mxu0 0
  %468 = vmatpush1.bf16.msra.mxu0 %v449
  %469 = vmatprep.subr.bf16.mxu0 0
  %470 = vmatpush1.bf16.msra.mxu0 %v448
  %471 = vmatprep.subr.bf16.mxu0 0
  %472 = vmatpush1.bf16.msra.mxu0 %v447
  %473 = vmatprep.subr.bf16.mxu0 0
  %474 = vmatpush1.bf16.msra.mxu0 %v446
  %475 = vmatprep.subr.bf16.mxu0 0
  %476 = vmatpush1.bf16.msra.mxu0 %v445
  %477 = vmatprep.subr.bf16.mxu0 0
  %478 = vmatpush2.bf16.msra.mxu0 0
  %479 = vmatprep.subr.bf16.mxu0 0
  %480 = vmatpush2.bf16.msra.mxu0 0
  %481 = vmatprep.subr.bf16.mxu0 0
  %482 = vmatpush2.bf16.msra.mxu0 0
  %483 = vmatprep.subr.bf16.mxu0 0
  %484 = vmatpush2.bf16.msra.mxu0 0
  %485 = vmatprep.subr.bf16.mxu0 0
  %486 = vmatpush2.bf16.msra.mxu0 0
  %487 = vmatprep.subr.bf16.mxu0 0
  %488 = vmatpush2.bf16.msra.mxu0 0
  %489 = vmatprep.subr.bf16.mxu0 0
  %490 = vmatpush2.bf16.msra.mxu0 0
  %491 = vmatprep.subr.bf16.mxu0 0
  %492 = vmatpush2.bf16.msra.mxu0 0
  %493 = vmatprep.mubr.bf16.mxu0 0
  %494 = vmatmul.mubr.bf16.gmra.mxu0 %v389
  %v495 = vpop.f32.mrf.mxu0
  %v496 = vadd.f32 %v411, %v495
  %v497 = vpop.f32.mrf.mxu0
  %v498 = vpop.f32.mrf.mxu0
  %v499 = vpop.f32.mrf.mxu0
  %500 = vdwg.mxu0
  %vm501 = vcmp.gt.f32.partialorder %v496, 0.0
  %v502 = vmul.f32 %v496, 0.01
  %v503 = vsel %vm501, %v496, %v502
  %v504 = vpack.c.bf16 %v503, %v503
  %v505 = vld [vmem:[%s5] sm:$0xf]
  %v506 = vld [vmem:[%s5 + $0x4] sm:$0xf]
  %v507 = vld [vmem:[%s5 + $0x8] sm:$0xf]
  %v508 = vld [vmem:[%s5 + $0xc] sm:$0xf]
  %v509 = vld [vmem:[%s5 + $0x10] sm:$0xf]
  %v510 = vld [vmem:[%s5 + $0x14] sm:$0xf]
  %v511 = vld [vmem:[%s5 + $0x18] sm:$0xf]
  %v512 = vld [vmem:[%s5 + $0x1c] sm:$0xf]
  %v513 = vld [vmem:[%s5 + $0x20] sm:$0xf]
  %v514 = vld [vmem:[%s5 + $0x24] sm:$0xf]
  %v515 = vld [vmem:[%s5 + $0x28] sm:$0xf]
  %v516 = vld [vmem:[%s5 + $0x2c] sm:$0xf]
  %v517 = vld [vmem:[%s5 + $0x30] sm:$0xf]
  %v518 = vld [vmem:[%s5 + $0x34] sm:$0xf]
  %v519 = vld [vmem:[%s5 + $0x38] sm:$0xf]
  %v520 = vld [vmem:[%s5 + $0x3c] sm:$0xf]
  %v521 = vld [vmem:[%s6] sm:$0x1]
  %v523 = vlaneseq
  %v524 = vshrl.u32 %v523, 7
  %v525 = vsub.s32 0, %v524
  %v526 = vrot.slane %v521, %v525
  %v544 = vunpack.c.l.b16 %v505
  %v545 = vunpack.c.l.b16 %v506
  %v546 = vunpack.c.l.b16 %v507
  %v547 = vunpack.c.l.b16 %v508
  %v548 = vunpack.c.l.b16 %v509
  %v549 = vunpack.c.l.b16 %v510
  %v550 = vunpack.c.l.b16 %v511
  %v551 = vunpack.c.l.b16 %v512
  %v552 = vunpack.c.l.b16 %v513
  %v553 = vunpack.c.l.b16 %v514
  %v554 = vunpack.c.l.b16 %v515
  %v555 = vunpack.c.l.b16 %v516
  %v556 = vunpack.c.l.b16 %v517
  %v557 = vunpack.c.l.b16 %v518
  %v558 = vunpack.c.l.b16 %v519
  %v559 = vunpack.c.l.b16 %v520
  %v560 = vpack.c.b16 %v545, %v544
  %v561 = vpack.c.b16 %v547, %v546
  %v562 = vpack.c.b16 %v549, %v548
  %v563 = vpack.c.b16 %v551, %v550
  %v564 = vpack.c.b16 %v553, %v552
  %v565 = vpack.c.b16 %v555, %v554
  %v566 = vpack.c.b16 %v557, %v556
  %v567 = vpack.c.b16 %v559, %v558
  %576 = vmatprep.subr.bf16.mxu0 0
  %577 = vmatpush1.bf16.msra.mxu0 %v567
  %578 = vmatprep.subr.bf16.mxu0 0
  %579 = vmatpush1.bf16.msra.mxu0 %v566
  %580 = vmatprep.subr.bf16.mxu0 0
  %581 = vmatpush1.bf16.msra.mxu0 %v565
  %582 = vmatprep.subr.bf16.mxu0 0
  %583 = vmatpush1.bf16.msra.mxu0 %v564
  %584 = vmatprep.subr.bf16.mxu0 0
  %585 = vmatpush1.bf16.msra.mxu0 %v563
  %586 = vmatprep.subr.bf16.mxu0 0
  %587 = vmatpush1.bf16.msra.mxu0 %v562
  %588 = vmatprep.subr.bf16.mxu0 0
  %589 = vmatpush1.bf16.msra.mxu0 %v561
  %590 = vmatprep.subr.bf16.mxu0 0
  %591 = vmatpush1.bf16.msra.mxu0 %v560
  %592 = vmatprep.subr.bf16.mxu0 0
  %593 = vmatpush2.bf16.msra.mxu0 0
  %594 = vmatprep.subr.bf16.mxu0 0
  %595 = vmatpush2.bf16.msra.mxu0 0
  %596 = vmatprep.subr.bf16.mxu0 0
  %597 = vmatpush2.bf16.msra.mxu0 0
  %598 = vmatprep.subr.bf16.mxu0 0
  %599 = vmatpush2.bf16.msra.mxu0 0
  %600 = vmatprep.subr.bf16.mxu0 0
  %601 = vmatpush2.bf16.msra.mxu0 0
  %602 = vmatprep.subr.bf16.mxu0 0
  %603 = vmatpush2.bf16.msra.mxu0 0
  %604 = vmatprep.subr.bf16.mxu0 0
  %605 = vmatpush2.bf16.msra.mxu0 0
  %606 = vmatprep.subr.bf16.mxu0 0
  %607 = vmatpush2.bf16.msra.mxu0 0
  %608 = vmatprep.mubr.bf16.mxu0 0
  %609 = vmatmul.mubr.bf16.gmra.mxu0 %v504
  %v610 = vpop.f32.mrf.mxu0
  %v611 = vadd.f32 %v526, %v610
  %v612 = vpop.f32.mrf.mxu0
  %v613 = vpop.f32.mrf.mxu0
  %v614 = vpop.f32.mrf.mxu0
  %615 = vdwg.mxu0
  %616 = vst [vmem:[%s7] sm:$0xff] %v611
  // Predicated region
  $region30: #{deepnet_forward.5} parent=0 // pred_check
    _
  $region31: #{deepnet_forward.5} parent=0 // pred_check_branch
    %618 = sbr.rel (0) target = $region33
  $region32: #{deepnet_forward.5} parent=0 // pred_region
    _
  $region33: #{deepnet_forward.5} parent=0 // pred_fallthru
    _
  // Predicated region
  $region34: #{deepnet_forward.5} parent=0 // pred_check
    _
  $region35: #{deepnet_forward.5} parent=0 // pred_check_branch
    %620 = sbr.rel (0) target = $region37
  $region36: #{deepnet_forward.5} parent=0 // pred_region
    _
  $region37: #{deepnet_forward.5} parent=0 // pred_fallthru
    _

</llo_original>
